<compile_context>
chip_gen: v7x
topology: tpu7x:2x2x1
jax: 0.10.0
libtpu: 0.0.40
codegen_flags: <defaults>
</compile_context>

<pallas_src>
import functools

import numpy as np
import jax
import jax.numpy as jnp
from jax import lax
from jax.experimental import pallas as pl
from jax.experimental.pallas import tpu as pltpu

LANE = 128


def _round_up(x, m):
    return ((x + m - 1) // m) * m


# ----------------------------------------------------------------------------------- #
#  Pallas kernel: all four energy terms of KGEDN.compute_energy, pipelined over w2.     #
# ----------------------------------------------------------------------------------- #
def _kgedn_energy_kernel(
    z_ref,      # (B, DP)       f32   latent batch, zero-padded to a 128-lane boundary
    wpack_ref,  # (DP, H+MP)    bf16  [w1 | S^T]  (fused layer-1 + stoichiometry weights)
    b1_ref,     # (1, H)        f32
    g_ref,      # (1, H)        f32   LayerNorm gamma
    be_ref,     # (1, H)        f32   LayerNorm beta
    w2_ref,     # (H, 128)      bf16  current column-block of the layer-2 weight (pipelined)
    b2_ref,     # (1, 128)      f32   matching bias block
    w3_ref,     # (1, 128)      f32   matching block of the final Linear(H->1) weight row
    b3_ref,     # (1, 1)        f32
    ew_ref,     # (1, DP)       f32   pathway edge-weight row (1/n_pairs on the (i,i+1) band)
    out_ref,    # (1, 128)      f32   packed [neural, stoich, thermo, path, 0, ...]
    h_ref,      # (B, H)        bf16  VMEM scratch: LayerNorm output (layer-2 LHS)
    nacc_ref,   # (1, 128)      f32   VMEM scratch: per-lane neural partial sums
    misc_ref,   # (1, 128)      f32   VMEM scratch: stoich/thermo/path packed at step 0
    *, batch, latent_dim, hidden,
):
    j = pl.program_id(0)
    inv_b = 1.0 / float(batch)

    # ------------------------------------------------------------------ step 0 prologue
    @pl.when(j == 0)
    def _prologue():
        z = z_ref[...]                                               # (B, DP) f32

        # Fused layer-1 + stoichiometry matmul on the MXU: z @ [w1 | S^T].
        fused = jnp.dot(z.astype(jnp.bfloat16), wpack_ref[...],
                        preferred_element_type=jnp.float32)          # (B, H+MP) f32

        # Linear-1 -> SiLU -> LayerNorm (one-pass statistics, f32).
        h1 = fused[:, :hidden] + b1_ref[...]
        h1 = h1 * jax.nn.sigmoid(h1)                                 # SiLU
        mu = jnp.mean(h1, axis=-1, keepdims=True)
        ms = jnp.mean(h1 * h1, axis=-1, keepdims=True)
        var = jnp.maximum(ms - mu * mu, 0.0)
        hn = (h1 - mu) * lax.rsqrt(var + 1e-5) * g_ref[...] + be_ref[...]
        h_ref[...] = hn.astype(jnp.bfloat16)

        # Stoichiometry: mean_b sum_m |(S z^T)[m,b]|  ==  sum|z @ S^T| / B
        # (zero-padded S^T columns do not change the abs-sum).
        v = fused[:, hidden:]
        stoich = (jnp.sum(jnp.abs(v)) * inv_b).reshape(1, 1)

        # Thermodynamic: mean over (B, D) of relu(|z| - 3); padded lanes contribute 0.
        thermo = (jnp.sum(jnp.maximum(jnp.abs(z) - 3.0, 0.0))
                  * (1.0 / float(batch * latent_dim))).reshape(1, 1)

        # Pathway connectivity as a band correlation (no transpose / matmul):
        #   corr[i] = mean_b z[b,i] * z[b,i+1] ;  path = sum_i ew[i] * relu(0.5 - |corr[i]|)
        z_next = pltpu.roll(z, shift=z.shape[1] - 1, axis=1)          # z_next[:, i] = z[:, i+1]
        corr = jnp.sum(z * z_next, axis=0, keepdims=True) * inv_b     # (1, DP)
        pen = jnp.maximum(0.5 - jnp.abs(corr), 0.0)
        path = jnp.sum(ew_ref[...] * pen).reshape(1, 1)

        lane = lax.broadcasted_iota(jnp.int32, (1, LANE), 1)
        misc_ref[...] = jnp.where(
            lane == 1, stoich,
            jnp.where(lane == 2, thermo,
                      jnp.where(lane == 3, path, 0.0)))
        nacc_ref[...] = jnp.zeros_like(nacc_ref)

    # --------------------------------------------------- every step: one w2 column block
    # (B, H) bf16 @ (H, 128) bf16 -> (B, 128) f32, SiLU, fold Linear(H->1) into a reduction.
    h2 = jnp.dot(h_ref[...], w2_ref[...], preferred_element_type=jnp.float32) + b2_ref[...]
    h2 = h2 * jax.nn.sigmoid(h2)                                      # SiLU (Dropout = id)
    nacc_ref[...] += jnp.sum(h2 * w3_ref[...], axis=0, keepdims=True)

    # ------------------------------------------------------------------ last step epilogue
    @pl.when(j == pl.num_programs(0) - 1)
    def _epilogue():
        neural = (jnp.sum(nacc_ref[...]) * inv_b).reshape(1, 1) + b3_ref[...]
        lane = lax.broadcasted_iota(jnp.int32, (1, LANE), 1)
        out_ref[...] = jnp.where(lane == 0, neural, misc_ref[...])


def _energy_pallas(z, params):
    B, D = z.shape
    H = params["w2"].shape[0]
    DP = params["wpack"].shape[0]
    MP = params["wpack"].shape[1] - H
    assert H % LANE == 0, "hidden width must be a multiple of 128"

    z_pad = jnp.pad(z, ((0, 0), (0, DP - D))) if DP != D else z
    n_blocks = H // LANE

    kernel = functools.partial(_kgedn_energy_kernel,
                               batch=B, latent_dim=D, hidden=H)

    in_specs = [
        pl.BlockSpec((B, DP), lambda j: (0, 0)),          # z (resident)
        pl.BlockSpec((DP, H + MP), lambda j: (0, 0)),     # [w1 | S^T] (resident)
        pl.BlockSpec((1, H), lambda j: (0, 0)),           # b1
        pl.BlockSpec((1, H), lambda j: (0, 0)),           # gamma
        pl.BlockSpec((1, H), lambda j: (0, 0)),           # beta
        pl.BlockSpec((H, LANE), lambda j: (0, j)),        # w2 column block (pipelined DMA)
        pl.BlockSpec((1, LANE), lambda j: (0, j)),        # b2 block
        pl.BlockSpec((1, LANE), lambda j: (0, j)),        # w3 row block
        pl.BlockSpec((1, 1), lambda j: (0, 0)),           # b3
        pl.BlockSpec((1, DP), lambda j: (0, 0)),          # pathway edge weights
    ]
    out_spec = pl.BlockSpec((1, LANE), lambda j: (0, 0))
    scratch = [
        pltpu.VMEM((B, H), jnp.bfloat16),                 # LayerNorm output (layer-2 LHS)
        pltpu.VMEM((1, LANE), jnp.float32),               # per-lane neural partial sums
        pltpu.VMEM((1, LANE), jnp.float32),               # stoich / thermo / path
    ]

    flops = int(2 * B * DP * (H + MP)        # fused layer-1 + stoichiometry matmul
                + 2 * B * H * H              # layer-2 matmul (all blocks)
                + 14 * B * H                 # SiLU / LayerNorm / w3-fold elementwise
                + 8 * B * DP)                # thermo + pathway elementwise
    transcendentals = int(2 * B * H)
    bytes_accessed = int(4 * B * DP + 2 * DP * (H + MP) + 2 * H * H
                         + 4 * (5 * H + 1 + DP) + 4 * LANE)

    return pl.pallas_call(
        kernel,
        out_shape=jax.ShapeDtypeStruct((1, LANE), jnp.float32),
        grid_spec=pltpu.PrefetchScalarGridSpec(
            num_scalar_prefetch=0,
            grid=(n_blocks,),
            in_specs=in_specs,
            out_specs=out_spec,
            scratch_shapes=scratch),
        compiler_params=pltpu.CompilerParams(
            dimension_semantics=("arbitrary",),
            vmem_limit_bytes=32 * 1024 * 1024),
        cost_estimate=pl.CostEstimate(flops=flops,
                                      transcendentals=transcendentals,
                                      bytes_accessed=bytes_accessed),
    )(z_pad, params["wpack"], params["b1"], params["gamma"], params["beta"],
      params["w2"], params["b2"], params["w3_row"], params["b3"], params["edge_w"])


# ----------------------------------------------------------------------------------- #
#  Parameter / buffer construction (deterministic, synthetic)                          #
# ----------------------------------------------------------------------------------- #
def make_kgedn_params(key, latent_dim, hidden=512, n_metabolites=50):
    ks = jax.random.split(key, 3)
    DP = _round_up(latent_dim, LANE)
    MP = _round_up(n_metabolites, LANE)

    w1 = np.asarray(jax.random.normal(ks[0], (latent_dim, hidden), jnp.float32)) * 0.02
    w2 = (jax.random.normal(ks[1], (hidden, hidden), jnp.float32) * 0.02).astype(jnp.bfloat16)
    w3 = jax.random.normal(ks[2], (1, hidden), jnp.float32) * 0.02

    # Synthetic stoichiometry matrix S: (n_metabolites, latent_dim), sparse small ints
    # (+-1/+-2 are exact in bf16).
    coeff_choices = np.array([-2.0, -1.0, 1.0, 2.0], np.float32)
    S_np = np.zeros((n_metabolites, latent_dim), np.float32)
    for j in range(latent_dim):
        rows = [(j * 7 + 3) % n_metabolites,
                (j * 13 + 11) % n_metabolites,
                (j * 29 + 1) % n_metabolites]
        for r_i, r in enumerate(rows):
            S_np[r, j] = float(coeff_choices[(j + r_i) % 4])

    # Fused weight [w1 | S^T], zero-padded to (DP, hidden + MP), stored bf16 for the MXU.
    wpack_np = np.zeros((DP, hidden + MP), np.float32)
    wpack_np[:latent_dim, :hidden] = w1
    wpack_np[:latent_dim, hidden:hidden + n_metabolites] = S_np.T

    # Pathway graph (i, i+1) edges for i = 0, 5, 10, ...  ->  edge-weight row (mean over
    # connected pairs; the symmetric (i+1, i) entries carry identical correlations).
    edges = [i for i in range(0, latent_dim - 1, 5) if i + 1 < latent_dim]
    edge_w_np = np.zeros((1, DP), np.float32)
    for i in edges:
        edge_w_np[0, i] = 1.0 / float(len(edges)) if edges else 0.0

    return {
        "wpack": jnp.asarray(wpack_np, jnp.bfloat16),
        "b1": jnp.zeros((1, hidden), jnp.float32),
        "gamma": jnp.ones((1, hidden), jnp.float32),
        "beta": jnp.zeros((1, hidden), jnp.float32),
        "w2": w2,
        "b2": jnp.zeros((1, hidden), jnp.float32),
        "w3_row": w3,
        "b3": jnp.zeros((1, 1), jnp.float32),
        "edge_w": jnp.asarray(edge_w_np),
    }


# ----------------------------------------------------------------------------------- #
#  KGEDN forward                                                                       #
# ----------------------------------------------------------------------------------- #
@jax.jit
def kgedn_forward(z0, condition, params,
                  lambda_stoichiometry=1.0, lambda_thermodynamic=0.1,
                  lambda_pathway=0.5, lambda_energy=0.3):
    packed = _energy_pallas(z0, params)          # (1, 128): [neural, stoich, thermo, path, ...]
    neural = packed[0, 0]
    stoich = packed[0, 1]
    thermo = packed[0, 2]
    path = packed[0, 3]

    total_energy = (neural
                    + lambda_stoichiometry * stoich
                    + lambda_thermodynamic * thermo
                    + lambda_pathway * path)

    flow_loss = jnp.float32(0.0)  # TODO(synk): FlowMatcher undefined in reference source.
    total_loss = flow_loss + lambda_energy * total_energy

    energy_components = {
        "neural_energy": neural,
        "stoichiometry_energy": stoich,
        "thermodynamic_energy": thermo,
        "pathway_energy": path,
    }
    return z0, total_loss, energy_components


if __name__ == "__main__":
    B = 128        # effective batch raised per perf review (kernel wall is DMA/launch bound)
    D = 32         # cfg.latent_dim
    COND = 16      # condition dim (unused by the energy path; FlowMatcher is TODO)

    key = jax.random.PRNGKey(0)
    k_z, k_c, k_p = jax.random.split(key, 3)
    z0 = jax.random.normal(k_z, (B, D), jnp.float32)
    condition = jax.random.normal(k_c, (B, COND), jnp.float32)
    params = make_kgedn_params(k_p, latent_dim=D)

    z_out, total_loss, comps = kgedn_forward(z0, condition, params)
    jax.block_until_ready(total_loss)
    jax.block_until_ready(z_out)
    for v in comps.values():
        jax.block_until_ready(v)

    print("KERNEL_OK")
</pallas_src>

<mosaic_0001>
module attributes {stable_mosaic.version = 11 : i64} {
  func.func @_kgedn_energy_kernel(%arg0: i32, %arg1: memref<128x128xf32, #tpu.memory_space<vmem>>, %arg2: memref<128x640xbf16, #tpu.memory_space<vmem>>, %arg3: memref<1x512xf32, #tpu.memory_space<vmem>>, %arg4: memref<1x512xf32, #tpu.memory_space<vmem>>, %arg5: memref<1x512xf32, #tpu.memory_space<vmem>>, %arg6: memref<512x128xbf16, #tpu.memory_space<vmem>>, %arg7: memref<1x128xf32, #tpu.memory_space<vmem>>, %arg8: memref<1x128xf32, #tpu.memory_space<vmem>>, %arg9: memref<1x1xf32, #tpu.memory_space<vmem>>, %arg10: memref<1x128xf32, #tpu.memory_space<vmem>>, %arg11: memref<1x128xf32, #tpu.memory_space<vmem>>, %arg12: memref<128x512xbf16, #tpu.memory_space<vmem>>, %arg13: memref<1x128xf32, #tpu.memory_space<vmem>>, %arg14: memref<1x128xf32, #tpu.memory_space<vmem>>) attributes {dimension_semantics = [#tpu.dimension_semantics<arbitrary>], iteration_bounds = array<i64: 4>, scalar_prefetch = 0 : i64, scratch_operands = 3 : i64, tpu.core_type = #tpu.core_type<tc>, window_params = [{pipeline_mode = #tpu.pipeline_mode<synchronous>, transform_indices = @transform_0, window_bounds = array<i64: 128, 128>}, {pipeline_mode = #tpu.pipeline_mode<synchronous>, transform_indices = @transform_1, window_bounds = array<i64: 128, 640>}, {pipeline_mode = #tpu.pipeline_mode<synchronous>, transform_indices = @transform_2, window_bounds = array<i64: 1, 512>}, {pipeline_mode = #tpu.pipeline_mode<synchronous>, transform_indices = @transform_3, window_bounds = array<i64: 1, 512>}, {pipeline_mode = #tpu.pipeline_mode<synchronous>, transform_indices = @transform_4, window_bounds = array<i64: 1, 512>}, {transform_indices = @transform_5, window_bounds = array<i64: 512, 128>}, {transform_indices = @transform_6, window_bounds = array<i64: 1, 128>}, {transform_indices = @transform_7, window_bounds = array<i64: 1, 128>}, {pipeline_mode = #tpu.pipeline_mode<synchronous>, transform_indices = @transform_8, window_bounds = array<i64: 1, 1>}, {pipeline_mode = #tpu.pipeline_mode<synchronous>, transform_indices = @transform_9, window_bounds = array<i64: 1, 128>}, {pipeline_mode = #tpu.pipeline_mode<synchronous>, transform_indices = @transform_10, window_bounds = array<i64: 1, 128>}]} {
    %c0_i32 = arith.constant 0 : i32
    %0 = arith.cmpi eq, %arg0, %c0_i32 : i32
    %1 = arith.extui %0 : i1 to i32
    %c0_i32_0 = arith.constant 0 : i32
    %2 = arith.cmpi ne, %1, %c0_i32_0 : i32
    scf.if %2 {
      %c0_15 = arith.constant 0 : index
      %c0_16 = arith.constant 0 : index
      %26 = vector.load %arg1[%c0_15, %c0_16] : memref<128x128xf32, #tpu.memory_space<vmem>>, vector<128x128xf32>
      %27 = arith.truncf %26 : vector<128x128xf32> to vector<128x128xbf16>
      %c0_17 = arith.constant 0 : index
      %c0_18 = arith.constant 0 : index
      %28 = vector.load %arg2[%c0_17, %c0_18] : memref<128x640xbf16, #tpu.memory_space<vmem>>, vector<128x640xbf16>
      %cst_19 = arith.constant dense<0.000000e+00> : vector<128x640xf32>
      %29 = tpu.matmul %27, %28, %cst_19 {dimension_numbers = #tpu.dot_dimension_numbers<[1], [0], [0], [1], [0, 0, 1, 1], [], []>} : vector<128x128xbf16>, vector<128x640xbf16>, vector<128x640xf32> -> vector<128x640xf32>
      %30 = vector.extract_strided_slice %29 {offsets = [0, 0], sizes = [128, 512], strides = [1, 1]} : vector<128x640xf32> to vector<128x512xf32>
      %c0_20 = arith.constant 0 : index
      %c0_21 = arith.constant 0 : index
      %31 = vector.load %arg3[%c0_20, %c0_21] : memref<1x512xf32, #tpu.memory_space<vmem>>, vector<1x512xf32>
      %32 = vector.broadcast %31 : vector<1x512xf32> to vector<128x512xf32>
      %33 = arith.addf %30, %32 : vector<128x512xf32>
      %34 = arith.negf %33 : vector<128x512xf32>
      %35 = math.exp %34 : vector<128x512xf32>
      %cst_22 = arith.constant 1.000000e+00 : f32
      %36 = vector.broadcast %cst_22 : f32 to vector<128x512xf32>
      %37 = arith.addf %36, %35 : vector<128x512xf32>
      %38 = arith.divf %36, %37 : vector<128x512xf32>
      %39 = arith.mulf %33, %38 : vector<128x512xf32>
      %cst_23 = arith.constant dense<0.000000e+00> : vector<128xf32>
      %40 = vector.multi_reduction <add>, %39, %cst_23 [1] : vector<128x512xf32> to vector<128xf32>
      %41 = vector.shape_cast %40 : vector<128xf32> to vector<128x1xf32>
      %cst_24 = arith.constant 5.120000e+02 : f32
      %42 = vector.broadcast %cst_24 : f32 to vector<128x1xf32>
      %43 = arith.divf %41, %42 : vector<128x1xf32>
      %44 = arith.mulf %39, %39 : vector<128x512xf32>
      %cst_25 = arith.constant dense<0.000000e+00> : vector<128xf32>
      %45 = vector.multi_reduction <add>, %44, %cst_25 [1] : vector<128x512xf32> to vector<128xf32>
      %46 = vector.shape_cast %45 : vector<128xf32> to vector<128x1xf32>
      %cst_26 = arith.constant 5.120000e+02 : f32
      %47 = vector.broadcast %cst_26 : f32 to vector<128x1xf32>
      %48 = arith.divf %46, %47 : vector<128x1xf32>
      %49 = arith.mulf %43, %43 : vector<128x1xf32>
      %50 = arith.subf %48, %49 : vector<128x1xf32>
      %cst_27 = arith.constant 0.000000e+00 : f32
      %51 = vector.broadcast %cst_27 : f32 to vector<128x1xf32>
      %52 = arith.maximumf %50, %51 : vector<128x1xf32>
      %53 = vector.broadcast %43 : vector<128x1xf32> to vector<128x512xf32>
      %54 = arith.subf %39, %53 : vector<128x512xf32>
      %cst_28 = arith.constant 9.99999974E-6 : f32
      %55 = vector.broadcast %cst_28 : f32 to vector<128x1xf32>
      %56 = arith.addf %52, %55 : vector<128x1xf32>
      %57 = math.rsqrt %56 : vector<128x1xf32>
      %58 = vector.broadcast %57 : vector<128x1xf32> to vector<128x512xf32>
      %59 = arith.mulf %54, %58 : vector<128x512xf32>
      %c0_29 = arith.constant 0 : index
      %c0_30 = arith.constant 0 : index
      %60 = vector.load %arg4[%c0_29, %c0_30] : memref<1x512xf32, #tpu.memory_space<vmem>>, vector<1x512xf32>
      %61 = vector.broadcast %60 : vector<1x512xf32> to vector<128x512xf32>
      %62 = arith.mulf %59, %61 : vector<128x512xf32>
      %c0_31 = arith.constant 0 : index
      %c0_32 = arith.constant 0 : index
      %63 = vector.load %arg5[%c0_31, %c0_32] : memref<1x512xf32, #tpu.memory_space<vmem>>, vector<1x512xf32>
      %64 = vector.broadcast %63 : vector<1x512xf32> to vector<128x512xf32>
      %65 = arith.addf %62, %64 : vector<128x512xf32>
      %66 = arith.truncf %65 : vector<128x512xf32> to vector<128x512xbf16>
      %c0_33 = arith.constant 0 : index
      %c0_34 = arith.constant 0 : index
      %67 = vector.load %arg12[%c0_33, %c0_34] : memref<128x512xbf16, #tpu.memory_space<vmem>>, vector<128x512xbf16>
      tpu.vector_store %arg12[%c0_33, %c0_34], %66 {strides = array<i32>} : memref<128x512xbf16, #tpu.memory_space<vmem>>, vector<128x512xbf16>,
      %68 = vector.extract_strided_slice %29 {offsets = [0, 512], sizes = [128, 128], strides = [1, 1]} : vector<128x640xf32> to vector<128x128xf32>
      %69 = math.absf %68 : vector<128x128xf32>
      %70 = vector.shape_cast %69 : vector<128x128xf32> to vector<1x128x128xf32>
      %cst_35 = arith.constant dense<0.000000e+00> : vector<1xf32>
      %71 = vector.multi_reduction <add>, %70, %cst_35 [1, 2] : vector<1x128x128xf32> to vector<1xf32>
      %72 = vector.shape_cast %71 : vector<1xf32> to vector<1x1x1xf32>
      %73 = vector.extract %72[0, 0, 0] : f32 from vector<1x1x1xf32>
      %cst_36 = arith.constant 7.812500e-03 : f32
      %74 = arith.mulf %73, %cst_36 : f32
      %75 = vector.broadcast %74 : f32 to vector<1x1xf32>
      %76 = math.absf %26 : vector<128x128xf32>
      %cst_37 = arith.constant 3.000000e+00 : f32
      %77 = vector.broadcast %cst_37 : f32 to vector<128x128xf32>
      %78 = arith.subf %76, %77 : vector<128x128xf32>
      %cst_38 = arith.constant 0.000000e+00 : f32
      %79 = vector.broadcast %cst_38 : f32 to vector<128x128xf32>
      %80 = arith.maximumf %78, %79 : vector<128x128xf32>
      %81 = vector.shape_cast %80 : vector<128x128xf32> to vector<1x128x128xf32>
      %cst_39 = arith.constant dense<0.000000e+00> : vector<1xf32>
      %82 = vector.multi_reduction <add>, %81, %cst_39 [1, 2] : vector<1x128x128xf32> to vector<1xf32>
      %83 = vector.shape_cast %82 : vector<1xf32> to vector<1x1x1xf32>
      %84 = vector.extract %83[0, 0, 0] : f32 from vector<1x1x1xf32>
      %cst_40 = arith.constant 2.44140625E-4 : f32
      %85 = arith.mulf %84, %cst_40 : f32
      %86 = vector.broadcast %85 : f32 to vector<1x1xf32>
      %c127_i32 = arith.constant 127 : i32
      %87 = tpu.dynamic_rotate %26 by %c127_i32 dim 1 : vector<128x128xf32>, i32 -> vector<128x128xf32>
      %88 = arith.mulf %26, %87 : vector<128x128xf32>
      %cst_41 = arith.constant dense<0.000000e+00> : vector<128xf32>
      %89 = vector.multi_reduction <add>, %88, %cst_41 [0] : vector<128x128xf32> to vector<128xf32>
      %90 = vector.shape_cast %89 : vector<128xf32> to vector<1x128xf32>
      %cst_42 = arith.constant 7.812500e-03 : f32
      %91 = vector.broadcast %cst_42 : f32 to vector<1x128xf32>
      %92 = arith.mulf %90, %91 : vector<1x128xf32>
      %93 = math.absf %92 : vector<1x128xf32>
      %cst_43 = arith.constant 5.000000e-01 : f32
      %94 = vector.broadcast %cst_43 : f32 to vector<1x128xf32>
      %95 = arith.subf %94, %93 : vector<1x128xf32>
      %cst_44 = arith.constant 0.000000e+00 : f32
      %96 = vector.broadcast %cst_44 : f32 to vector<1x128xf32>
      %97 = arith.maximumf %95, %96 : vector<1x128xf32>
      %c0_45 = arith.constant 0 : index
      %c0_46 = arith.constant 0 : index
      %98 = vector.load %arg10[%c0_45, %c0_46] : memref<1x128xf32, #tpu.memory_space<vmem>>, vector<1x128xf32>
      %99 = arith.mulf %98, %97 : vector<1x128xf32>
      %100 = vector.shape_cast %99 : vector<1x128xf32> to vector<1x1x128xf32>
      %cst_47 = arith.constant dense<0.000000e+00> : vector<1xf32>
      %101 = vector.multi_reduction <add>, %100, %cst_47 [1, 2] : vector<1x1x128xf32> to vector<1xf32>
      %102 = vector.shape_cast %101 : vector<1xf32> to vector<1x1x1xf32>
      %103 = vector.extract %102[0, 0, 0] : f32 from vector<1x1x1xf32>
      %104 = vector.broadcast %103 : f32 to vector<1x1xf32>
      %105 = tpu.iota {dimensions = array<i32: 1>} : vector<1x128xi32>
      %c1_i32 = arith.constant 1 : i32
      %106 = vector.broadcast %c1_i32 : i32 to vector<1x128xi32>
      %107 = arith.cmpi eq, %105, %106 : vector<1x128xi32>
      %c2_i32 = arith.constant 2 : i32
      %108 = vector.broadcast %c2_i32 : i32 to vector<1x128xi32>
      %109 = arith.cmpi eq, %105, %108 : vector<1x128xi32>
      %c3_i32_48 = arith.constant 3 : i32
      %110 = vector.broadcast %c3_i32_48 : i32 to vector<1x128xi32>
      %111 = arith.cmpi eq, %105, %110 : vector<1x128xi32>
      %cst_49 = arith.constant 0.000000e+00 : f32
      %112 = vector.shape_cast %104 : vector<1x1xf32> to vector<1x1xf32>
      %113 = vector.broadcast %112 : vector<1x1xf32> to vector<1x128xf32>
      %114 = vector.broadcast %cst_49 : f32 to vector<1x128xf32>
      %115 = arith.select %111, %113, %114 : vector<1x128xi1>, vector<1x128xf32>
      %116 = vector.shape_cast %86 : vector<1x1xf32> to vector<1x1xf32>
      %117 = vector.broadcast %116 : vector<1x1xf32> to vector<1x128xf32>
      %118 = arith.select %109, %117, %115 : vector<1x128xi1>, vector<1x128xf32>
      %119 = vector.shape_cast %75 : vector<1x1xf32> to vector<1x1xf32>
      %120 = vector.broadcast %119 : vector<1x1xf32> to vector<1x128xf32>
      %121 = arith.select %107, %120, %118 : vector<1x128xi1>, vector<1x128xf32>
      %c0_50 = arith.constant 0 : index
      %c0_51 = arith.constant 0 : index
      %122 = vector.load %arg14[%c0_50, %c0_51] : memref<1x128xf32, #tpu.memory_space<vmem>>, vector<1x128xf32>
      tpu.vector_store %arg14[%c0_50, %c0_51], %121 {strides = array<i32>} : memref<1x128xf32, #tpu.memory_space<vmem>>, vector<1x128xf32>,
      %cst_52 = arith.constant 0.000000e+00 : f32
      %123 = vector.broadcast %cst_52 : f32 to vector<1x128xf32>
      %c0_53 = arith.constant 0 : index
      %c0_54 = arith.constant 0 : index
      %124 = vector.load %arg13[%c0_53, %c0_54] : memref<1x128xf32, #tpu.memory_space<vmem>>, vector<1x128xf32>
      tpu.vector_store %arg13[%c0_53, %c0_54], %123 {strides = array<i32>} : memref<1x128xf32, #tpu.memory_space<vmem>>, vector<1x128xf32>,
    } else {
    }
    %c0 = arith.constant 0 : index
    %c0_1 = arith.constant 0 : index
    %3 = vector.load %arg12[%c0, %c0_1] : memref<128x512xbf16, #tpu.memory_space<vmem>>, vector<128x512xbf16>
    %c0_2 = arith.constant 0 : index
    %c0_3 = arith.constant 0 : index
    %4 = vector.load %arg6[%c0_2, %c0_3] : memref<512x128xbf16, #tpu.memory_space<vmem>>, vector<512x128xbf16>
    %cst = arith.constant dense<0.000000e+00> : vector<128x128xf32>
    %5 = tpu.matmul %3, %4, %cst {dimension_numbers = #tpu.dot_dimension_numbers<[1], [0], [0], [1], [0, 0, 1, 1], [], []>} : vector<128x512xbf16>, vector<512x128xbf16>, vector<128x128xf32> -> vector<128x128xf32>
    %c0_4 = arith.constant 0 : index
    %c0_5 = arith.constant 0 : index
    %6 = vector.load %arg7[%c0_4, %c0_5] : memref<1x128xf32, #tpu.memory_space<vmem>>, vector<1x128xf32>
    %7 = vector.broadcast %6 : vector<1x128xf32> to vector<128x128xf32>
    %8 = arith.addf %5, %7 : vector<128x128xf32>
    %9 = arith.negf %8 : vector<128x128xf32>
    %10 = math.exp %9 : vector<128x128xf32>
    %cst_6 = arith.constant 1.000000e+00 : f32
    %11 = vector.broadcast %cst_6 : f32 to vector<128x128xf32>
    %12 = arith.addf %11, %10 : vector<128x128xf32>
    %13 = arith.divf %11, %12 : vector<128x128xf32>
    %14 = arith.mulf %8, %13 : vector<128x128xf32>
    %c0_7 = arith.constant 0 : index
    %c0_8 = arith.constant 0 : index
    %15 = vector.load %arg13[%c0_7, %c0_8] : memref<1x128xf32, #tpu.memory_space<vmem>>, vector<1x128xf32>
    %c0_9 = arith.constant 0 : index
    %c0_10 = arith.constant 0 : index
    %16 = vector.load %arg8[%c0_9, %c0_10] : memref<1x128xf32, #tpu.memory_space<vmem>>, vector<1x128xf32>
    %17 = vector.broadcast %16 : vector<1x128xf32> to vector<128x128xf32>
    %18 = arith.mulf %14, %17 : vector<128x128xf32>
    %cst_11 = arith.constant dense<0.000000e+00> : vector<128xf32>
    %19 = vector.multi_reduction <add>, %18, %cst_11 [0] : vector<128x128xf32> to vector<128xf32>
    %20 = vector.shape_cast %19 : vector<128xf32> to vector<1x128xf32>
    %21 = arith.addf %15, %20 : vector<1x128xf32>
    %c0_12 = arith.constant 0 : index
    %c0_13 = arith.constant 0 : index
    %22 = vector.load %arg13[%c0_12, %c0_13] : memref<1x128xf32, #tpu.memory_space<vmem>>, vector<1x128xf32>
    tpu.vector_store %arg13[%c0_12, %c0_13], %21 {strides = array<i32>} : memref<1x128xf32, #tpu.memory_space<vmem>>, vector<1x128xf32>,
    %c3_i32 = arith.constant 3 : i32
    %23 = arith.cmpi eq, %arg0, %c3_i32 : i32
    %24 = arith.extui %23 : i1 to i32
    %c0_i32_14 = arith.constant 0 : i32
    %25 = arith.cmpi ne, %24, %c0_i32_14 : i32
    scf.if %25 {
      %c0_15 = arith.constant 0 : index
      %c0_16 = arith.constant 0 : index
      %26 = vector.load %arg13[%c0_15, %c0_16] : memref<1x128xf32, #tpu.memory_space<vmem>>, vector<1x128xf32>
      %27 = vector.shape_cast %26 : vector<1x128xf32> to vector<1x1x128xf32>
      %cst_17 = arith.constant dense<0.000000e+00> : vector<1xf32>
      %28 = vector.multi_reduction <add>, %27, %cst_17 [1, 2] : vector<1x1x128xf32> to vector<1xf32>
      %29 = vector.shape_cast %28 : vector<1xf32> to vector<1x1x1xf32>
      %30 = vector.extract %29[0, 0, 0] : f32 from vector<1x1x1xf32>
      %cst_18 = arith.constant 7.812500e-03 : f32
      %31 = arith.mulf %30, %cst_18 : f32
      %32 = vector.broadcast %31 : f32 to vector<1x1xf32>
      %c0_19 = arith.constant 0 : index
      %c0_20 = arith.constant 0 : index
      %33 = vector.load %arg9[%c0_19, %c0_20] : memref<1x1xf32, #tpu.memory_space<vmem>>, vector<1x1xf32>
      %34 = arith.addf %32, %33 : vector<1x1xf32>
      %35 = tpu.iota {dimensions = array<i32: 1>} : vector<1x128xi32>
      %c0_i32_21 = arith.constant 0 : i32
      %36 = vector.broadcast %c0_i32_21 : i32 to vector<1x128xi32>
      %37 = arith.cmpi eq, %35, %36 : vector<1x128xi32>
      %c0_22 = arith.constant 0 : index
      %c0_23 = arith.constant 0 : index
      %38 = vector.load %arg14[%c0_22, %c0_23] : memref<1x128xf32, #tpu.memory_space<vmem>>, vector<1x128xf32>
      %39 = vector.shape_cast %34 : vector<1x1xf32> to vector<1x1xf32>
      %40 = vector.broadcast %39 : vector<1x1xf32> to vector<1x128xf32>
      %41 = arith.select %37, %40, %38 : vector<1x128xi1>, vector<1x128xf32>
      %c0_24 = arith.constant 0 : index
      %c0_25 = arith.constant 0 : index
      %42 = vector.load %arg11[%c0_24, %c0_25] : memref<1x128xf32, #tpu.memory_space<vmem>>, vector<1x128xf32>
      tpu.vector_store %arg11[%c0_24, %c0_25], %41 {strides = array<i32>} : memref<1x128xf32, #tpu.memory_space<vmem>>, vector<1x128xf32>,
    } else {
    }
    return
  }
  func.func @transform_0(%arg0: i32) -> (i32, i32) {
    %c0_i32 = arith.constant 0 : i32
    %c0_i32_0 = arith.constant 0 : i32
    %c0_i32_1 = arith.constant 0 : i32
    return %c0_i32, %c0_i32_0 : i32, i32
  }
  func.func @transform_1(%arg0: i32) -> (i32, i32) {
    %c0_i32 = arith.constant 0 : i32
    %c0_i32_0 = arith.constant 0 : i32
    %c0_i32_1 = arith.constant 0 : i32
    return %c0_i32, %c0_i32_0 : i32, i32
  }
  func.func @transform_2(%arg0: i32) -> (i32, i32) {
    %c0_i32 = arith.constant 0 : i32
    %c0_i32_0 = arith.constant 0 : i32
    %c0_i32_1 = arith.constant 0 : i32
    return %c0_i32, %c0_i32_0 : i32, i32
  }
  func.func @transform_3(%arg0: i32) -> (i32, i32) {
    %c0_i32 = arith.constant 0 : i32
    %c0_i32_0 = arith.constant 0 : i32
    %c0_i32_1 = arith.constant 0 : i32
    return %c0_i32, %c0_i32_0 : i32, i32
  }
  func.func @transform_4(%arg0: i32) -> (i32, i32) {
    %c0_i32 = arith.constant 0 : i32
    %c0_i32_0 = arith.constant 0 : i32
    %c0_i32_1 = arith.constant 0 : i32
    return %c0_i32, %c0_i32_0 : i32, i32
  }
  func.func @transform_5(%arg0: i32) -> (i32, i32) {
    %c0_i32 = arith.constant 0 : i32
    %c0_i32_0 = arith.constant 0 : i32
    return %c0_i32, %arg0 : i32, i32
  }
  func.func @transform_6(%arg0: i32) -> (i32, i32) {
    %c0_i32 = arith.constant 0 : i32
    %c0_i32_0 = arith.constant 0 : i32
    return %c0_i32, %arg0 : i32, i32
  }
  func.func @transform_7(%arg0: i32) -> (i32, i32) {
    %c0_i32 = arith.constant 0 : i32
    %c0_i32_0 = arith.constant 0 : i32
    return %c0_i32, %arg0 : i32, i32
  }
  func.func @transform_8(%arg0: i32) -> (i32, i32) {
    %c0_i32 = arith.constant 0 : i32
    %c0_i32_0 = arith.constant 0 : i32
    %c0_i32_1 = arith.constant 0 : i32
    return %c0_i32, %c0_i32_0 : i32, i32
  }
  func.func @transform_9(%arg0: i32) -> (i32, i32) {
    %c0_i32 = arith.constant 0 : i32
    %c0_i32_0 = arith.constant 0 : i32
    %c0_i32_1 = arith.constant 0 : i32
    return %c0_i32, %c0_i32_0 : i32, i32
  }
  func.func @transform_10(%arg0: i32) -> (i32, i32) {
    %c0_i32 = arith.constant 0 : i32
    %c0_i32_0 = arith.constant 0 : i32
    %c0_i32_1 = arith.constant 0 : i32
    return %c0_i32, %c0_i32_0 : i32, i32
  }
}

</mosaic_0001>

<llo_original>
// kernel: kgedn_forward.1
$region0: #{kgedn_forward.1}
  #allocation0 [shape = 'u32[]', space=smem, size = 0x4, offset = 0x4, fixed_abs, tag = 'smem constant byte address 0x4 - core index']
  #allocation1 [shape = 'u32[144,128]{1,0:T(1,128)}', space=vmem, size = 0x12000, scoped, tag = 'internal scratch']
  #allocation2 [shape = 'bf16[128,512]{1,0:T(16,128)(2,1)}', space=vmem, size = 0x20000, scoped, tag = 'scratch operand']
  #allocation3 [shape = 'f32[1,128]{1,0:T(1,128)}', space=vmem, size = 0x200, scoped, tag = 'scratch operand']
  #allocation4 [shape = 'f32[1,128]{1,0:T(1,128)}', space=vmem, size = 0x200, scoped, tag = 'scratch operand']
  #allocation5 [shape = 'f32[1,1]{1,0:T(1,128)S(1)}', space=vmem, size = 0x200, scoped, tag = 'scoped memory for kgedn_forward.1']
  %s0 = inlined_call_operand.vmem [shape: f32[128,128], index: 0, kind: input, shape index: {}]
  %s1 = inlined_call_operand.vmem [shape: bf16[128,640], index: 1, kind: input, shape index: {}]
  %s2 = inlined_call_operand.vmem [shape: f32[1,512], index: 2, kind: input, shape index: {}]
  %s3 = inlined_call_operand.vmem [shape: f32[1,512], index: 3, kind: input, shape index: {}]
  %s4 = inlined_call_operand.vmem [shape: f32[1,512], index: 4, kind: input, shape index: {}]
  %s5 = inlined_call_operand.hbm [shape: bf16[512,512], index: 5, kind: input, shape index: {}]
  %s6 = inlined_call_operand.vmem [shape: f32[1,512], index: 6, kind: input, shape index: {}]
  %s7 = inlined_call_operand.vmem [shape: f32[1,512], index: 7, kind: input, shape index: {}]
  %s8 = inlined_call_operand.<no memory space> [shape: f32[1,1], index: 8, kind: input, shape index: {}]
  %s9 = inlined_call_operand.vmem [shape: f32[1,128], index: 9, kind: input, shape index: {}]
  %s10 = inlined_call_operand.vmem [shape: f32[1,128], index: 10, kind: output, shape index: {}]
  %s11 = sld [smem:[#allocation0]]
  $region85: #{kgedn_forward.1} parent=0
    _
  %s13 = ssub.s32 1, %s11
  %s14 = scalar_select 0, %s13, %s11
  %v15 = vstv %s8
  %16 = vst [vmem:[#allocation5] sm:$0x1] %v15
  $region1: #{kgedn_forward.1} parent=0
    #allocation6 [shape = 'u8[262144]{0}', space=vmem, size = 0x40000, scoped, tag = 'input window, operand 5']
    #allocation7 [shape = 's32[2]{0}', space=sflag, size = 0x8, scoped, tag = 'scoped memory for kgedn_forward.1']
    %17 = vsyncpa [#allocation7], 0
    %s18 = scalar_lea.sflag [#allocation7], 1
    %19 = vsyncpa %s18, 0
    loop: start=0, step=1, limit=6
    $region2: #{kgedn_forward.1} parent=1 // loop_pre_header
      _
    $region3: #{kgedn_forward.1} parent=1 // loop_header
      %s21 = sphi 0, %s25
      %p22 = scmp.ge.s32.totalorder %s21, 6
      %s29 = sphi 0, %s29
      %s31 = sphi 0, %s29
      %s32 = sphi 0, %s31
      %s46 = sphi 0, %s32
      %s50 = sphi 0, %s50
      %s52 = sphi 0, %s50
      %s53 = sphi 0, %s52
      %s67 = sphi 0, %s53
      %s71 = sphi 0, %s71
      %s73 = sphi 0, %s71
      %s74 = sphi 0, %s73
      %s88 = sphi 0, %s74
      %s92 = sphi 0, %s92
      %s94 = sphi 0, %s92
      %s95 = sphi 0, %s94
      %s109 = sphi 0, %s95
      %s113 = sphi 0, %s113
      %s115 = sphi 0, %s113
      %s116 = sphi 0, %s115
      %s130 = sphi 0, %s116
      %s136 = sphi 0, %s138
      %s139 = sphi 0, %s136
      %s140 = sphi 0, %s139
      %s156 = sphi 0, %s140
      %s162 = sphi 0, %s164
      %s165 = sphi 0, %s162
      %s166 = sphi 0, %s165
      %s182 = sphi 0, %s166
      %s188 = sphi 0, %s190
      %s191 = sphi 0, %s188
      %s192 = sphi 0, %s191
      %s208 = sphi 0, %s192
      %s212 = sphi 0, %s212
      %s214 = sphi 0, %s212
      %s215 = sphi 0, %s214
      %s229 = sphi 0, %s215
      %s233 = sphi 0, %s233
      %s235 = sphi 0, %s233
      %s236 = sphi 0, %s235
      %s250 = sphi 0, %s236
      %s254 = sphi 0, %s254
      %s256 = sphi 0, %s254
      %s257 = sphi 0, %s256
      %s271 = sphi 0, %s257
    $region4: #{kgedn_forward.1} parent=1 // loop_header_branch
      %24 = sbr.rel (%p22) target = $region8
    $region5: #{kgedn_forward.1} parent=1 // loop_body
      %s26 = ssub.s32 %s21, 1
      %s27 = ssub.s32 %s21, 2
      %s28 = sadd.s32 %s21, 1
      %s30 = sadd.s32 %s29, 1
      %p33 = scmp.eq.s32.totalorder %s21, 3
      %p34 = scmp.ne.s32.totalorder %s29, %s31
      %p35 = scmp.eq.s32.totalorder %s21, 0
      %p36 = por %p34, %p35
      %p37 = scmp.ne.s32.totalorder %s29, %s31
      %p38 = scmp.eq.s32.totalorder %s26, 3
      %p39 = por %p37, %p38
      %p40 = scmp.ne.s32.totalorder %s31, %s32
      %p41 = scmp.eq.s32.totalorder %s26, 0
      %p42 = por %p40, %p41
      %p43 = scmp.ne.s32.totalorder %s31, %s32
      %p44 = scmp.eq.s32.totalorder %s27, 3
      %p45 = por %p43, %p44
      %p47 = scmp.ne.s32.totalorder %s32, %s46
      %p48 = scmp.eq.s32.totalorder %s27, 0
      %p49 = por %p47, %p48
      %s51 = sadd.s32 %s50, 1
      %p54 = scmp.eq.s32.totalorder %s21, 3
      %p55 = scmp.ne.s32.totalorder %s50, %s52
      %p56 = scmp.eq.s32.totalorder %s21, 0
      %p57 = por %p55, %p56
      %p58 = scmp.ne.s32.totalorder %s50, %s52
      %p59 = scmp.eq.s32.totalorder %s26, 3
      %p60 = por %p58, %p59
      %p61 = scmp.ne.s32.totalorder %s52, %s53
      %p62 = scmp.eq.s32.totalorder %s26, 0
      %p63 = por %p61, %p62
      %p64 = scmp.ne.s32.totalorder %s52, %s53
      %p65 = scmp.eq.s32.totalorder %s27, 3
      %p66 = por %p64, %p65
      %p68 = scmp.ne.s32.totalorder %s53, %s67
      %p69 = scmp.eq.s32.totalorder %s27, 0
      %p70 = por %p68, %p69
      %s72 = sadd.s32 %s71, 1
      %p75 = scmp.eq.s32.totalorder %s21, 3
      %p76 = scmp.ne.s32.totalorder %s71, %s73
      %p77 = scmp.eq.s32.totalorder %s21, 0
      %p78 = por %p76, %p77
      %p79 = scmp.ne.s32.totalorder %s71, %s73
      %p80 = scmp.eq.s32.totalorder %s26, 3
      %p81 = por %p79, %p80
      %p82 = scmp.ne.s32.totalorder %s73, %s74
      %p83 = scmp.eq.s32.totalorder %s26, 0
      %p84 = por %p82, %p83
      %p85 = scmp.ne.s32.totalorder %s73, %s74
      %p86 = scmp.eq.s32.totalorder %s27, 3
      %p87 = por %p85, %p86
      %p89 = scmp.ne.s32.totalorder %s74, %s88
      %p90 = scmp.eq.s32.totalorder %s27, 0
      %p91 = por %p89, %p90
      %s93 = sadd.s32 %s92, 1
      %p96 = scmp.eq.s32.totalorder %s21, 3
      %p97 = scmp.ne.s32.totalorder %s92, %s94
      %p98 = scmp.eq.s32.totalorder %s21, 0
      %p99 = por %p97, %p98
      %p100 = scmp.ne.s32.totalorder %s92, %s94
      %p101 = scmp.eq.s32.totalorder %s26, 3
      %p102 = por %p100, %p101
      %p103 = scmp.ne.s32.totalorder %s94, %s95
      %p104 = scmp.eq.s32.totalorder %s26, 0
      %p105 = por %p103, %p104
      %p106 = scmp.ne.s32.totalorder %s94, %s95
      %p107 = scmp.eq.s32.totalorder %s27, 3
      %p108 = por %p106, %p107
      %p110 = scmp.ne.s32.totalorder %s95, %s109
      %p111 = scmp.eq.s32.totalorder %s27, 0
      %p112 = por %p110, %p111
      %s114 = sadd.s32 %s113, 1
      %p117 = scmp.eq.s32.totalorder %s21, 3
      %p118 = scmp.ne.s32.totalorder %s113, %s115
      %p119 = scmp.eq.s32.totalorder %s21, 0
      %p120 = por %p118, %p119
      %p121 = scmp.ne.s32.totalorder %s113, %s115
      %p122 = scmp.eq.s32.totalorder %s26, 3
      %p123 = por %p121, %p122
      %p124 = scmp.ne.s32.totalorder %s115, %s116
      %p125 = scmp.eq.s32.totalorder %s26, 0
      %p126 = por %p124, %p125
      %p127 = scmp.ne.s32.totalorder %s115, %s116
      %p128 = scmp.eq.s32.totalorder %s27, 3
      %p129 = por %p127, %p128
      %p131 = scmp.ne.s32.totalorder %s116, %s130
      %p132 = scmp.eq.s32.totalorder %s27, 0
      %p133 = por %p131, %p132
      %s134 = ssub.s32 %s21, %s28
      %p135 = scmp.eq.s32.totalorder %s134, 0
      %s137 = sadd.s32 %s136, 1
      %s138 = scalar_select %p135, %s136, %s137
      %p141 = pneg %p135
      %p142 = scmp.eq.s32.totalorder %s21, 3
      %p143 = por %p141, %p142
      %p144 = scmp.ne.s32.totalorder %s136, %s139
      %p145 = scmp.eq.s32.totalorder %s21, 0
      %p146 = por %p144, %p145
      %p147 = scmp.ne.s32.totalorder %s136, %s139
      %p148 = scmp.eq.s32.totalorder %s26, 3
      %p149 = por %p147, %p148
      %p150 = scmp.ne.s32.totalorder %s139, %s140
      %p151 = scmp.eq.s32.totalorder %s26, 0
      %p152 = por %p150, %p151
      %p153 = scmp.ne.s32.totalorder %s139, %s140
      %p154 = scmp.eq.s32.totalorder %s27, 3
      %p155 = por %p153, %p154
      %p157 = scmp.ne.s32.totalorder %s140, %s156
      %p158 = scmp.eq.s32.totalorder %s27, 0
      %p159 = por %p157, %p158
      %s160 = ssub.s32 %s21, %s28
      %p161 = scmp.eq.s32.totalorder %s160, 0
      %s163 = sadd.s32 %s162, 1
      %s164 = scalar_select %p161, %s162, %s163
      %p167 = pneg %p161
      %p168 = scmp.eq.s32.totalorder %s21, 3
      %p169 = por %p167, %p168
      %p170 = scmp.ne.s32.totalorder %s162, %s165
      %p171 = scmp.eq.s32.totalorder %s21, 0
      %p172 = por %p170, %p171
      %p173 = scmp.ne.s32.totalorder %s162, %s165
      %p174 = scmp.eq.s32.totalorder %s26, 3
      %p175 = por %p173, %p174
      %p176 = scmp.ne.s32.totalorder %s165, %s166
      %p177 = scmp.eq.s32.totalorder %s26, 0
      %p178 = por %p176, %p177
      %p179 = scmp.ne.s32.totalorder %s165, %s166
      %p180 = scmp.eq.s32.totalorder %s27, 3
      %p181 = por %p179, %p180
      %p183 = scmp.ne.s32.totalorder %s166, %s182
      %p184 = scmp.eq.s32.totalorder %s27, 0
      %p185 = por %p183, %p184
      %s186 = ssub.s32 %s21, %s28
      %p187 = scmp.eq.s32.totalorder %s186, 0
      %s189 = sadd.s32 %s188, 1
      %s190 = scalar_select %p187, %s188, %s189
      %p193 = pneg %p187
      %p194 = scmp.eq.s32.totalorder %s21, 3
      %p195 = por %p193, %p194
      %p196 = scmp.ne.s32.totalorder %s188, %s191
      %p197 = scmp.eq.s32.totalorder %s21, 0
      %p198 = por %p196, %p197
      %p199 = scmp.ne.s32.totalorder %s188, %s191
      %p200 = scmp.eq.s32.totalorder %s26, 3
      %p201 = por %p199, %p200
      %p202 = scmp.ne.s32.totalorder %s191, %s192
      %p203 = scmp.eq.s32.totalorder %s26, 0
      %p204 = por %p202, %p203
      %p205 = scmp.ne.s32.totalorder %s191, %s192
      %p206 = scmp.eq.s32.totalorder %s27, 3
      %p207 = por %p205, %p206
      %p209 = scmp.ne.s32.totalorder %s192, %s208
      %p210 = scmp.eq.s32.totalorder %s27, 0
      %p211 = por %p209, %p210
      %s213 = sadd.s32 %s212, 1
      %p216 = scmp.eq.s32.totalorder %s21, 3
      %p217 = scmp.ne.s32.totalorder %s212, %s214
      %p218 = scmp.eq.s32.totalorder %s21, 0
      %p219 = por %p217, %p218
      %p220 = scmp.ne.s32.totalorder %s212, %s214
      %p221 = scmp.eq.s32.totalorder %s26, 3
      %p222 = por %p220, %p221
      %p223 = scmp.ne.s32.totalorder %s214, %s215
      %p224 = scmp.eq.s32.totalorder %s26, 0
      %p225 = por %p223, %p224
      %p226 = scmp.ne.s32.totalorder %s214, %s215
      %p227 = scmp.eq.s32.totalorder %s27, 3
      %p228 = por %p226, %p227
      %p230 = scmp.ne.s32.totalorder %s215, %s229
      %p231 = scmp.eq.s32.totalorder %s27, 0
      %p232 = por %p230, %p231
      %s234 = sadd.s32 %s233, 1
      %p237 = scmp.eq.s32.totalorder %s21, 3
      %p238 = scmp.ne.s32.totalorder %s233, %s235
      %p239 = scmp.eq.s32.totalorder %s21, 0
      %p240 = por %p238, %p239
      %p241 = scmp.ne.s32.totalorder %s233, %s235
      %p242 = scmp.eq.s32.totalorder %s26, 3
      %p243 = por %p241, %p242
      %p244 = scmp.ne.s32.totalorder %s235, %s236
      %p245 = scmp.eq.s32.totalorder %s26, 0
      %p246 = por %p244, %p245
      %p247 = scmp.ne.s32.totalorder %s235, %s236
      %p248 = scmp.eq.s32.totalorder %s27, 3
      %p249 = por %p247, %p248
      %p251 = scmp.ne.s32.totalorder %s236, %s250
      %p252 = scmp.eq.s32.totalorder %s27, 0
      %p253 = por %p251, %p252
      %s255 = sadd.s32 %s254, 1
      %p258 = scmp.eq.s32.totalorder %s21, 3
      %p259 = scmp.ne.s32.totalorder %s254, %s256
      %p260 = scmp.eq.s32.totalorder %s21, 0
      %p261 = por %p259, %p260
      %p262 = scmp.ne.s32.totalorder %s254, %s256
      %p263 = scmp.eq.s32.totalorder %s26, 3
      %p264 = por %p262, %p263
      %p265 = scmp.ne.s32.totalorder %s256, %s257
      %p266 = scmp.eq.s32.totalorder %s26, 0
      %p267 = por %p265, %p266
      %p268 = scmp.ne.s32.totalorder %s256, %s257
      %p269 = scmp.eq.s32.totalorder %s27, 3
      %p270 = por %p268, %p269
      %p272 = scmp.ne.s32.totalorder %s257, %s271
      %p273 = scmp.eq.s32.totalorder %s27, 0
      %p274 = por %p272, %p273
      %p275 = scmp.le.s32.totalorder 1, %s21
      %p276 = scmp.lt.s32.totalorder %s21, 5
      %p277 = pnand %p275, %p276
      %p278 = pneg %p277
      // Predicated region
      $region9: #{kgedn_forward.1} parent=5 // pred_check
        _
      $region10: #{kgedn_forward.1} parent=5 // pred_check_branch
        %280 = sbr.rel (%p277) target = $region12
      $region11: #{kgedn_forward.1} parent=5 // pred_region
        %s281 = ssub.s32 %s21, 1
        // Predicated region
        $region13: #{kgedn_forward.1} parent=11 // pred_check
          %p282 = pneg %p42
        $region14: #{kgedn_forward.1} parent=11 // pred_check_branch
          %284 = sbr.rel (%p282) target = $region16
        $region15: #{kgedn_forward.1} parent=11 // pred_region
          _
        $region16: #{kgedn_forward.1} parent=11 // pred_fallthru
          _
        // Predicated region
        $region17: #{kgedn_forward.1} parent=11 // pred_check
          %p285 = pneg %p63
        $region18: #{kgedn_forward.1} parent=11 // pred_check_branch
          %287 = sbr.rel (%p285) target = $region20
        $region19: #{kgedn_forward.1} parent=11 // pred_region
          _
        $region20: #{kgedn_forward.1} parent=11 // pred_fallthru
          _
        // Predicated region
        $region21: #{kgedn_forward.1} parent=11 // pred_check
          %p288 = pneg %p84
        $region22: #{kgedn_forward.1} parent=11 // pred_check_branch
          %290 = sbr.rel (%p288) target = $region24
        $region23: #{kgedn_forward.1} parent=11 // pred_region
          _
        $region24: #{kgedn_forward.1} parent=11 // pred_fallthru
          _
        // Predicated region
        $region25: #{kgedn_forward.1} parent=11 // pred_check
          %p291 = pneg %p105
        $region26: #{kgedn_forward.1} parent=11 // pred_check_branch
          %293 = sbr.rel (%p291) target = $region28
        $region27: #{kgedn_forward.1} parent=11 // pred_region
          _
        $region28: #{kgedn_forward.1} parent=11 // pred_fallthru
          _
        // Predicated region
        $region29: #{kgedn_forward.1} parent=11 // pred_check
          %p294 = pneg %p126
        $region30: #{kgedn_forward.1} parent=11 // pred_check_branch
          %296 = sbr.rel (%p294) target = $region32
        $region31: #{kgedn_forward.1} parent=11 // pred_region
          _
        $region32: #{kgedn_forward.1} parent=11 // pred_fallthru
          _
        // Predicated region
        $region33: #{kgedn_forward.1} parent=11 // pred_check
          %p297 = pneg %p225
        $region34: #{kgedn_forward.1} parent=11 // pred_check_branch
          %299 = sbr.rel (%p297) target = $region36
        $region35: #{kgedn_forward.1} parent=11 // pred_region
          _
        $region36: #{kgedn_forward.1} parent=11 // pred_fallthru
          _
        // Predicated region
        $region37: #{kgedn_forward.1} parent=11 // pred_check
          %p300 = pneg %p246
        $region38: #{kgedn_forward.1} parent=11 // pred_check_branch
          %302 = sbr.rel (%p300) target = $region40
        $region39: #{kgedn_forward.1} parent=11 // pred_region
          _
        $region40: #{kgedn_forward.1} parent=11 // pred_fallthru
          _
      $region12: #{kgedn_forward.1} parent=5 // pred_fallthru
        _
      %p303 = scmp.lt.s32.totalorder %s21, 4
      // Predicated region
      $region41: #{kgedn_forward.1} parent=5 // pred_check
        %p304 = pneg %p303
      $region42: #{kgedn_forward.1} parent=5 // pred_check_branch
        %306 = sbr.rel (%p304) target = $region44
      $region43: #{kgedn_forward.1} parent=5 // pred_region
        // Predicated region
        $region45: #{kgedn_forward.1} parent=43 // pred_check
          %p307 = pneg %p146
        $region46: #{kgedn_forward.1} parent=43 // pred_check_branch
          %309 = sbr.rel (%p307) target = $region48
        $region47: #{kgedn_forward.1} parent=43 // pred_region
          %s310 = sand.u32 %s136, 1
          %s311 = scalar_lea.sflag [#allocation7], %s310
          %s312 = sand.u32 %s136, 1
          %s313 = smul.addr %s312, 256
          %s314 = scalar_lea.vmem [#allocation6], %s313
          %s316 = ssub.s32 4096, 4096
          %317 = vsyncadd %s311, %s316
          %s318 = smul.addr %s21, 64
          %s319 = scalar_lea.hbm %s5, %s318
          %s320 = sshll.u32 %s314, 4
          %s321 = int_to_ptr.vmem [resolvable:$true] %s320
          %326 = dma.hbm_to_vmem [thread:$0]  %s319, 4096, %s321, %s311, 256, 64, 4
        $region48: #{kgedn_forward.1} parent=43 // pred_fallthru
          _
        // Predicated region
        $region49: #{kgedn_forward.1} parent=43 // pred_check
          %p327 = pneg %p172
        $region50: #{kgedn_forward.1} parent=43 // pred_check_branch
          %329 = sbr.rel (%p327) target = $region52
        $region51: #{kgedn_forward.1} parent=43 // pred_region
          %p330 = scmp.lt.s32.totalorder %s21, 3
          %s331 = scalar_select %p330, %s21, 3
          %s332 = scalar_lea.vmem %s6, %s331
        $region52: #{kgedn_forward.1} parent=43 // pred_fallthru
          _
        // Predicated region
        $region53: #{kgedn_forward.1} parent=43 // pred_check
          %p333 = pneg %p198
        $region54: #{kgedn_forward.1} parent=43 // pred_check_branch
          %335 = sbr.rel (%p333) target = $region56
        $region55: #{kgedn_forward.1} parent=43 // pred_region
          %p336 = scmp.lt.s32.totalorder %s21, 3
          %s337 = scalar_select %p336, %s21, 3
          %s338 = scalar_lea.vmem %s7, %s337
        $region56: #{kgedn_forward.1} parent=43 // pred_fallthru
          _
      $region44: #{kgedn_forward.1} parent=5 // pred_fallthru
        _
      %p339 = scmp.le.s32.totalorder 1, %s21
      %p340 = scmp.lt.s32.totalorder %s21, 5
      %p341 = pnand %p339, %p340
      %p342 = pneg %p341
      // Predicated region
      $region57: #{kgedn_forward.1} parent=5 // pred_check
        _
      $region58: #{kgedn_forward.1} parent=5 // pred_check_branch
        %344 = sbr.rel (%p341) target = $region60
      $region59: #{kgedn_forward.1} parent=5 // pred_region
        %s345 = ssub.s32 %s21, 1
        %s346 = sand.u32 %s139, 1
        %s347 = scalar_lea.sflag [#allocation7], %s346
        %s348 = sand.u32 %s139, 1
        %s349 = smul.addr %s348, 256
        %s350 = scalar_lea.vmem [#allocation6], %s349
        // Predicated region
        $region61: #{kgedn_forward.1} parent=59 // pred_check
          %p351 = pneg %p152
        $region62: #{kgedn_forward.1} parent=59 // pred_check_branch
          %353 = sbr.rel (%p351) target = $region64
        $region63: #{kgedn_forward.1} parent=59 // pred_region
          %354 = dma.done %s347, 4096
        $region64: #{kgedn_forward.1} parent=59 // pred_fallthru
          _
        %p355 = pneg %p42
        %p356 = pneg %p39
        %p357 = pneg %p63
        %p358 = pneg %p60
        %p359 = pneg %p84
        %p360 = pneg %p81
        %p361 = pneg %p105
        %p362 = pneg %p102
        %p363 = pneg %p126
        %p364 = pneg %p123
        %s365 = sand.u32 %s139, 1
        %s366 = scalar_lea.sflag [#allocation7], %s365
        %s367 = sand.u32 %s139, 1
        %s368 = smul.addr %s367, 256
        %s369 = scalar_lea.vmem [#allocation6], %s368
        %p370 = pneg %p152
        %p371 = pneg %p149
        %p372 = scmp.lt.s32.totalorder %s26, 3
        %s373 = scalar_select %p372, %s26, 3
        %s374 = scalar_lea.vmem %s6, %s373
        %p375 = pneg %p178
        %p376 = pneg %p175
        %p377 = scmp.lt.s32.totalorder %s26, 3
        %s378 = scalar_select %p377, %s26, 3
        %s379 = scalar_lea.vmem %s7, %s378
        %p380 = pneg %p204
        %p381 = pneg %p201
        %p382 = pneg %p225
        %p383 = pneg %p222
        %p384 = pneg %p246
        %p385 = pneg %p243
        %p386 = pneg %p267
        %p387 = pneg %p264
        %p388 = scmp.lt.s32.totalorder %s26, 3
        %s389 = scalar_select %p388, %s26, 3
        %s390 = scalar_lea.vmem %s6, %s389
        %p391 = scmp.lt.s32.totalorder %s26, 3
        %s392 = scalar_select %p391, %s26, 3
        %s393 = scalar_lea.vmem %s7, %s392
        %p395 = scmp.eq.s32.totalorder %s26, 0
        // Predicated region
        $region65: #{kgedn_forward.1} parent=59 // pred_check
          %p396 = pneg %p395
        $region66: #{kgedn_forward.1} parent=59 // pred_check_branch
          %398 = sbr.rel (%p396) target = $region68
        $region67: #{kgedn_forward.1} parent=59 // pred_region
          %v399 = vld [vmem:[%s0] sm:$0xff]
          %v400 = vld [vmem:[%s0 + $0x8] sm:$0xff]
          %v401 = vld [vmem:[%s0 + $0x10] sm:$0xff]
          %v402 = vld [vmem:[%s0 + $0x18] sm:$0xff]
          %v403 = vld [vmem:[%s0 + $0x20] sm:$0xff]
          %v404 = vld [vmem:[%s0 + $0x28] sm:$0xff]
          %v405 = vld [vmem:[%s0 + $0x30] sm:$0xff]
          %v406 = vld [vmem:[%s0 + $0x38] sm:$0xff]
          %v407 = vld [vmem:[%s0 + $0x40] sm:$0xff]
          %v408 = vld [vmem:[%s0 + $0x48] sm:$0xff]
          %v409 = vld [vmem:[%s0 + $0x50] sm:$0xff]
          %v410 = vld [vmem:[%s0 + $0x58] sm:$0xff]
          %v411 = vld [vmem:[%s0 + $0x60] sm:$0xff]
          %v412 = vld [vmem:[%s0 + $0x68] sm:$0xff]
          %v413 = vld [vmem:[%s0 + $0x70] sm:$0xff]
          %v414 = vld [vmem:[%s0 + $0x78] sm:$0xff]
          %v415 = vpack.c.bf16 %v400, %v399
          %v416 = vpack.c.bf16 %v402, %v401
          %v417 = vpack.c.bf16 %v404, %v403
          %v418 = vpack.c.bf16 %v406, %v405
          %v419 = vpack.c.bf16 %v408, %v407
          %v420 = vpack.c.bf16 %v410, %v409
          %v421 = vpack.c.bf16 %v412, %v411
          %v422 = vpack.c.bf16 %v414, %v413
          %v423 = vld [vmem:[%s1] sm:$0xff]
          %v424 = vld [vmem:[%s1 + $0x8] sm:$0xff]
          %v425 = vld [vmem:[%s1 + $0x10] sm:$0xf]
          %v426 = vld [vmem:[%s1 + $0x14] sm:$0xff]
          %v427 = vld [vmem:[%s1 + $0x1c] sm:$0xff]
          %v428 = vld [vmem:[%s1 + $0x24] sm:$0xf]
          %v429 = vld [vmem:[%s1 + $0x28] sm:$0xff]
          %v430 = vld [vmem:[%s1 + $0x30] sm:$0xff]
          %v431 = vld [vmem:[%s1 + $0x38] sm:$0xf]
          %v432 = vld [vmem:[%s1 + $0x3c] sm:$0xff]
          %v433 = vld [vmem:[%s1 + $0x44] sm:$0xff]
          %v434 = vld [vmem:[%s1 + $0x4c] sm:$0xf]
          %v435 = vld [vmem:[%s1 + $0x50] sm:$0xff]
          %v436 = vld [vmem:[%s1 + $0x58] sm:$0xff]
          %v437 = vld [vmem:[%s1 + $0x60] sm:$0xf]
          %v438 = vld [vmem:[%s1 + $0x64] sm:$0xff]
          %v439 = vld [vmem:[%s1 + $0x6c] sm:$0xff]
          %v440 = vld [vmem:[%s1 + $0x74] sm:$0xf]
          %v441 = vld [vmem:[%s1 + $0x78] sm:$0xff]
          %v442 = vld [vmem:[%s1 + $0x80] sm:$0xff]
          %v443 = vld [vmem:[%s1 + $0x88] sm:$0xf]
          %v444 = vld [vmem:[%s1 + $0x8c] sm:$0xff]
          %v445 = vld [vmem:[%s1 + $0x94] sm:$0xff]
          %v446 = vld [vmem:[%s1 + $0x9c] sm:$0xf]
          %v447 = vld [vmem:[%s1 + $0xa0] sm:$0xff]
          %v448 = vld [vmem:[%s1 + $0xa8] sm:$0xff]
          %v449 = vld [vmem:[%s1 + $0xb0] sm:$0xf]
          %v450 = vld [vmem:[%s1 + $0xb4] sm:$0xff]
          %v451 = vld [vmem:[%s1 + $0xbc] sm:$0xff]
          %v452 = vld [vmem:[%s1 + $0xc4] sm:$0xf]
          %v453 = vld [vmem:[%s1 + $0xc8] sm:$0xff]
          %v454 = vld [vmem:[%s1 + $0xd0] sm:$0xff]
          %v455 = vld [vmem:[%s1 + $0xd8] sm:$0xf]
          %v456 = vld [vmem:[%s1 + $0xdc] sm:$0xff]
          %v457 = vld [vmem:[%s1 + $0xe4] sm:$0xff]
          %v458 = vld [vmem:[%s1 + $0xec] sm:$0xf]
          %v459 = vld [vmem:[%s1 + $0xf0] sm:$0xff]
          %v460 = vld [vmem:[%s1 + $0xf8] sm:$0xff]
          %v461 = vld [vmem:[%s1 + $0x100] sm:$0xf]
          %v462 = vld [vmem:[%s1 + $0x104] sm:$0xff]
          %v463 = vld [vmem:[%s1 + $0x10c] sm:$0xff]
          %v464 = vld [vmem:[%s1 + $0x114] sm:$0xf]
          %v465 = vld [vmem:[%s1 + $0x118] sm:$0xff]
          %v466 = vld [vmem:[%s1 + $0x120] sm:$0xff]
          %v467 = vld [vmem:[%s1 + $0x128] sm:$0xf]
          %v468 = vld [vmem:[%s1 + $0x12c] sm:$0xff]
          %v469 = vld [vmem:[%s1 + $0x134] sm:$0xff]
          %v470 = vld [vmem:[%s1 + $0x13c] sm:$0xf]
          %v519 = vunpack.c.l.b16 %v423
          %v520 = vunpack.c.h.b16 %v423
          %v521 = vunpack.c.l.b16 %v424
          %v522 = vunpack.c.h.b16 %v424
          %v523 = vunpack.c.l.b16 %v425
          %v524 = vunpack.c.l.b16 %v426
          %v525 = vunpack.c.h.b16 %v426
          %v526 = vunpack.c.l.b16 %v427
          %v527 = vunpack.c.h.b16 %v427
          %v528 = vunpack.c.l.b16 %v428
          %v529 = vunpack.c.l.b16 %v429
          %v530 = vunpack.c.h.b16 %v429
          %v531 = vunpack.c.l.b16 %v430
          %v532 = vunpack.c.h.b16 %v430
          %v533 = vunpack.c.l.b16 %v431
          %v534 = vunpack.c.l.b16 %v432
          %v535 = vunpack.c.h.b16 %v432
          %v536 = vunpack.c.l.b16 %v433
          %v537 = vunpack.c.h.b16 %v433
          %v538 = vunpack.c.l.b16 %v434
          %v539 = vunpack.c.l.b16 %v435
          %v540 = vunpack.c.h.b16 %v435
          %v541 = vunpack.c.l.b16 %v436
          %v542 = vunpack.c.h.b16 %v436
          %v543 = vunpack.c.l.b16 %v437
          %v544 = vunpack.c.l.b16 %v438
          %v545 = vunpack.c.h.b16 %v438
          %v546 = vunpack.c.l.b16 %v439
          %v547 = vunpack.c.h.b16 %v439
          %v548 = vunpack.c.l.b16 %v440
          %v549 = vunpack.c.l.b16 %v441
          %v550 = vunpack.c.h.b16 %v441
          %v551 = vunpack.c.l.b16 %v442
          %v552 = vunpack.c.h.b16 %v442
          %v553 = vunpack.c.l.b16 %v443
          %v554 = vunpack.c.l.b16 %v444
          %v555 = vunpack.c.h.b16 %v444
          %v556 = vunpack.c.l.b16 %v445
          %v557 = vunpack.c.h.b16 %v445
          %v558 = vunpack.c.l.b16 %v446
          %v559 = vunpack.c.l.b16 %v447
          %v560 = vunpack.c.h.b16 %v447
          %v561 = vunpack.c.l.b16 %v448
          %v562 = vunpack.c.h.b16 %v448
          %v563 = vunpack.c.l.b16 %v449
          %v564 = vunpack.c.l.b16 %v450
          %v565 = vunpack.c.h.b16 %v450
          %v566 = vunpack.c.l.b16 %v451
          %v567 = vunpack.c.h.b16 %v451
          %v568 = vunpack.c.l.b16 %v452
          %v569 = vunpack.c.l.b16 %v453
          %v570 = vunpack.c.h.b16 %v453
          %v571 = vunpack.c.l.b16 %v454
          %v572 = vunpack.c.h.b16 %v454
          %v573 = vunpack.c.l.b16 %v455
          %v574 = vunpack.c.l.b16 %v456
          %v575 = vunpack.c.h.b16 %v456
          %v576 = vunpack.c.l.b16 %v457
          %v577 = vunpack.c.h.b16 %v457
          %v578 = vunpack.c.l.b16 %v458
          %v579 = vunpack.c.l.b16 %v459
          %v580 = vunpack.c.h.b16 %v459
          %v581 = vunpack.c.l.b16 %v460
          %v582 = vunpack.c.h.b16 %v460
          %v583 = vunpack.c.l.b16 %v461
          %v584 = vunpack.c.l.b16 %v462
          %v585 = vunpack.c.h.b16 %v462
          %v586 = vunpack.c.l.b16 %v463
          %v587 = vunpack.c.h.b16 %v463
          %v588 = vunpack.c.l.b16 %v464
          %v589 = vunpack.c.l.b16 %v465
          %v590 = vunpack.c.h.b16 %v465
          %v591 = vunpack.c.l.b16 %v466
          %v592 = vunpack.c.h.b16 %v466
          %v593 = vunpack.c.l.b16 %v467
          %v594 = vunpack.c.l.b16 %v468
          %v595 = vunpack.c.h.b16 %v468
          %v596 = vunpack.c.l.b16 %v469
          %v597 = vunpack.c.h.b16 %v469
          %v598 = vunpack.c.l.b16 %v470
          %v599 = vpack.c.b16 %v524, %v519
          %v600 = vpack.c.b16 %v525, %v520
          %v601 = vpack.c.b16 %v526, %v521
          %v602 = vpack.c.b16 %v527, %v522
          %v603 = vpack.c.b16 %v528, %v523
          %v604 = vpack.c.b16 %v534, %v529
          %v605 = vpack.c.b16 %v535, %v530
          %v606 = vpack.c.b16 %v536, %v531
          %v607 = vpack.c.b16 %v537, %v532
          %v608 = vpack.c.b16 %v538, %v533
          %v609 = vpack.c.b16 %v544, %v539
          %v610 = vpack.c.b16 %v545, %v540
          %v611 = vpack.c.b16 %v546, %v541
          %v612 = vpack.c.b16 %v547, %v542
          %v613 = vpack.c.b16 %v548, %v543
          %v614 = vpack.c.b16 %v554, %v549
          %v615 = vpack.c.b16 %v555, %v550
          %v616 = vpack.c.b16 %v556, %v551
          %v617 = vpack.c.b16 %v557, %v552
          %v618 = vpack.c.b16 %v558, %v553
          %v619 = vpack.c.b16 %v564, %v559
          %v620 = vpack.c.b16 %v565, %v560
          %v621 = vpack.c.b16 %v566, %v561
          %v622 = vpack.c.b16 %v567, %v562
          %v623 = vpack.c.b16 %v568, %v563
          %v624 = vpack.c.b16 %v574, %v569
          %v625 = vpack.c.b16 %v575, %v570
          %v626 = vpack.c.b16 %v576, %v571
          %v627 = vpack.c.b16 %v577, %v572
          %v628 = vpack.c.b16 %v578, %v573
          %v629 = vpack.c.b16 %v584, %v579
          %v630 = vpack.c.b16 %v585, %v580
          %v631 = vpack.c.b16 %v586, %v581
          %v632 = vpack.c.b16 %v587, %v582
          %v633 = vpack.c.b16 %v588, %v583
          %v634 = vpack.c.b16 %v594, %v589
          %v635 = vpack.c.b16 %v595, %v590
          %v636 = vpack.c.b16 %v596, %v591
          %v637 = vpack.c.b16 %v597, %v592
          %v638 = vpack.c.b16 %v598, %v593
          %679 = vmatprep.subr.bf16.mxu0 %v600
          %680 = vmatpush1.bf16.msra.mxu0 %v599
          %681 = vmatprep.subr.bf16.mxu0 %v605
          %682 = vmatpush1.bf16.msra.mxu0 %v604
          %683 = vmatprep.subr.bf16.mxu0 %v610
          %684 = vmatpush1.bf16.msra.mxu0 %v609
          %685 = vmatprep.subr.bf16.mxu0 %v615
          %686 = vmatpush1.bf16.msra.mxu0 %v614
          %687 = vmatprep.subr.bf16.mxu0 %v620
          %688 = vmatpush1.bf16.msra.mxu0 %v619
          %689 = vmatprep.subr.bf16.mxu0 %v625
          %690 = vmatpush1.bf16.msra.mxu0 %v624
          %691 = vmatprep.subr.bf16.mxu0 %v630
          %692 = vmatpush1.bf16.msra.mxu0 %v629
          %693 = vmatprep.subr.bf16.mxu0 %v635
          %694 = vmatpush1.bf16.msra.mxu0 %v634
          %695 = vmatprep.subr.bf16.mxu0 0
          %696 = vmatpush1.bf16.msra.mxu0 0
          %697 = vmatprep.subr.bf16.mxu0 0
          %698 = vmatpush1.bf16.msra.mxu0 0
          %699 = vmatprep.subr.bf16.mxu0 0
          %700 = vmatpush1.bf16.msra.mxu0 0
          %701 = vmatprep.subr.bf16.mxu0 0
          %702 = vmatpush1.bf16.msra.mxu0 0
          %703 = vmatprep.subr.bf16.mxu0 0
          %704 = vmatpush1.bf16.msra.mxu0 0
          %705 = vmatprep.subr.bf16.mxu0 0
          %706 = vmatpush1.bf16.msra.mxu0 0
          %707 = vmatprep.subr.bf16.mxu0 0
          %708 = vmatpush1.bf16.msra.mxu0 0
          %709 = vmatprep.subr.bf16.mxu0 0
          %710 = vmatpush1.bf16.msra.mxu0 0
          %711 = vmatprep.mubr.bf16.mxu0 0
          %712 = vmatmul.mubr.bf16.gmra.mrb[0].mxu0 %v415
          %v713 = vpop.f32.mrb[0].mxu0
          %v714 = vadd.f32 0.0, %v713
          %v715 = vpop.f32.mrb[0].mxu0
          %v716 = vadd.f32 0.0, %v715
          %v717 = vpop.f32.mrb[0].mxu0
          %v718 = vadd.f32 0.0, %v717
          %v719 = vpop.f32.mrb[0].mxu0
          %v720 = vadd.f32 0.0, %v719
          %721 = vmatprep.mubr.bf16.mxu0 0
          %722 = vmatmul.mubr.bf16.gmra.mrb[0].mxu0 %v416
          %v723 = vpop.f32.mrb[0].mxu0
          %v724 = vadd.f32 0.0, %v723
          %v725 = vpop.f32.mrb[0].mxu0
          %v726 = vadd.f32 0.0, %v725
          %v727 = vpop.f32.mrb[0].mxu0
          %v728 = vadd.f32 0.0, %v727
          %v729 = vpop.f32.mrb[0].mxu0
          %v730 = vadd.f32 0.0, %v729
          %731 = vmatprep.mubr.bf16.mxu0 0
          %732 = vmatmul.mubr.bf16.gmra.mrb[0].mxu0 %v417
          %v733 = vpop.f32.mrb[0].mxu0
          %v734 = vadd.f32 0.0, %v733
          %v735 = vpop.f32.mrb[0].mxu0
          %v736 = vadd.f32 0.0, %v735
          %v737 = vpop.f32.mrb[0].mxu0
          %v738 = vadd.f32 0.0, %v737
          %v739 = vpop.f32.mrb[0].mxu0
          %v740 = vadd.f32 0.0, %v739
          %741 = vmatprep.mubr.bf16.mxu0 0
          %742 = vmatmul.mubr.bf16.gmra.mrb[0].mxu0 %v418
          %v743 = vpop.f32.mrb[0].mxu0
          %v744 = vadd.f32 0.0, %v743
          %v745 = vpop.f32.mrb[0].mxu0
          %v746 = vadd.f32 0.0, %v745
          %v747 = vpop.f32.mrb[0].mxu0
          %v748 = vadd.f32 0.0, %v747
          %v749 = vpop.f32.mrb[0].mxu0
          %v750 = vadd.f32 0.0, %v749
          %751 = vmatprep.mubr.bf16.mxu0 0
          %752 = vmatmul.mubr.bf16.gmra.mrb[0].mxu0 %v419
          %v753 = vpop.f32.mrb[0].mxu0
          %v754 = vadd.f32 0.0, %v753
          %v755 = vpop.f32.mrb[0].mxu0
          %v756 = vadd.f32 0.0, %v755
          %v757 = vpop.f32.mrb[0].mxu0
          %v758 = vadd.f32 0.0, %v757
          %v759 = vpop.f32.mrb[0].mxu0
          %v760 = vadd.f32 0.0, %v759
          %761 = vmatprep.mubr.bf16.mxu0 0
          %762 = vmatmul.mubr.bf16.gmra.mrb[0].mxu0 %v420
          %v763 = vpop.f32.mrb[0].mxu0
          %v764 = vadd.f32 0.0, %v763
          %v765 = vpop.f32.mrb[0].mxu0
          %v766 = vadd.f32 0.0, %v765
          %v767 = vpop.f32.mrb[0].mxu0
          %v768 = vadd.f32 0.0, %v767
          %v769 = vpop.f32.mrb[0].mxu0
          %v770 = vadd.f32 0.0, %v769
          %771 = vmatprep.mubr.bf16.mxu0 0
          %772 = vmatmul.mubr.bf16.gmra.mrb[0].mxu0 %v421
          %v773 = vpop.f32.mrb[0].mxu0
          %v774 = vadd.f32 0.0, %v773
          %v775 = vpop.f32.mrb[0].mxu0
          %v776 = vadd.f32 0.0, %v775
          %v777 = vpop.f32.mrb[0].mxu0
          %v778 = vadd.f32 0.0, %v777
          %v779 = vpop.f32.mrb[0].mxu0
          %v780 = vadd.f32 0.0, %v779
          %781 = vmatprep.mubr.bf16.mxu0 0
          %782 = vmatmul.mubr.bf16.gmra.mrb[0].mxu0 %v422
          %v783 = vpop.f32.mrb[0].mxu0
          %v784 = vadd.f32 0.0, %v783
          %v785 = vpop.f32.mrb[0].mxu0
          %v786 = vadd.f32 0.0, %v785
          %v787 = vpop.f32.mrb[0].mxu0
          %v788 = vadd.f32 0.0, %v787
          %v789 = vpop.f32.mrb[0].mxu0
          %v790 = vadd.f32 0.0, %v789
          %791 = vdwg.mxu0
          %792 = vmatprep.subr.bf16.mxu0 %v602
          %793 = vmatpush1.bf16.msra.mxu0 %v601
          %794 = vmatprep.subr.bf16.mxu0 %v607
          %795 = vmatpush1.bf16.msra.mxu0 %v606
          %796 = vmatprep.subr.bf16.mxu0 %v612
          %797 = vmatpush1.bf16.msra.mxu0 %v611
          %798 = vmatprep.subr.bf16.mxu0 %v617
          %799 = vmatpush1.bf16.msra.mxu0 %v616
          %800 = vmatprep.subr.bf16.mxu0 %v622
          %801 = vmatpush1.bf16.msra.mxu0 %v621
          %802 = vmatprep.subr.bf16.mxu0 %v627
          %803 = vmatpush1.bf16.msra.mxu0 %v626
          %804 = vmatprep.subr.bf16.mxu0 %v632
          %805 = vmatpush1.bf16.msra.mxu0 %v631
          %806 = vmatprep.subr.bf16.mxu0 %v637
          %807 = vmatpush1.bf16.msra.mxu0 %v636
          %808 = vmatprep.subr.bf16.mxu0 0
          %809 = vmatpush1.bf16.msra.mxu0 0
          %810 = vmatprep.subr.bf16.mxu0 0
          %811 = vmatpush1.bf16.msra.mxu0 0
          %812 = vmatprep.subr.bf16.mxu0 0
          %813 = vmatpush1.bf16.msra.mxu0 0
          %814 = vmatprep.subr.bf16.mxu0 0
          %815 = vmatpush1.bf16.msra.mxu0 0
          %816 = vmatprep.subr.bf16.mxu0 0
          %817 = vmatpush1.bf16.msra.mxu0 0
          %818 = vmatprep.subr.bf16.mxu0 0
          %819 = vmatpush1.bf16.msra.mxu0 0
          %820 = vmatprep.subr.bf16.mxu0 0
          %821 = vmatpush1.bf16.msra.mxu0 0
          %822 = vmatprep.subr.bf16.mxu0 0
          %823 = vmatpush1.bf16.msra.mxu0 0
          %824 = vmatprep.mubr.bf16.mxu0 0
          %825 = vmatmul.mubr.bf16.gmra.mrb[0].mxu0 %v415
          %v826 = vpop.f32.mrb[0].mxu0
          %v827 = vadd.f32 0.0, %v826
          %v828 = vpop.f32.mrb[0].mxu0
          %v829 = vadd.f32 0.0, %v828
          %v830 = vpop.f32.mrb[0].mxu0
          %v831 = vadd.f32 0.0, %v830
          %v832 = vpop.f32.mrb[0].mxu0
          %v833 = vadd.f32 0.0, %v832
          %834 = vmatprep.mubr.bf16.mxu0 0
          %835 = vmatmul.mubr.bf16.gmra.mrb[0].mxu0 %v416
          %v836 = vpop.f32.mrb[0].mxu0
          %v837 = vadd.f32 0.0, %v836
          %v838 = vpop.f32.mrb[0].mxu0
          %v839 = vadd.f32 0.0, %v838
          %v840 = vpop.f32.mrb[0].mxu0
          %v841 = vadd.f32 0.0, %v840
          %v842 = vpop.f32.mrb[0].mxu0
          %v843 = vadd.f32 0.0, %v842
          %844 = vmatprep.mubr.bf16.mxu0 0
          %845 = vmatmul.mubr.bf16.gmra.mrb[0].mxu0 %v417
          %v846 = vpop.f32.mrb[0].mxu0
          %v847 = vadd.f32 0.0, %v846
          %v848 = vpop.f32.mrb[0].mxu0
          %v849 = vadd.f32 0.0, %v848
          %v850 = vpop.f32.mrb[0].mxu0
          %v851 = vadd.f32 0.0, %v850
          %v852 = vpop.f32.mrb[0].mxu0
          %v853 = vadd.f32 0.0, %v852
          %854 = vmatprep.mubr.bf16.mxu0 0
          %855 = vmatmul.mubr.bf16.gmra.mrb[0].mxu0 %v418
          %v856 = vpop.f32.mrb[0].mxu0
          %v857 = vadd.f32 0.0, %v856
          %v858 = vpop.f32.mrb[0].mxu0
          %v859 = vadd.f32 0.0, %v858
          %v860 = vpop.f32.mrb[0].mxu0
          %v861 = vadd.f32 0.0, %v860
          %v862 = vpop.f32.mrb[0].mxu0
          %v863 = vadd.f32 0.0, %v862
          %864 = vmatprep.mubr.bf16.mxu0 0
          %865 = vmatmul.mubr.bf16.gmra.mrb[0].mxu0 %v419
          %v866 = vpop.f32.mrb[0].mxu0
          %v867 = vadd.f32 0.0, %v866
          %v868 = vpop.f32.mrb[0].mxu0
          %v869 = vadd.f32 0.0, %v868
          %v870 = vpop.f32.mrb[0].mxu0
          %v871 = vadd.f32 0.0, %v870
          %v872 = vpop.f32.mrb[0].mxu0
          %v873 = vadd.f32 0.0, %v872
          %874 = vmatprep.mubr.bf16.mxu0 0
          %875 = vmatmul.mubr.bf16.gmra.mrb[0].mxu0 %v420
          %v876 = vpop.f32.mrb[0].mxu0
          %v877 = vadd.f32 0.0, %v876
          %v878 = vpop.f32.mrb[0].mxu0
          %v879 = vadd.f32 0.0, %v878
          %v880 = vpop.f32.mrb[0].mxu0
          %v881 = vadd.f32 0.0, %v880
          %v882 = vpop.f32.mrb[0].mxu0
          %v883 = vadd.f32 0.0, %v882
          %884 = vmatprep.mubr.bf16.mxu0 0
          %885 = vmatmul.mubr.bf16.gmra.mrb[0].mxu0 %v421
          %v886 = vpop.f32.mrb[0].mxu0
          %v887 = vadd.f32 0.0, %v886
          %v888 = vpop.f32.mrb[0].mxu0
          %v889 = vadd.f32 0.0, %v888
          %v890 = vpop.f32.mrb[0].mxu0
          %v891 = vadd.f32 0.0, %v890
          %v892 = vpop.f32.mrb[0].mxu0
          %v893 = vadd.f32 0.0, %v892
          %894 = vmatprep.mubr.bf16.mxu0 0
          %895 = vmatmul.mubr.bf16.gmra.mrb[0].mxu0 %v422
          %v896 = vpop.f32.mrb[0].mxu0
          %v897 = vadd.f32 0.0, %v896
          %v898 = vpop.f32.mrb[0].mxu0
          %v899 = vadd.f32 0.0, %v898
          %v900 = vpop.f32.mrb[0].mxu0
          %v901 = vadd.f32 0.0, %v900
          %v902 = vpop.f32.mrb[0].mxu0
          %v903 = vadd.f32 0.0, %v902
          %904 = vdwg.mxu0
          %905 = vmatprep.subr.bf16.mxu0 0
          %906 = vmatpush1.bf16.msra.mxu0 %v603
          %907 = vmatprep.subr.bf16.mxu0 0
          %908 = vmatpush1.bf16.msra.mxu0 %v608
          %909 = vmatprep.subr.bf16.mxu0 0
          %910 = vmatpush1.bf16.msra.mxu0 %v613
          %911 = vmatprep.subr.bf16.mxu0 0
          %912 = vmatpush1.bf16.msra.mxu0 %v618
          %913 = vmatprep.subr.bf16.mxu0 0
          %914 = vmatpush1.bf16.msra.mxu0 %v623
          %915 = vmatprep.subr.bf16.mxu0 0
          %916 = vmatpush1.bf16.msra.mxu0 %v628
          %917 = vmatprep.subr.bf16.mxu0 0
          %918 = vmatpush1.bf16.msra.mxu0 %v633
          %919 = vmatprep.subr.bf16.mxu0 0
          %920 = vmatpush1.bf16.msra.mxu0 %v638
          %921 = vmatprep.subr.bf16.mxu0 0
          %922 = vmatpush1.bf16.msra.mxu0 0
          %923 = vmatprep.subr.bf16.mxu0 0
          %924 = vmatpush1.bf16.msra.mxu0 0
          %925 = vmatprep.subr.bf16.mxu0 0
          %926 = vmatpush1.bf16.msra.mxu0 0
          %927 = vmatprep.subr.bf16.mxu0 0
          %928 = vmatpush1.bf16.msra.mxu0 0
          %929 = vmatprep.subr.bf16.mxu0 0
          %930 = vmatpush1.bf16.msra.mxu0 0
          %931 = vmatprep.subr.bf16.mxu0 0
          %932 = vmatpush1.bf16.msra.mxu0 0
          %933 = vmatprep.subr.bf16.mxu0 0
          %934 = vmatpush1.bf16.msra.mxu0 0
          %935 = vmatprep.subr.bf16.mxu0 0
          %936 = vmatpush1.bf16.msra.mxu0 0
          %937 = vmatprep.mubr.bf16.mxu0 0
          %938 = vmatmul.mubr.bf16.gmra.mrb[0].mxu0 %v415
          %v939 = vpop.f32.mrb[0].mxu0
          %v940 = vadd.f32 0.0, %v939
          %v941 = vpop.f32.mrb[0].mxu0
          %v942 = vpop.f32.mrb[0].mxu0
          %v943 = vadd.f32 0.0, %v942
          %v944 = vpop.f32.mrb[0].mxu0
          %945 = vmatprep.mubr.bf16.mxu0 0
          %946 = vmatmul.mubr.bf16.gmra.mrb[0].mxu0 %v416
          %v947 = vpop.f32.mrb[0].mxu0
          %v948 = vadd.f32 0.0, %v947
          %v949 = vpop.f32.mrb[0].mxu0
          %v950 = vpop.f32.mrb[0].mxu0
          %v951 = vadd.f32 0.0, %v950
          %v952 = vpop.f32.mrb[0].mxu0
          %953 = vmatprep.mubr.bf16.mxu0 0
          %954 = vmatmul.mubr.bf16.gmra.mrb[0].mxu0 %v417
          %v955 = vpop.f32.mrb[0].mxu0
          %v956 = vadd.f32 0.0, %v955
          %v957 = vpop.f32.mrb[0].mxu0
          %v958 = vpop.f32.mrb[0].mxu0
          %v959 = vadd.f32 0.0, %v958
          %v960 = vpop.f32.mrb[0].mxu0
          %961 = vmatprep.mubr.bf16.mxu0 0
          %962 = vmatmul.mubr.bf16.gmra.mrb[0].mxu0 %v418
          %v963 = vpop.f32.mrb[0].mxu0
          %v964 = vadd.f32 0.0, %v963
          %v965 = vpop.f32.mrb[0].mxu0
          %v966 = vpop.f32.mrb[0].mxu0
          %v967 = vadd.f32 0.0, %v966
          %v968 = vpop.f32.mrb[0].mxu0
          %969 = vmatprep.mubr.bf16.mxu0 0
          %970 = vmatmul.mubr.bf16.gmra.mrb[0].mxu0 %v419
          %v971 = vpop.f32.mrb[0].mxu0
          %v972 = vadd.f32 0.0, %v971
          %v973 = vpop.f32.mrb[0].mxu0
          %v974 = vpop.f32.mrb[0].mxu0
          %v975 = vadd.f32 0.0, %v974
          %v976 = vpop.f32.mrb[0].mxu0
          %977 = vmatprep.mubr.bf16.mxu0 0
          %978 = vmatmul.mubr.bf16.gmra.mrb[0].mxu0 %v420
          %v979 = vpop.f32.mrb[0].mxu0
          %v980 = vadd.f32 0.0, %v979
          %v981 = vpop.f32.mrb[0].mxu0
          %v982 = vpop.f32.mrb[0].mxu0
          %v983 = vadd.f32 0.0, %v982
          %v984 = vpop.f32.mrb[0].mxu0
          %985 = vmatprep.mubr.bf16.mxu0 0
          %986 = vmatmul.mubr.bf16.gmra.mrb[0].mxu0 %v421
          %v987 = vpop.f32.mrb[0].mxu0
          %v988 = vadd.f32 0.0, %v987
          %v989 = vpop.f32.mrb[0].mxu0
          %v990 = vpop.f32.mrb[0].mxu0
          %v991 = vadd.f32 0.0, %v990
          %v992 = vpop.f32.mrb[0].mxu0
          %993 = vmatprep.mubr.bf16.mxu0 0
          %994 = vmatmul.mubr.bf16.gmra.mrb[0].mxu0 %v422
          %v995 = vpop.f32.mrb[0].mxu0
          %v996 = vadd.f32 0.0, %v995
          %v997 = vpop.f32.mrb[0].mxu0
          %v998 = vpop.f32.mrb[0].mxu0
          %v999 = vadd.f32 0.0, %v998
          %v1000 = vpop.f32.mrb[0].mxu0
          %1001 = vdwg.mxu0
          %v1002 = vld [vmem:[%s2] sm:$0xf]
          %v1004 = vlaneseq
          %v1005 = vshrl.u32 %v1004, 7
          %v1006 = vsub.s32 0, %v1005
          %v1007 = vrot.slane %v1002, %v1006
          %v1008 = vlaneseq
          %v1009 = vshrl.u32 %v1008, 7
          %v1010 = vsub.s32 1, %v1009
          %v1011 = vrot.slane %v1002, %v1010
          %v1012 = vlaneseq
          %v1013 = vshrl.u32 %v1012, 7
          %v1014 = vsub.s32 2, %v1013
          %v1015 = vrot.slane %v1002, %v1014
          %v1016 = vlaneseq
          %v1017 = vshrl.u32 %v1016, 7
          %v1018 = vsub.s32 3, %v1017
          %v1019 = vrot.slane %v1002, %v1018
          %v1024 = vadd.f32 %v714, %v1007
          %v1025 = vadd.f32 %v716, %v1011
          %v1026 = vadd.f32 %v827, %v1015
          %v1027 = vadd.f32 %v829, %v1019
          %v1028 = vadd.f32 %v718, %v1007
          %v1029 = vadd.f32 %v720, %v1011
          %v1030 = vadd.f32 %v831, %v1015
          %v1031 = vadd.f32 %v833, %v1019
          %v1032 = vadd.f32 %v724, %v1007
          %v1033 = vadd.f32 %v726, %v1011
          %v1034 = vadd.f32 %v837, %v1015
          %v1035 = vadd.f32 %v839, %v1019
          %v1036 = vadd.f32 %v728, %v1007
          %v1037 = vadd.f32 %v730, %v1011
          %v1038 = vadd.f32 %v841, %v1015
          %v1039 = vadd.f32 %v843, %v1019
          %v1040 = vadd.f32 %v734, %v1007
          %v1041 = vadd.f32 %v736, %v1011
          %v1042 = vadd.f32 %v847, %v1015
          %v1043 = vadd.f32 %v849, %v1019
          %v1044 = vadd.f32 %v738, %v1007
          %v1045 = vadd.f32 %v740, %v1011
          %v1046 = vadd.f32 %v851, %v1015
          %v1047 = vadd.f32 %v853, %v1019
          %v1048 = vadd.f32 %v744, %v1007
          %v1049 = vadd.f32 %v746, %v1011
          %v1050 = vadd.f32 %v857, %v1015
          %v1051 = vadd.f32 %v859, %v1019
          %v1052 = vadd.f32 %v748, %v1007
          %v1053 = vadd.f32 %v750, %v1011
          %v1054 = vadd.f32 %v861, %v1015
          %v1055 = vadd.f32 %v863, %v1019
          %v1056 = vadd.f32 %v754, %v1007
          %v1057 = vadd.f32 %v756, %v1011
          %v1058 = vadd.f32 %v867, %v1015
          %v1059 = vadd.f32 %v869, %v1019
          %v1060 = vadd.f32 %v758, %v1007
          %v1061 = vadd.f32 %v760, %v1011
          %v1062 = vadd.f32 %v871, %v1015
          %v1063 = vadd.f32 %v873, %v1019
          %v1064 = vadd.f32 %v764, %v1007
          %v1065 = vadd.f32 %v766, %v1011
          %v1066 = vadd.f32 %v877, %v1015
          %v1067 = vadd.f32 %v879, %v1019
          %v1068 = vadd.f32 %v768, %v1007
          %v1069 = vadd.f32 %v770, %v1011
          %v1070 = vadd.f32 %v881, %v1015
          %v1071 = vadd.f32 %v883, %v1019
          %v1072 = vadd.f32 %v774, %v1007
          %v1073 = vadd.f32 %v776, %v1011
          %v1074 = vadd.f32 %v887, %v1015
          %v1075 = vadd.f32 %v889, %v1019
          %v1076 = vadd.f32 %v778, %v1007
          %v1077 = vadd.f32 %v780, %v1011
          %v1078 = vadd.f32 %v891, %v1015
          %v1079 = vadd.f32 %v893, %v1019
          %v1080 = vadd.f32 %v784, %v1007
          %v1081 = vadd.f32 %v786, %v1011
          %v1082 = vadd.f32 %v897, %v1015
          %v1083 = vadd.f32 %v899, %v1019
          %v1084 = vadd.f32 %v788, %v1007
          %v1085 = vadd.f32 %v790, %v1011
          %v1086 = vadd.f32 %v901, %v1015
          %v1087 = vadd.f32 %v903, %v1019
          %v1088 = vxor.u32 %v1024, 2147483648
          %v1089 = vxor.u32 %v1025, 2147483648
          %v1090 = vxor.u32 %v1026, 2147483648
          %v1091 = vxor.u32 %v1027, 2147483648
          %v1092 = vxor.u32 %v1028, 2147483648
          %v1093 = vxor.u32 %v1029, 2147483648
          %v1094 = vxor.u32 %v1030, 2147483648
          %v1095 = vxor.u32 %v1031, 2147483648
          %v1096 = vxor.u32 %v1032, 2147483648
          %v1097 = vxor.u32 %v1033, 2147483648
          %v1098 = vxor.u32 %v1034, 2147483648
          %v1099 = vxor.u32 %v1035, 2147483648
          %v1100 = vxor.u32 %v1036, 2147483648
          %v1101 = vxor.u32 %v1037, 2147483648
          %v1102 = vxor.u32 %v1038, 2147483648
          %v1103 = vxor.u32 %v1039, 2147483648
          %v1104 = vxor.u32 %v1040, 2147483648
          %v1105 = vxor.u32 %v1041, 2147483648
          %v1106 = vxor.u32 %v1042, 2147483648
          %v1107 = vxor.u32 %v1043, 2147483648
          %v1108 = vxor.u32 %v1044, 2147483648
          %v1109 = vxor.u32 %v1045, 2147483648
          %v1110 = vxor.u32 %v1046, 2147483648
          %v1111 = vxor.u32 %v1047, 2147483648
          %v1112 = vxor.u32 %v1048, 2147483648
          %v1113 = vxor.u32 %v1049, 2147483648
          %v1114 = vxor.u32 %v1050, 2147483648
          %v1115 = vxor.u32 %v1051, 2147483648
          %v1116 = vxor.u32 %v1052, 2147483648
          %v1117 = vxor.u32 %v1053, 2147483648
          %v1118 = vxor.u32 %v1054, 2147483648
          %v1119 = vxor.u32 %v1055, 2147483648
          %v1120 = vxor.u32 %v1056, 2147483648
          %v1121 = vxor.u32 %v1057, 2147483648
          %v1122 = vxor.u32 %v1058, 2147483648
          %v1123 = vxor.u32 %v1059, 2147483648
          %v1124 = vxor.u32 %v1060, 2147483648
          %v1125 = vxor.u32 %v1061, 2147483648
          %v1126 = vxor.u32 %v1062, 2147483648
          %v1127 = vxor.u32 %v1063, 2147483648
          %v1128 = vxor.u32 %v1064, 2147483648
          %v1129 = vxor.u32 %v1065, 2147483648
          %v1130 = vxor.u32 %v1066, 2147483648
          %v1131 = vxor.u32 %v1067, 2147483648
          %v1132 = vxor.u32 %v1068, 2147483648
          %v1133 = vxor.u32 %v1069, 2147483648
          %v1134 = vxor.u32 %v1070, 2147483648
          %v1135 = vxor.u32 %v1071, 2147483648
          %v1136 = vxor.u32 %v1072, 2147483648
          %v1137 = vxor.u32 %v1073, 2147483648
          %v1138 = vxor.u32 %v1074, 2147483648
          %v1139 = vxor.u32 %v1075, 2147483648
          %v1140 = vxor.u32 %v1076, 2147483648
          %v1141 = vxor.u32 %v1077, 2147483648
          %v1142 = vxor.u32 %v1078, 2147483648
          %v1143 = vxor.u32 %v1079, 2147483648
          %v1144 = vxor.u32 %v1080, 2147483648
          %v1145 = vxor.u32 %v1081, 2147483648
          %v1146 = vxor.u32 %v1082, 2147483648
          %v1147 = vxor.u32 %v1083, 2147483648
          %v1148 = vxor.u32 %v1084, 2147483648
          %v1149 = vxor.u32 %v1085, 2147483648
          %v1150 = vxor.u32 %v1086, 2147483648
          %v1151 = vxor.u32 %v1087, 2147483648
          %v1152 = vmul.f32 %v1088, 1.442695
          %v1153 = vpow.pop %v1152
          %v1154 = vmul.f32 %v1089, 1.442695
          %v1155 = vpow.pop %v1154
          %v1156 = vmul.f32 %v1090, 1.442695
          %v1157 = vpow.pop %v1156
          %v1158 = vmul.f32 %v1091, 1.442695
          %v1159 = vpow.pop %v1158
          %v1160 = vmul.f32 %v1092, 1.442695
          %v1161 = vpow.pop %v1160
          %v1162 = vmul.f32 %v1093, 1.442695
          %v1163 = vpow.pop %v1162
          %v1164 = vmul.f32 %v1094, 1.442695
          %v1165 = vpow.pop %v1164
          %v1166 = vmul.f32 %v1095, 1.442695
          %v1167 = vpow.pop %v1166
          %v1168 = vmul.f32 %v1096, 1.442695
          %v1169 = vpow.pop %v1168
          %v1170 = vmul.f32 %v1097, 1.442695
          %v1171 = vpow.pop %v1170
          %v1172 = vmul.f32 %v1098, 1.442695
          %v1173 = vpow.pop %v1172
          %v1174 = vmul.f32 %v1099, 1.442695
          %v1175 = vpow.pop %v1174
          %v1176 = vmul.f32 %v1100, 1.442695
          %v1177 = vpow.pop %v1176
          %v1178 = vmul.f32 %v1101, 1.442695
          %v1179 = vpow.pop %v1178
          %v1180 = vmul.f32 %v1102, 1.442695
          %v1181 = vpow.pop %v1180
          %v1182 = vmul.f32 %v1103, 1.442695
          %v1183 = vpow.pop %v1182
          %v1184 = vmul.f32 %v1104, 1.442695
          %v1185 = vpow.pop %v1184
          %v1186 = vmul.f32 %v1105, 1.442695
          %v1187 = vpow.pop %v1186
          %v1188 = vmul.f32 %v1106, 1.442695
          %v1189 = vpow.pop %v1188
          %v1190 = vmul.f32 %v1107, 1.442695
          %v1191 = vpow.pop %v1190
          %v1192 = vmul.f32 %v1108, 1.442695
          %v1193 = vpow.pop %v1192
          %v1194 = vmul.f32 %v1109, 1.442695
          %v1195 = vpow.pop %v1194
          %v1196 = vmul.f32 %v1110, 1.442695
          %v1197 = vpow.pop %v1196
          %v1198 = vmul.f32 %v1111, 1.442695
          %v1199 = vpow.pop %v1198
          %v1200 = vmul.f32 %v1112, 1.442695
          %v1201 = vpow.pop %v1200
          %v1202 = vmul.f32 %v1113, 1.442695
          %v1203 = vpow.pop %v1202
          %v1204 = vmul.f32 %v1114, 1.442695
          %v1205 = vpow.pop %v1204
          %v1206 = vmul.f32 %v1115, 1.442695
          %v1207 = vpow.pop %v1206
          %v1208 = vmul.f32 %v1116, 1.442695
          %v1209 = vpow.pop %v1208
          %v1210 = vmul.f32 %v1117, 1.442695
          %v1211 = vpow.pop %v1210
          %v1212 = vmul.f32 %v1118, 1.442695
          %v1213 = vpow.pop %v1212
          %v1214 = vmul.f32 %v1119, 1.442695
          %v1215 = vpow.pop %v1214
          %v1216 = vmul.f32 %v1120, 1.442695
          %v1217 = vpow.pop %v1216
          %v1218 = vmul.f32 %v1121, 1.442695
          %v1219 = vpow.pop %v1218
          %v1220 = vmul.f32 %v1122, 1.442695
          %v1221 = vpow.pop %v1220
          %v1222 = vmul.f32 %v1123, 1.442695
          %v1223 = vpow.pop %v1222
          %v1224 = vmul.f32 %v1124, 1.442695
          %v1225 = vpow.pop %v1224
          %v1226 = vmul.f32 %v1125, 1.442695
          %v1227 = vpow.pop %v1226
          %v1228 = vmul.f32 %v1126, 1.442695
          %v1229 = vpow.pop %v1228
          %v1230 = vmul.f32 %v1127, 1.442695
          %v1231 = vpow.pop %v1230
          %v1232 = vmul.f32 %v1128, 1.442695
          %v1233 = vpow.pop %v1232
          %v1234 = vmul.f32 %v1129, 1.442695
          %v1235 = vpow.pop %v1234
          %v1236 = vmul.f32 %v1130, 1.442695
          %v1237 = vpow.pop %v1236
          %v1238 = vmul.f32 %v1131, 1.442695
          %v1239 = vpow.pop %v1238
          %v1240 = vmul.f32 %v1132, 1.442695
          %v1241 = vpow.pop %v1240
          %v1242 = vmul.f32 %v1133, 1.442695
          %v1243 = vpow.pop %v1242
          %v1244 = vmul.f32 %v1134, 1.442695
          %v1245 = vpow.pop %v1244
          %v1246 = vmul.f32 %v1135, 1.442695
          %v1247 = vpow.pop %v1246
          %v1248 = vmul.f32 %v1136, 1.442695
          %v1249 = vpow.pop %v1248
          %v1250 = vmul.f32 %v1137, 1.442695
          %v1251 = vpow.pop %v1250
          %v1252 = vmul.f32 %v1138, 1.442695
          %v1253 = vpow.pop %v1252
          %v1254 = vmul.f32 %v1139, 1.442695
          %v1255 = vpow.pop %v1254
          %v1256 = vmul.f32 %v1140, 1.442695
          %v1257 = vpow.pop %v1256
          %v1258 = vmul.f32 %v1141, 1.442695
          %v1259 = vpow.pop %v1258
          %v1260 = vmul.f32 %v1142, 1.442695
          %v1261 = vpow.pop %v1260
          %v1262 = vmul.f32 %v1143, 1.442695
          %v1263 = vpow.pop %v1262
          %v1264 = vmul.f32 %v1144, 1.442695
          %v1265 = vpow.pop %v1264
          %v1266 = vmul.f32 %v1145, 1.442695
          %v1267 = vpow.pop %v1266
          %v1268 = vmul.f32 %v1146, 1.442695
          %v1269 = vpow.pop %v1268
          %v1270 = vmul.f32 %v1147, 1.442695
          %v1271 = vpow.pop %v1270
          %v1272 = vmul.f32 %v1148, 1.442695
          %v1273 = vpow.pop %v1272
          %v1274 = vmul.f32 %v1149, 1.442695
          %v1275 = vpow.pop %v1274
          %v1276 = vmul.f32 %v1150, 1.442695
          %v1277 = vpow.pop %v1276
          %v1278 = vmul.f32 %v1151, 1.442695
          %v1279 = vpow.pop %v1278
          %v1280 = vadd.f32 %v1153, 1.0
          %v1281 = vadd.f32 %v1155, 1.0
          %v1282 = vadd.f32 %v1157, 1.0
          %v1283 = vadd.f32 %v1159, 1.0
          %v1284 = vadd.f32 %v1161, 1.0
          %v1285 = vadd.f32 %v1163, 1.0
          %v1286 = vadd.f32 %v1165, 1.0
          %v1287 = vadd.f32 %v1167, 1.0
          %v1288 = vadd.f32 %v1169, 1.0
          %v1289 = vadd.f32 %v1171, 1.0
          %v1290 = vadd.f32 %v1173, 1.0
          %v1291 = vadd.f32 %v1175, 1.0
          %v1292 = vadd.f32 %v1177, 1.0
          %v1293 = vadd.f32 %v1179, 1.0
          %v1294 = vadd.f32 %v1181, 1.0
          %v1295 = vadd.f32 %v1183, 1.0
          %v1296 = vadd.f32 %v1185, 1.0
          %v1297 = vadd.f32 %v1187, 1.0
          %v1298 = vadd.f32 %v1189, 1.0
          %v1299 = vadd.f32 %v1191, 1.0
          %v1300 = vadd.f32 %v1193, 1.0
          %v1301 = vadd.f32 %v1195, 1.0
          %v1302 = vadd.f32 %v1197, 1.0
          %v1303 = vadd.f32 %v1199, 1.0
          %v1304 = vadd.f32 %v1201, 1.0
          %v1305 = vadd.f32 %v1203, 1.0
          %v1306 = vadd.f32 %v1205, 1.0
          %v1307 = vadd.f32 %v1207, 1.0
          %v1308 = vadd.f32 %v1209, 1.0
          %v1309 = vadd.f32 %v1211, 1.0
          %v1310 = vadd.f32 %v1213, 1.0
          %v1311 = vadd.f32 %v1215, 1.0
          %v1312 = vadd.f32 %v1217, 1.0
          %v1313 = vadd.f32 %v1219, 1.0
          %v1314 = vadd.f32 %v1221, 1.0
          %v1315 = vadd.f32 %v1223, 1.0
          %v1316 = vadd.f32 %v1225, 1.0
          %v1317 = vadd.f32 %v1227, 1.0
          %v1318 = vadd.f32 %v1229, 1.0
          %v1319 = vadd.f32 %v1231, 1.0
          %v1320 = vadd.f32 %v1233, 1.0
          %v1321 = vadd.f32 %v1235, 1.0
          %v1322 = vadd.f32 %v1237, 1.0
          %v1323 = vadd.f32 %v1239, 1.0
          %v1324 = vadd.f32 %v1241, 1.0
          %v1325 = vadd.f32 %v1243, 1.0
          %v1326 = vadd.f32 %v1245, 1.0
          %v1327 = vadd.f32 %v1247, 1.0
          %v1328 = vadd.f32 %v1249, 1.0
          %v1329 = vadd.f32 %v1251, 1.0
          %v1330 = vadd.f32 %v1253, 1.0
          %v1331 = vadd.f32 %v1255, 1.0
          %v1332 = vadd.f32 %v1257, 1.0
          %v1333 = vadd.f32 %v1259, 1.0
          %v1334 = vadd.f32 %v1261, 1.0
          %v1335 = vadd.f32 %v1263, 1.0
          %v1336 = vadd.f32 %v1265, 1.0
          %v1337 = vadd.f32 %v1267, 1.0
          %v1338 = vadd.f32 %v1269, 1.0
          %v1339 = vadd.f32 %v1271, 1.0
          %v1340 = vadd.f32 %v1273, 1.0
          %v1341 = vadd.f32 %v1275, 1.0
          %v1342 = vadd.f32 %v1277, 1.0
          %v1343 = vadd.f32 %v1279, 1.0
          %v1344 = vrcp.pop %v1280
          %v1345 = vmul.f32 1.0, %v1344
          %v1346 = vrcp.pop %v1281
          %v1347 = vmul.f32 1.0, %v1346
          %v1348 = vrcp.pop %v1282
          %v1349 = vmul.f32 1.0, %v1348
          %v1350 = vrcp.pop %v1283
          %v1351 = vmul.f32 1.0, %v1350
          %v1352 = vrcp.pop %v1284
          %v1353 = vmul.f32 1.0, %v1352
          %v1354 = vrcp.pop %v1285
          %v1355 = vmul.f32 1.0, %v1354
          %v1356 = vrcp.pop %v1286
          %v1357 = vmul.f32 1.0, %v1356
          %v1358 = vrcp.pop %v1287
          %v1359 = vmul.f32 1.0, %v1358
          %v1360 = vrcp.pop %v1288
          %v1361 = vmul.f32 1.0, %v1360
          %v1362 = vrcp.pop %v1289
          %v1363 = vmul.f32 1.0, %v1362
          %v1364 = vrcp.pop %v1290
          %v1365 = vmul.f32 1.0, %v1364
          %v1366 = vrcp.pop %v1291
          %v1367 = vmul.f32 1.0, %v1366
          %v1368 = vrcp.pop %v1292
          %v1369 = vmul.f32 1.0, %v1368
          %v1370 = vrcp.pop %v1293
          %v1371 = vmul.f32 1.0, %v1370
          %v1372 = vrcp.pop %v1294
          %v1373 = vmul.f32 1.0, %v1372
          %v1374 = vrcp.pop %v1295
          %v1375 = vmul.f32 1.0, %v1374
          %v1376 = vrcp.pop %v1296
          %v1377 = vmul.f32 1.0, %v1376
          %v1378 = vrcp.pop %v1297
          %v1379 = vmul.f32 1.0, %v1378
          %v1380 = vrcp.pop %v1298
          %v1381 = vmul.f32 1.0, %v1380
          %v1382 = vrcp.pop %v1299
          %v1383 = vmul.f32 1.0, %v1382
          %v1384 = vrcp.pop %v1300
          %v1385 = vmul.f32 1.0, %v1384
          %v1386 = vrcp.pop %v1301
          %v1387 = vmul.f32 1.0, %v1386
          %v1388 = vrcp.pop %v1302
          %v1389 = vmul.f32 1.0, %v1388
          %v1390 = vrcp.pop %v1303
          %v1391 = vmul.f32 1.0, %v1390
          %v1392 = vrcp.pop %v1304
          %v1393 = vmul.f32 1.0, %v1392
          %v1394 = vrcp.pop %v1305
          %v1395 = vmul.f32 1.0, %v1394
          %v1396 = vrcp.pop %v1306
          %v1397 = vmul.f32 1.0, %v1396
          %v1398 = vrcp.pop %v1307
          %v1399 = vmul.f32 1.0, %v1398
          %v1400 = vrcp.pop %v1308
          %v1401 = vmul.f32 1.0, %v1400
          %v1402 = vrcp.pop %v1309
          %v1403 = vmul.f32 1.0, %v1402
          %v1404 = vrcp.pop %v1310
          %v1405 = vmul.f32 1.0, %v1404
          %v1406 = vrcp.pop %v1311
          %v1407 = vmul.f32 1.0, %v1406
          %v1408 = vrcp.pop %v1312
          %v1409 = vmul.f32 1.0, %v1408
          %v1410 = vrcp.pop %v1313
          %v1411 = vmul.f32 1.0, %v1410
          %v1412 = vrcp.pop %v1314
          %v1413 = vmul.f32 1.0, %v1412
          %v1414 = vrcp.pop %v1315
          %v1415 = vmul.f32 1.0, %v1414
          %v1416 = vrcp.pop %v1316
          %v1417 = vmul.f32 1.0, %v1416
          %v1418 = vrcp.pop %v1317
          %v1419 = vmul.f32 1.0, %v1418
          %v1420 = vrcp.pop %v1318
          %v1421 = vmul.f32 1.0, %v1420
          %v1422 = vrcp.pop %v1319
          %v1423 = vmul.f32 1.0, %v1422
          %v1424 = vrcp.pop %v1320
          %v1425 = vmul.f32 1.0, %v1424
          %v1426 = vrcp.pop %v1321
          %v1427 = vmul.f32 1.0, %v1426
          %v1428 = vrcp.pop %v1322
          %v1429 = vmul.f32 1.0, %v1428
          %v1430 = vrcp.pop %v1323
          %v1431 = vmul.f32 1.0, %v1430
          %v1432 = vrcp.pop %v1324
          %v1433 = vmul.f32 1.0, %v1432
          %v1434 = vrcp.pop %v1325
          %v1435 = vmul.f32 1.0, %v1434
          %v1436 = vrcp.pop %v1326
          %v1437 = vmul.f32 1.0, %v1436
          %v1438 = vrcp.pop %v1327
          %v1439 = vmul.f32 1.0, %v1438
          %v1440 = vrcp.pop %v1328
          %v1441 = vmul.f32 1.0, %v1440
          %v1442 = vrcp.pop %v1329
          %v1443 = vmul.f32 1.0, %v1442
          %v1444 = vrcp.pop %v1330
          %v1445 = vmul.f32 1.0, %v1444
          %v1446 = vrcp.pop %v1331
          %v1447 = vmul.f32 1.0, %v1446
          %v1448 = vrcp.pop %v1332
          %v1449 = vmul.f32 1.0, %v1448
          %v1450 = vrcp.pop %v1333
          %v1451 = vmul.f32 1.0, %v1450
          %v1452 = vrcp.pop %v1334
          %v1453 = vmul.f32 1.0, %v1452
          %v1454 = vrcp.pop %v1335
          %v1455 = vmul.f32 1.0, %v1454
          %v1456 = vrcp.pop %v1336
          %v1457 = vmul.f32 1.0, %v1456
          %v1458 = vrcp.pop %v1337
          %v1459 = vmul.f32 1.0, %v1458
          %v1460 = vrcp.pop %v1338
          %v1461 = vmul.f32 1.0, %v1460
          %v1462 = vrcp.pop %v1339
          %v1463 = vmul.f32 1.0, %v1462
          %v1464 = vrcp.pop %v1340
          %v1465 = vmul.f32 1.0, %v1464
          %v1466 = vrcp.pop %v1341
          %v1467 = vmul.f32 1.0, %v1466
          %v1468 = vrcp.pop %v1342
          %v1469 = vmul.f32 1.0, %v1468
          %v1470 = vrcp.pop %v1343
          %v1471 = vmul.f32 1.0, %v1470
          %v1472 = vmul.f32 %v1024, %v1345
          %v1473 = vmul.f32 %v1025, %v1347
          %v1474 = vmul.f32 %v1026, %v1349
          %v1475 = vmul.f32 %v1027, %v1351
          %v1476 = vmul.f32 %v1028, %v1353
          %v1477 = vmul.f32 %v1029, %v1355
          %v1478 = vmul.f32 %v1030, %v1357
          %v1479 = vmul.f32 %v1031, %v1359
          %v1480 = vmul.f32 %v1032, %v1361
          %v1481 = vmul.f32 %v1033, %v1363
          %v1482 = vmul.f32 %v1034, %v1365
          %v1483 = vmul.f32 %v1035, %v1367
          %v1484 = vmul.f32 %v1036, %v1369
          %v1485 = vmul.f32 %v1037, %v1371
          %v1486 = vmul.f32 %v1038, %v1373
          %v1487 = vmul.f32 %v1039, %v1375
          %v1488 = vmul.f32 %v1040, %v1377
          %v1489 = vmul.f32 %v1041, %v1379
          %v1490 = vmul.f32 %v1042, %v1381
          %v1491 = vmul.f32 %v1043, %v1383
          %v1492 = vmul.f32 %v1044, %v1385
          %v1493 = vmul.f32 %v1045, %v1387
          %v1494 = vmul.f32 %v1046, %v1389
          %v1495 = vmul.f32 %v1047, %v1391
          %v1496 = vmul.f32 %v1048, %v1393
          %v1497 = vmul.f32 %v1049, %v1395
          %v1498 = vmul.f32 %v1050, %v1397
          %v1499 = vmul.f32 %v1051, %v1399
          %v1500 = vmul.f32 %v1052, %v1401
          %v1501 = vmul.f32 %v1053, %v1403
          %v1502 = vmul.f32 %v1054, %v1405
          %v1503 = vmul.f32 %v1055, %v1407
          %v1504 = vmul.f32 %v1056, %v1409
          %v1505 = vmul.f32 %v1057, %v1411
          %v1506 = vmul.f32 %v1058, %v1413
          %v1507 = vmul.f32 %v1059, %v1415
          %v1508 = vmul.f32 %v1060, %v1417
          %v1509 = vmul.f32 %v1061, %v1419
          %v1510 = vmul.f32 %v1062, %v1421
          %v1511 = vmul.f32 %v1063, %v1423
          %v1512 = vmul.f32 %v1064, %v1425
          %v1513 = vmul.f32 %v1065, %v1427
          %v1514 = vmul.f32 %v1066, %v1429
          %v1515 = vmul.f32 %v1067, %v1431
          %v1516 = vmul.f32 %v1068, %v1433
          %v1517 = vmul.f32 %v1069, %v1435
          %v1518 = vmul.f32 %v1070, %v1437
          %v1519 = vmul.f32 %v1071, %v1439
          %v1520 = vmul.f32 %v1072, %v1441
          %v1521 = vmul.f32 %v1073, %v1443
          %v1522 = vmul.f32 %v1074, %v1445
          %v1523 = vmul.f32 %v1075, %v1447
          %v1524 = vmul.f32 %v1076, %v1449
          %v1525 = vmul.f32 %v1077, %v1451
          %v1526 = vmul.f32 %v1078, %v1453
          %v1527 = vmul.f32 %v1079, %v1455
          %v1528 = vmul.f32 %v1080, %v1457
          %v1529 = vmul.f32 %v1081, %v1459
          %v1530 = vmul.f32 %v1082, %v1461
          %v1531 = vmul.f32 %v1083, %v1463
          %v1532 = vmul.f32 %v1084, %v1465
          %v1533 = vmul.f32 %v1085, %v1467
          %v1534 = vmul.f32 %v1086, %v1469
          %v1535 = vmul.f32 %v1087, %v1471
          %v1536 = vadd.f32 %v1472, %v1473
          %v1537 = vadd.f32 %v1536, %v1474
          %v1538 = vadd.f32 %v1537, %v1475
          %1539 = vadd.xlane.f32.xlu0 %v1538
          %v1540 = vpop.xlane.xlu0 %1539
          %v1541 = vadd.f32 %v1476, %v1477
          %v1542 = vadd.f32 %v1541, %v1478
          %v1543 = vadd.f32 %v1542, %v1479
          %1544 = vadd.xlane.f32.xlu0 %v1543
          %v1545 = vpop.xlane.xlu0 %1544
          %v1546 = vadd.f32 %v1480, %v1481
          %v1547 = vadd.f32 %v1546, %v1482
          %v1548 = vadd.f32 %v1547, %v1483
          %1549 = vadd.xlane.f32.xlu0 %v1548
          %v1550 = vpop.xlane.xlu0 %1549
          %v1551 = vadd.f32 %v1484, %v1485
          %v1552 = vadd.f32 %v1551, %v1486
          %v1553 = vadd.f32 %v1552, %v1487
          %1554 = vadd.xlane.f32.xlu0 %v1553
          %v1555 = vpop.xlane.xlu0 %1554
          %v1556 = vadd.f32 %v1488, %v1489
          %v1557 = vadd.f32 %v1556, %v1490
          %v1558 = vadd.f32 %v1557, %v1491
          %1559 = vadd.xlane.f32.xlu0 %v1558
          %v1560 = vpop.xlane.xlu0 %1559
          %v1561 = vadd.f32 %v1492, %v1493
          %v1562 = vadd.f32 %v1561, %v1494
          %v1563 = vadd.f32 %v1562, %v1495
          %1564 = vadd.xlane.f32.xlu0 %v1563
          %v1565 = vpop.xlane.xlu0 %1564
          %v1566 = vadd.f32 %v1496, %v1497
          %v1567 = vadd.f32 %v1566, %v1498
          %v1568 = vadd.f32 %v1567, %v1499
          %1569 = vadd.xlane.f32.xlu0 %v1568
          %v1570 = vpop.xlane.xlu0 %1569
          %v1571 = vadd.f32 %v1500, %v1501
          %v1572 = vadd.f32 %v1571, %v1502
          %v1573 = vadd.f32 %v1572, %v1503
          %1574 = vadd.xlane.f32.xlu0 %v1573
          %v1575 = vpop.xlane.xlu0 %1574
          %v1576 = vadd.f32 %v1504, %v1505
          %v1577 = vadd.f32 %v1576, %v1506
          %v1578 = vadd.f32 %v1577, %v1507
          %1579 = vadd.xlane.f32.xlu0 %v1578
          %v1580 = vpop.xlane.xlu0 %1579
          %v1581 = vadd.f32 %v1508, %v1509
          %v1582 = vadd.f32 %v1581, %v1510
          %v1583 = vadd.f32 %v1582, %v1511
          %1584 = vadd.xlane.f32.xlu0 %v1583
          %v1585 = vpop.xlane.xlu0 %1584
          %v1586 = vadd.f32 %v1512, %v1513
          %v1587 = vadd.f32 %v1586, %v1514
          %v1588 = vadd.f32 %v1587, %v1515
          %1589 = vadd.xlane.f32.xlu0 %v1588
          %v1590 = vpop.xlane.xlu0 %1589
          %v1591 = vadd.f32 %v1516, %v1517
          %v1592 = vadd.f32 %v1591, %v1518
          %v1593 = vadd.f32 %v1592, %v1519
          %1594 = vadd.xlane.f32.xlu0 %v1593
          %v1595 = vpop.xlane.xlu0 %1594
          %v1596 = vadd.f32 %v1520, %v1521
          %v1597 = vadd.f32 %v1596, %v1522
          %v1598 = vadd.f32 %v1597, %v1523
          %1599 = vadd.xlane.f32.xlu0 %v1598
          %v1600 = vpop.xlane.xlu0 %1599
          %v1601 = vadd.f32 %v1524, %v1525
          %v1602 = vadd.f32 %v1601, %v1526
          %v1603 = vadd.f32 %v1602, %v1527
          %1604 = vadd.xlane.f32.xlu0 %v1603
          %v1605 = vpop.xlane.xlu0 %1604
          %v1606 = vadd.f32 %v1528, %v1529
          %v1607 = vadd.f32 %v1606, %v1530
          %v1608 = vadd.f32 %v1607, %v1531
          %1609 = vadd.xlane.f32.xlu0 %v1608
          %v1610 = vpop.xlane.xlu0 %1609
          %v1611 = vadd.f32 %v1532, %v1533
          %v1612 = vadd.f32 %v1611, %v1534
          %v1613 = vadd.f32 %v1612, %v1535
          %1614 = vadd.xlane.f32.xlu0 %v1613
          %v1615 = vpop.xlane.xlu0 %1614
          %v1616 = vrcp.pop 512.0
          %v1617 = vmul.f32 %v1540, %v1616
          %v1618 = vmul.f32 %v1545, %v1616
          %v1619 = vmul.f32 %v1550, %v1616
          %v1620 = vmul.f32 %v1555, %v1616
          %v1621 = vmul.f32 %v1560, %v1616
          %v1622 = vmul.f32 %v1565, %v1616
          %v1623 = vmul.f32 %v1570, %v1616
          %v1624 = vmul.f32 %v1575, %v1616
          %v1625 = vmul.f32 %v1580, %v1616
          %v1626 = vmul.f32 %v1585, %v1616
          %v1627 = vmul.f32 %v1590, %v1616
          %v1628 = vmul.f32 %v1595, %v1616
          %v1629 = vmul.f32 %v1600, %v1616
          %v1630 = vmul.f32 %v1605, %v1616
          %v1631 = vmul.f32 %v1610, %v1616
          %v1632 = vmul.f32 %v1615, %v1616
          %v1633 = vmul.f32 %v1472, %v1472
          %v1634 = vmul.f32 %v1473, %v1473
          %v1635 = vmul.f32 %v1474, %v1474
          %v1636 = vmul.f32 %v1475, %v1475
          %v1637 = vmul.f32 %v1476, %v1476
          %v1638 = vmul.f32 %v1477, %v1477
          %v1639 = vmul.f32 %v1478, %v1478
          %v1640 = vmul.f32 %v1479, %v1479
          %v1641 = vmul.f32 %v1480, %v1480
          %v1642 = vmul.f32 %v1481, %v1481
          %v1643 = vmul.f32 %v1482, %v1482
          %v1644 = vmul.f32 %v1483, %v1483
          %v1645 = vmul.f32 %v1484, %v1484
          %v1646 = vmul.f32 %v1485, %v1485
          %v1647 = vmul.f32 %v1486, %v1486
          %v1648 = vmul.f32 %v1487, %v1487
          %v1649 = vmul.f32 %v1488, %v1488
          %v1650 = vmul.f32 %v1489, %v1489
          %v1651 = vmul.f32 %v1490, %v1490
          %v1652 = vmul.f32 %v1491, %v1491
          %v1653 = vmul.f32 %v1492, %v1492
          %v1654 = vmul.f32 %v1493, %v1493
          %v1655 = vmul.f32 %v1494, %v1494
          %v1656 = vmul.f32 %v1495, %v1495
          %v1657 = vmul.f32 %v1496, %v1496
          %v1658 = vmul.f32 %v1497, %v1497
          %v1659 = vmul.f32 %v1498, %v1498
          %v1660 = vmul.f32 %v1499, %v1499
          %v1661 = vmul.f32 %v1500, %v1500
          %v1662 = vmul.f32 %v1501, %v1501
          %v1663 = vmul.f32 %v1502, %v1502
          %v1664 = vmul.f32 %v1503, %v1503
          %v1665 = vmul.f32 %v1504, %v1504
          %v1666 = vmul.f32 %v1505, %v1505
          %v1667 = vmul.f32 %v1506, %v1506
          %v1668 = vmul.f32 %v1507, %v1507
          %v1669 = vmul.f32 %v1508, %v1508
          %v1670 = vmul.f32 %v1509, %v1509
          %v1671 = vmul.f32 %v1510, %v1510
          %v1672 = vmul.f32 %v1511, %v1511
          %v1673 = vmul.f32 %v1512, %v1512
          %v1674 = vmul.f32 %v1513, %v1513
          %v1675 = vmul.f32 %v1514, %v1514
          %v1676 = vmul.f32 %v1515, %v1515
          %v1677 = vmul.f32 %v1516, %v1516
          %v1678 = vmul.f32 %v1517, %v1517
          %v1679 = vmul.f32 %v1518, %v1518
          %v1680 = vmul.f32 %v1519, %v1519
          %v1681 = vmul.f32 %v1520, %v1520
          %v1682 = vmul.f32 %v1521, %v1521
          %v1683 = vmul.f32 %v1522, %v1522
          %v1684 = vmul.f32 %v1523, %v1523
          %v1685 = vmul.f32 %v1524, %v1524
          %v1686 = vmul.f32 %v1525, %v1525
          %v1687 = vmul.f32 %v1526, %v1526
          %v1688 = vmul.f32 %v1527, %v1527
          %v1689 = vmul.f32 %v1528, %v1528
          %v1690 = vmul.f32 %v1529, %v1529
          %v1691 = vmul.f32 %v1530, %v1530
          %v1692 = vmul.f32 %v1531, %v1531
          %v1693 = vmul.f32 %v1532, %v1532
          %v1694 = vmul.f32 %v1533, %v1533
          %v1695 = vmul.f32 %v1534, %v1534
          %v1696 = vmul.f32 %v1535, %v1535
          %v1697 = vadd.f32 %v1633, %v1634
          %v1698 = vadd.f32 %v1697, %v1635
          %v1699 = vadd.f32 %v1698, %v1636
          %1700 = vadd.xlane.f32.xlu0 %v1699
          %v1701 = vpop.xlane.xlu0 %1700
          %v1702 = vadd.f32 %v1637, %v1638
          %v1703 = vadd.f32 %v1702, %v1639
          %v1704 = vadd.f32 %v1703, %v1640
          %1705 = vadd.xlane.f32.xlu0 %v1704
          %v1706 = vpop.xlane.xlu0 %1705
          %v1707 = vadd.f32 %v1641, %v1642
          %v1708 = vadd.f32 %v1707, %v1643
          %v1709 = vadd.f32 %v1708, %v1644
          %1710 = vadd.xlane.f32.xlu0 %v1709
          %v1711 = vpop.xlane.xlu0 %1710
          %v1712 = vadd.f32 %v1645, %v1646
          %v1713 = vadd.f32 %v1712, %v1647
          %v1714 = vadd.f32 %v1713, %v1648
          %1715 = vadd.xlane.f32.xlu0 %v1714
          %v1716 = vpop.xlane.xlu0 %1715
          %v1717 = vadd.f32 %v1649, %v1650
          %v1718 = vadd.f32 %v1717, %v1651
          %v1719 = vadd.f32 %v1718, %v1652
          %1720 = vadd.xlane.f32.xlu0 %v1719
          %v1721 = vpop.xlane.xlu0 %1720
          %v1722 = vadd.f32 %v1653, %v1654
          %v1723 = vadd.f32 %v1722, %v1655
          %v1724 = vadd.f32 %v1723, %v1656
          %1725 = vadd.xlane.f32.xlu0 %v1724
          %v1726 = vpop.xlane.xlu0 %1725
          %v1727 = vadd.f32 %v1657, %v1658
          %v1728 = vadd.f32 %v1727, %v1659
          %v1729 = vadd.f32 %v1728, %v1660
          %1730 = vadd.xlane.f32.xlu0 %v1729
          %v1731 = vpop.xlane.xlu0 %1730
          %v1732 = vadd.f32 %v1661, %v1662
          %v1733 = vadd.f32 %v1732, %v1663
          %v1734 = vadd.f32 %v1733, %v1664
          %1735 = vadd.xlane.f32.xlu0 %v1734
          %v1736 = vpop.xlane.xlu0 %1735
          %v1737 = vadd.f32 %v1665, %v1666
          %v1738 = vadd.f32 %v1737, %v1667
          %v1739 = vadd.f32 %v1738, %v1668
          %1740 = vadd.xlane.f32.xlu0 %v1739
          %v1741 = vpop.xlane.xlu0 %1740
          %v1742 = vadd.f32 %v1669, %v1670
          %v1743 = vadd.f32 %v1742, %v1671
          %v1744 = vadd.f32 %v1743, %v1672
          %1745 = vadd.xlane.f32.xlu0 %v1744
          %v1746 = vpop.xlane.xlu0 %1745
          %v1747 = vadd.f32 %v1673, %v1674
          %v1748 = vadd.f32 %v1747, %v1675
          %v1749 = vadd.f32 %v1748, %v1676
          %1750 = vadd.xlane.f32.xlu0 %v1749
          %v1751 = vpop.xlane.xlu0 %1750
          %v1752 = vadd.f32 %v1677, %v1678
          %v1753 = vadd.f32 %v1752, %v1679
          %v1754 = vadd.f32 %v1753, %v1680
          %1755 = vadd.xlane.f32.xlu0 %v1754
          %v1756 = vpop.xlane.xlu0 %1755
          %v1757 = vadd.f32 %v1681, %v1682
          %v1758 = vadd.f32 %v1757, %v1683
          %v1759 = vadd.f32 %v1758, %v1684
          %1760 = vadd.xlane.f32.xlu0 %v1759
          %v1761 = vpop.xlane.xlu0 %1760
          %v1762 = vadd.f32 %v1685, %v1686
          %v1763 = vadd.f32 %v1762, %v1687
          %v1764 = vadd.f32 %v1763, %v1688
          %1765 = vadd.xlane.f32.xlu0 %v1764
          %v1766 = vpop.xlane.xlu0 %1765
          %v1767 = vadd.f32 %v1689, %v1690
          %v1768 = vadd.f32 %v1767, %v1691
          %v1769 = vadd.f32 %v1768, %v1692
          %1770 = vadd.xlane.f32.xlu0 %v1769
          %v1771 = vpop.xlane.xlu0 %1770
          %v1772 = vadd.f32 %v1693, %v1694
          %v1773 = vadd.f32 %v1772, %v1695
          %v1774 = vadd.f32 %v1773, %v1696
          %1775 = vadd.xlane.f32.xlu0 %v1774
          %v1776 = vpop.xlane.xlu0 %1775
          %v1777 = vmul.f32 %v1701, %v1616
          %v1778 = vmul.f32 %v1706, %v1616
          %v1779 = vmul.f32 %v1711, %v1616
          %v1780 = vmul.f32 %v1716, %v1616
          %v1781 = vmul.f32 %v1721, %v1616
          %v1782 = vmul.f32 %v1726, %v1616
          %v1783 = vmul.f32 %v1731, %v1616
          %v1784 = vmul.f32 %v1736, %v1616
          %v1785 = vmul.f32 %v1741, %v1616
          %v1786 = vmul.f32 %v1746, %v1616
          %v1787 = vmul.f32 %v1751, %v1616
          %v1788 = vmul.f32 %v1756, %v1616
          %v1789 = vmul.f32 %v1761, %v1616
          %v1790 = vmul.f32 %v1766, %v1616
          %v1791 = vmul.f32 %v1771, %v1616
          %v1792 = vmul.f32 %v1776, %v1616
          %v1793 = vmul.f32 %v1617, %v1617
          %v1794 = vmul.f32 %v1618, %v1618
          %v1795 = vmul.f32 %v1619, %v1619
          %v1796 = vmul.f32 %v1620, %v1620
          %v1797 = vmul.f32 %v1621, %v1621
          %v1798 = vmul.f32 %v1622, %v1622
          %v1799 = vmul.f32 %v1623, %v1623
          %v1800 = vmul.f32 %v1624, %v1624
          %v1801 = vmul.f32 %v1625, %v1625
          %v1802 = vmul.f32 %v1626, %v1626
          %v1803 = vmul.f32 %v1627, %v1627
          %v1804 = vmul.f32 %v1628, %v1628
          %v1805 = vmul.f32 %v1629, %v1629
          %v1806 = vmul.f32 %v1630, %v1630
          %v1807 = vmul.f32 %v1631, %v1631
          %v1808 = vmul.f32 %v1632, %v1632
          %v1809 = vsub.f32 %v1777, %v1793
          %v1810 = vsub.f32 %v1778, %v1794
          %v1811 = vsub.f32 %v1779, %v1795
          %v1812 = vsub.f32 %v1780, %v1796
          %v1813 = vsub.f32 %v1781, %v1797
          %v1814 = vsub.f32 %v1782, %v1798
          %v1815 = vsub.f32 %v1783, %v1799
          %v1816 = vsub.f32 %v1784, %v1800
          %v1817 = vsub.f32 %v1785, %v1801
          %v1818 = vsub.f32 %v1786, %v1802
          %v1819 = vsub.f32 %v1787, %v1803
          %v1820 = vsub.f32 %v1788, %v1804
          %v1821 = vsub.f32 %v1789, %v1805
          %v1822 = vsub.f32 %v1790, %v1806
          %v1823 = vsub.f32 %v1791, %v1807
          %v1824 = vsub.f32 %v1792, %v1808
          %v1825 = vmax.f32 %v1809, 0.0
          %v1826 = vmax.f32 %v1810, 0.0
          %v1827 = vmax.f32 %v1811, 0.0
          %v1828 = vmax.f32 %v1812, 0.0
          %v1829 = vmax.f32 %v1813, 0.0
          %v1830 = vmax.f32 %v1814, 0.0
          %v1831 = vmax.f32 %v1815, 0.0
          %v1832 = vmax.f32 %v1816, 0.0
          %v1833 = vmax.f32 %v1817, 0.0
          %v1834 = vmax.f32 %v1818, 0.0
          %v1835 = vmax.f32 %v1819, 0.0
          %v1836 = vmax.f32 %v1820, 0.0
          %v1837 = vmax.f32 %v1821, 0.0
          %v1838 = vmax.f32 %v1822, 0.0
          %v1839 = vmax.f32 %v1823, 0.0
          %v1840 = vmax.f32 %v1824, 0.0
          %v1841 = vsub.f32 %v1472, %v1617
          %v1842 = vsub.f32 %v1473, %v1617
          %v1843 = vsub.f32 %v1474, %v1617
          %v1844 = vsub.f32 %v1475, %v1617
          %v1845 = vsub.f32 %v1476, %v1618
          %v1846 = vsub.f32 %v1477, %v1618
          %v1847 = vsub.f32 %v1478, %v1618
          %v1848 = vsub.f32 %v1479, %v1618
          %v1849 = vsub.f32 %v1480, %v1619
          %v1850 = vsub.f32 %v1481, %v1619
          %v1851 = vsub.f32 %v1482, %v1619
          %v1852 = vsub.f32 %v1483, %v1619
          %v1853 = vsub.f32 %v1484, %v1620
          %v1854 = vsub.f32 %v1485, %v1620
          %v1855 = vsub.f32 %v1486, %v1620
          %v1856 = vsub.f32 %v1487, %v1620
          %v1857 = vsub.f32 %v1488, %v1621
          %v1858 = vsub.f32 %v1489, %v1621
          %v1859 = vsub.f32 %v1490, %v1621
          %v1860 = vsub.f32 %v1491, %v1621
          %v1861 = vsub.f32 %v1492, %v1622
          %v1862 = vsub.f32 %v1493, %v1622
          %v1863 = vsub.f32 %v1494, %v1622
          %v1864 = vsub.f32 %v1495, %v1622
          %v1865 = vsub.f32 %v1496, %v1623
          %v1866 = vsub.f32 %v1497, %v1623
          %v1867 = vsub.f32 %v1498, %v1623
          %v1868 = vsub.f32 %v1499, %v1623
          %v1869 = vsub.f32 %v1500, %v1624
          %v1870 = vsub.f32 %v1501, %v1624
          %v1871 = vsub.f32 %v1502, %v1624
          %v1872 = vsub.f32 %v1503, %v1624
          %v1873 = vsub.f32 %v1504, %v1625
          %v1874 = vsub.f32 %v1505, %v1625
          %v1875 = vsub.f32 %v1506, %v1625
          %v1876 = vsub.f32 %v1507, %v1625
          %v1877 = vsub.f32 %v1508, %v1626
          %v1878 = vsub.f32 %v1509, %v1626
          %v1879 = vsub.f32 %v1510, %v1626
          %v1880 = vsub.f32 %v1511, %v1626
          %v1881 = vsub.f32 %v1512, %v1627
          %v1882 = vsub.f32 %v1513, %v1627
          %v1883 = vsub.f32 %v1514, %v1627
          %v1884 = vsub.f32 %v1515, %v1627
          %v1885 = vsub.f32 %v1516, %v1628
          %v1886 = vsub.f32 %v1517, %v1628
          %v1887 = vsub.f32 %v1518, %v1628
          %v1888 = vsub.f32 %v1519, %v1628
          %v1889 = vsub.f32 %v1520, %v1629
          %v1890 = vsub.f32 %v1521, %v1629
          %v1891 = vsub.f32 %v1522, %v1629
          %v1892 = vsub.f32 %v1523, %v1629
          %v1893 = vsub.f32 %v1524, %v1630
          %v1894 = vsub.f32 %v1525, %v1630
          %v1895 = vsub.f32 %v1526, %v1630
          %v1896 = vsub.f32 %v1527, %v1630
          %v1897 = vsub.f32 %v1528, %v1631
          %v1898 = vsub.f32 %v1529, %v1631
          %v1899 = vsub.f32 %v1530, %v1631
          %v1900 = vsub.f32 %v1531, %v1631
          %v1901 = vsub.f32 %v1532, %v1632
          %v1902 = vsub.f32 %v1533, %v1632
          %v1903 = vsub.f32 %v1534, %v1632
          %v1904 = vsub.f32 %v1535, %v1632
          %v1905 = vadd.f32 %v1825, 1e-05
          %v1906 = vadd.f32 %v1826, 1e-05
          %v1907 = vadd.f32 %v1827, 1e-05
          %v1908 = vadd.f32 %v1828, 1e-05
          %v1909 = vadd.f32 %v1829, 1e-05
          %v1910 = vadd.f32 %v1830, 1e-05
          %v1911 = vadd.f32 %v1831, 1e-05
          %v1912 = vadd.f32 %v1832, 1e-05
          %v1913 = vadd.f32 %v1833, 1e-05
          %v1914 = vadd.f32 %v1834, 1e-05
          %v1915 = vadd.f32 %v1835, 1e-05
          %v1916 = vadd.f32 %v1836, 1e-05
          %v1917 = vadd.f32 %v1837, 1e-05
          %v1918 = vadd.f32 %v1838, 1e-05
          %v1919 = vadd.f32 %v1839, 1e-05
          %v1920 = vadd.f32 %v1840, 1e-05
          %v1921 = vrsqrt.pop %v1905
          %v1922 = vrsqrt.pop %v1906
          %v1923 = vrsqrt.pop %v1907
          %v1924 = vrsqrt.pop %v1908
          %v1925 = vrsqrt.pop %v1909
          %v1926 = vrsqrt.pop %v1910
          %v1927 = vrsqrt.pop %v1911
          %v1928 = vrsqrt.pop %v1912
          %v1929 = vrsqrt.pop %v1913
          %v1930 = vrsqrt.pop %v1914
          %v1931 = vrsqrt.pop %v1915
          %v1932 = vrsqrt.pop %v1916
          %v1933 = vrsqrt.pop %v1917
          %v1934 = vrsqrt.pop %v1918
          %v1935 = vrsqrt.pop %v1919
          %v1936 = vrsqrt.pop %v1920
          %v1937 = vmul.f32 %v1841, %v1921
          %v1938 = vmul.f32 %v1842, %v1921
          %v1939 = vmul.f32 %v1843, %v1921
          %v1940 = vmul.f32 %v1844, %v1921
          %v1941 = vmul.f32 %v1845, %v1922
          %v1942 = vmul.f32 %v1846, %v1922
          %v1943 = vmul.f32 %v1847, %v1922
          %v1944 = vmul.f32 %v1848, %v1922
          %v1945 = vmul.f32 %v1849, %v1923
          %v1946 = vmul.f32 %v1850, %v1923
          %v1947 = vmul.f32 %v1851, %v1923
          %v1948 = vmul.f32 %v1852, %v1923
          %v1949 = vmul.f32 %v1853, %v1924
          %v1950 = vmul.f32 %v1854, %v1924
          %v1951 = vmul.f32 %v1855, %v1924
          %v1952 = vmul.f32 %v1856, %v1924
          %v1953 = vmul.f32 %v1857, %v1925
          %v1954 = vmul.f32 %v1858, %v1925
          %v1955 = vmul.f32 %v1859, %v1925
          %v1956 = vmul.f32 %v1860, %v1925
          %v1957 = vmul.f32 %v1861, %v1926
          %v1958 = vmul.f32 %v1862, %v1926
          %v1959 = vmul.f32 %v1863, %v1926
          %v1960 = vmul.f32 %v1864, %v1926
          %v1961 = vmul.f32 %v1865, %v1927
          %v1962 = vmul.f32 %v1866, %v1927
          %v1963 = vmul.f32 %v1867, %v1927
          %v1964 = vmul.f32 %v1868, %v1927
          %v1965 = vmul.f32 %v1869, %v1928
          %v1966 = vmul.f32 %v1870, %v1928
          %v1967 = vmul.f32 %v1871, %v1928
          %v1968 = vmul.f32 %v1872, %v1928
          %v1969 = vmul.f32 %v1873, %v1929
          %v1970 = vmul.f32 %v1874, %v1929
          %v1971 = vmul.f32 %v1875, %v1929
          %v1972 = vmul.f32 %v1876, %v1929
          %v1973 = vmul.f32 %v1877, %v1930
          %v1974 = vmul.f32 %v1878, %v1930
          %v1975 = vmul.f32 %v1879, %v1930
          %v1976 = vmul.f32 %v1880, %v1930
          %v1977 = vmul.f32 %v1881, %v1931
          %v1978 = vmul.f32 %v1882, %v1931
          %v1979 = vmul.f32 %v1883, %v1931
          %v1980 = vmul.f32 %v1884, %v1931
          %v1981 = vmul.f32 %v1885, %v1932
          %v1982 = vmul.f32 %v1886, %v1932
          %v1983 = vmul.f32 %v1887, %v1932
          %v1984 = vmul.f32 %v1888, %v1932
          %v1985 = vmul.f32 %v1889, %v1933
          %v1986 = vmul.f32 %v1890, %v1933
          %v1987 = vmul.f32 %v1891, %v1933
          %v1988 = vmul.f32 %v1892, %v1933
          %v1989 = vmul.f32 %v1893, %v1934
          %v1990 = vmul.f32 %v1894, %v1934
          %v1991 = vmul.f32 %v1895, %v1934
          %v1992 = vmul.f32 %v1896, %v1934
          %v1993 = vmul.f32 %v1897, %v1935
          %v1994 = vmul.f32 %v1898, %v1935
          %v1995 = vmul.f32 %v1899, %v1935
          %v1996 = vmul.f32 %v1900, %v1935
          %v1997 = vmul.f32 %v1901, %v1936
          %v1998 = vmul.f32 %v1902, %v1936
          %v1999 = vmul.f32 %v1903, %v1936
          %v2000 = vmul.f32 %v1904, %v1936
          %v2001 = vld [vmem:[%s3] sm:$0xf]
          %v2003 = vlaneseq
          %v2004 = vshrl.u32 %v2003, 7
          %v2005 = vsub.s32 0, %v2004
          %v2006 = vrot.slane %v2001, %v2005
          %v2007 = vlaneseq
          %v2008 = vshrl.u32 %v2007, 7
          %v2009 = vsub.s32 1, %v2008
          %v2010 = vrot.slane %v2001, %v2009
          %v2011 = vlaneseq
          %v2012 = vshrl.u32 %v2011, 7
          %v2013 = vsub.s32 2, %v2012
          %v2014 = vrot.slane %v2001, %v2013
          %v2015 = vlaneseq
          %v2016 = vshrl.u32 %v2015, 7
          %v2017 = vsub.s32 3, %v2016
          %v2018 = vrot.slane %v2001, %v2017
          %v2023 = vmul.f32 %v1937, %v2006
          %v2024 = vmul.f32 %v1938, %v2010
          %v2025 = vmul.f32 %v1939, %v2014
          %v2026 = vmul.f32 %v1940, %v2018
          %v2027 = vmul.f32 %v1941, %v2006
          %v2028 = vmul.f32 %v1942, %v2010
          %v2029 = vmul.f32 %v1943, %v2014
          %v2030 = vmul.f32 %v1944, %v2018
          %v2031 = vmul.f32 %v1945, %v2006
          %v2032 = vmul.f32 %v1946, %v2010
          %v2033 = vmul.f32 %v1947, %v2014
          %v2034 = vmul.f32 %v1948, %v2018
          %v2035 = vmul.f32 %v1949, %v2006
          %v2036 = vmul.f32 %v1950, %v2010
          %v2037 = vmul.f32 %v1951, %v2014
          %v2038 = vmul.f32 %v1952, %v2018
          %v2039 = vmul.f32 %v1953, %v2006
          %v2040 = vmul.f32 %v1954, %v2010
          %v2041 = vmul.f32 %v1955, %v2014
          %v2042 = vmul.f32 %v1956, %v2018
          %v2043 = vmul.f32 %v1957, %v2006
          %v2044 = vmul.f32 %v1958, %v2010
          %v2045 = vmul.f32 %v1959, %v2014
          %v2046 = vmul.f32 %v1960, %v2018
          %v2047 = vmul.f32 %v1961, %v2006
          %v2048 = vmul.f32 %v1962, %v2010
          %v2049 = vmul.f32 %v1963, %v2014
          %v2050 = vmul.f32 %v1964, %v2018
          %v2051 = vmul.f32 %v1965, %v2006
          %v2052 = vmul.f32 %v1966, %v2010
          %v2053 = vmul.f32 %v1967, %v2014
          %v2054 = vmul.f32 %v1968, %v2018
          %v2055 = vmul.f32 %v1969, %v2006
          %v2056 = vmul.f32 %v1970, %v2010
          %v2057 = vmul.f32 %v1971, %v2014
          %v2058 = vmul.f32 %v1972, %v2018
          %v2059 = vmul.f32 %v1973, %v2006
          %v2060 = vmul.f32 %v1974, %v2010
          %v2061 = vmul.f32 %v1975, %v2014
          %v2062 = vmul.f32 %v1976, %v2018
          %v2063 = vmul.f32 %v1977, %v2006
          %v2064 = vmul.f32 %v1978, %v2010
          %v2065 = vmul.f32 %v1979, %v2014
          %v2066 = vmul.f32 %v1980, %v2018
          %v2067 = vmul.f32 %v1981, %v2006
          %v2068 = vmul.f32 %v1982, %v2010
          %v2069 = vmul.f32 %v1983, %v2014
          %v2070 = vmul.f32 %v1984, %v2018
          %v2071 = vmul.f32 %v1985, %v2006
          %v2072 = vmul.f32 %v1986, %v2010
          %v2073 = vmul.f32 %v1987, %v2014
          %v2074 = vmul.f32 %v1988, %v2018
          %v2075 = vmul.f32 %v1989, %v2006
          %v2076 = vmul.f32 %v1990, %v2010
          %v2077 = vmul.f32 %v1991, %v2014
          %v2078 = vmul.f32 %v1992, %v2018
          %v2079 = vmul.f32 %v1993, %v2006
          %v2080 = vmul.f32 %v1994, %v2010
          %v2081 = vmul.f32 %v1995, %v2014
          %v2082 = vmul.f32 %v1996, %v2018
          %v2083 = vmul.f32 %v1997, %v2006
          %v2084 = vmul.f32 %v1998, %v2010
          %v2085 = vmul.f32 %v1999, %v2014
          %v2086 = vmul.f32 %v2000, %v2018
          %v2087 = vld [vmem:[%s4] sm:$0xf]
          %v2089 = vlaneseq
          %v2090 = vshrl.u32 %v2089, 7
          %v2091 = vsub.s32 0, %v2090
          %v2092 = vrot.slane %v2087, %v2091
          %v2093 = vlaneseq
          %v2094 = vshrl.u32 %v2093, 7
          %v2095 = vsub.s32 1, %v2094
          %v2096 = vrot.slane %v2087, %v2095
          %v2097 = vlaneseq
          %v2098 = vshrl.u32 %v2097, 7
          %v2099 = vsub.s32 2, %v2098
          %v2100 = vrot.slane %v2087, %v2099
          %v2101 = vlaneseq
          %v2102 = vshrl.u32 %v2101, 7
          %v2103 = vsub.s32 3, %v2102
          %v2104 = vrot.slane %v2087, %v2103
          %v2109 = vadd.f32 %v2023, %v2092
          %v2110 = vadd.f32 %v2024, %v2096
          %v2111 = vadd.f32 %v2025, %v2100
          %v2112 = vadd.f32 %v2026, %v2104
          %v2113 = vadd.f32 %v2027, %v2092
          %v2114 = vadd.f32 %v2028, %v2096
          %v2115 = vadd.f32 %v2029, %v2100
          %v2116 = vadd.f32 %v2030, %v2104
          %v2117 = vadd.f32 %v2031, %v2092
          %v2118 = vadd.f32 %v2032, %v2096
          %v2119 = vadd.f32 %v2033, %v2100
          %v2120 = vadd.f32 %v2034, %v2104
          %v2121 = vadd.f32 %v2035, %v2092
          %v2122 = vadd.f32 %v2036, %v2096
          %v2123 = vadd.f32 %v2037, %v2100
          %v2124 = vadd.f32 %v2038, %v2104
          %v2125 = vadd.f32 %v2039, %v2092
          %v2126 = vadd.f32 %v2040, %v2096
          %v2127 = vadd.f32 %v2041, %v2100
          %v2128 = vadd.f32 %v2042, %v2104
          %v2129 = vadd.f32 %v2043, %v2092
          %v2130 = vadd.f32 %v2044, %v2096
          %v2131 = vadd.f32 %v2045, %v2100
          %v2132 = vadd.f32 %v2046, %v2104
          %v2133 = vadd.f32 %v2047, %v2092
          %v2134 = vadd.f32 %v2048, %v2096
          %v2135 = vadd.f32 %v2049, %v2100
          %v2136 = vadd.f32 %v2050, %v2104
          %v2137 = vadd.f32 %v2051, %v2092
          %v2138 = vadd.f32 %v2052, %v2096
          %v2139 = vadd.f32 %v2053, %v2100
          %v2140 = vadd.f32 %v2054, %v2104
          %v2141 = vadd.f32 %v2055, %v2092
          %v2142 = vadd.f32 %v2056, %v2096
          %v2143 = vadd.f32 %v2057, %v2100
          %v2144 = vadd.f32 %v2058, %v2104
          %v2145 = vadd.f32 %v2059, %v2092
          %v2146 = vadd.f32 %v2060, %v2096
          %v2147 = vadd.f32 %v2061, %v2100
          %v2148 = vadd.f32 %v2062, %v2104
          %v2149 = vadd.f32 %v2063, %v2092
          %v2150 = vadd.f32 %v2064, %v2096
          %v2151 = vadd.f32 %v2065, %v2100
          %v2152 = vadd.f32 %v2066, %v2104
          %v2153 = vadd.f32 %v2067, %v2092
          %v2154 = vadd.f32 %v2068, %v2096
          %v2155 = vadd.f32 %v2069, %v2100
          %v2156 = vadd.f32 %v2070, %v2104
          %v2157 = vadd.f32 %v2071, %v2092
          %v2158 = vadd.f32 %v2072, %v2096
          %v2159 = vadd.f32 %v2073, %v2100
          %v2160 = vadd.f32 %v2074, %v2104
          %v2161 = vadd.f32 %v2075, %v2092
          %v2162 = vadd.f32 %v2076, %v2096
          %v2163 = vadd.f32 %v2077, %v2100
          %v2164 = vadd.f32 %v2078, %v2104
          %v2165 = vadd.f32 %v2079, %v2092
          %v2166 = vadd.f32 %v2080, %v2096
          %v2167 = vadd.f32 %v2081, %v2100
          %v2168 = vadd.f32 %v2082, %v2104
          %v2169 = vadd.f32 %v2083, %v2092
          %v2170 = vadd.f32 %v2084, %v2096
          %v2171 = vadd.f32 %v2085, %v2100
          %v2172 = vadd.f32 %v2086, %v2104
          %v2173 = vpack.c.bf16 %v2113, %v2109
          %v2174 = vpack.c.bf16 %v2114, %v2110
          %v2175 = vpack.c.bf16 %v2115, %v2111
          %v2176 = vpack.c.bf16 %v2116, %v2112
          %v2177 = vpack.c.bf16 %v2121, %v2117
          %v2178 = vpack.c.bf16 %v2122, %v2118
          %v2179 = vpack.c.bf16 %v2123, %v2119
          %v2180 = vpack.c.bf16 %v2124, %v2120
          %v2181 = vpack.c.bf16 %v2129, %v2125
          %v2182 = vpack.c.bf16 %v2130, %v2126
          %v2183 = vpack.c.bf16 %v2131, %v2127
          %v2184 = vpack.c.bf16 %v2132, %v2128
          %v2185 = vpack.c.bf16 %v2137, %v2133
          %v2186 = vpack.c.bf16 %v2138, %v2134
          %v2187 = vpack.c.bf16 %v2139, %v2135
          %v2188 = vpack.c.bf16 %v2140, %v2136
          %v2189 = vpack.c.bf16 %v2145, %v2141
          %v2190 = vpack.c.bf16 %v2146, %v2142
          %v2191 = vpack.c.bf16 %v2147, %v2143
          %v2192 = vpack.c.bf16 %v2148, %v2144
          %v2193 = vpack.c.bf16 %v2153, %v2149
          %v2194 = vpack.c.bf16 %v2154, %v2150
          %v2195 = vpack.c.bf16 %v2155, %v2151
          %v2196 = vpack.c.bf16 %v2156, %v2152
          %v2197 = vpack.c.bf16 %v2161, %v2157
          %v2198 = vpack.c.bf16 %v2162, %v2158
          %v2199 = vpack.c.bf16 %v2163, %v2159
          %v2200 = vpack.c.bf16 %v2164, %v2160
          %v2201 = vpack.c.bf16 %v2169, %v2165
          %v2202 = vpack.c.bf16 %v2170, %v2166
          %v2203 = vpack.c.bf16 %v2171, %v2167
          %v2204 = vpack.c.bf16 %v2172, %v2168
          %2205 = vst [vmem:[#allocation2] sm:$0xff] %v2173
          %2206 = vst [vmem:[#allocation2 + $0x8] sm:$0xff] %v2174
          %2207 = vst [vmem:[#allocation2 + $0x10] sm:$0xff] %v2175
          %2208 = vst [vmem:[#allocation2 + $0x18] sm:$0xff] %v2176
          %2209 = vst [vmem:[#allocation2 + $0x20] sm:$0xff] %v2177
          %2210 = vst [vmem:[#allocation2 + $0x28] sm:$0xff] %v2178
          %2211 = vst [vmem:[#allocation2 + $0x30] sm:$0xff] %v2179
          %2212 = vst [vmem:[#allocation2 + $0x38] sm:$0xff] %v2180
          %2213 = vst [vmem:[#allocation2 + $0x40] sm:$0xff] %v2181
          %2214 = vst [vmem:[#allocation2 + $0x48] sm:$0xff] %v2182
          %2215 = vst [vmem:[#allocation2 + $0x50] sm:$0xff] %v2183
          %2216 = vst [vmem:[#allocation2 + $0x58] sm:$0xff] %v2184
          %2217 = vst [vmem:[#allocation2 + $0x60] sm:$0xff] %v2185
          %2218 = vst [vmem:[#allocation2 + $0x68] sm:$0xff] %v2186
          %2219 = vst [vmem:[#allocation2 + $0x70] sm:$0xff] %v2187
          %2220 = vst [vmem:[#allocation2 + $0x78] sm:$0xff] %v2188
          %2221 = vst [vmem:[#allocation2 + $0x80] sm:$0xff] %v2189
          %2222 = vst [vmem:[#allocation2 + $0x88] sm:$0xff] %v2190
          %2223 = vst [vmem:[#allocation2 + $0x90] sm:$0xff] %v2191
          %2224 = vst [vmem:[#allocation2 + $0x98] sm:$0xff] %v2192
          %2225 = vst [vmem:[#allocation2 + $0xa0] sm:$0xff] %v2193
          %2226 = vst [vmem:[#allocation2 + $0xa8] sm:$0xff] %v2194
          %2227 = vst [vmem:[#allocation2 + $0xb0] sm:$0xff] %v2195
          %2228 = vst [vmem:[#allocation2 + $0xb8] sm:$0xff] %v2196
          %2229 = vst [vmem:[#allocation2 + $0xc0] sm:$0xff] %v2197
          %2230 = vst [vmem:[#allocation2 + $0xc8] sm:$0xff] %v2198
          %2231 = vst [vmem:[#allocation2 + $0xd0] sm:$0xff] %v2199
          %2232 = vst [vmem:[#allocation2 + $0xd8] sm:$0xff] %v2200
          %2233 = vst [vmem:[#allocation2 + $0xe0] sm:$0xff] %v2201
          %2234 = vst [vmem:[#allocation2 + $0xe8] sm:$0xff] %v2202
          %2235 = vst [vmem:[#allocation2 + $0xf0] sm:$0xff] %v2203
          %2236 = vst [vmem:[#allocation2 + $0xf8] sm:$0xff] %v2204
          %v2237 = vand.u32 2147483647, %v940
          %v2238 = vand.u32 2147483647, %v943
          %v2239 = vand.u32 2147483647, %v948
          %v2240 = vand.u32 2147483647, %v951
          %v2241 = vand.u32 2147483647, %v956
          %v2242 = vand.u32 2147483647, %v959
          %v2243 = vand.u32 2147483647, %v964
          %v2244 = vand.u32 2147483647, %v967
          %v2245 = vand.u32 2147483647, %v972
          %v2246 = vand.u32 2147483647, %v975
          %v2247 = vand.u32 2147483647, %v980
          %v2248 = vand.u32 2147483647, %v983
          %v2249 = vand.u32 2147483647, %v988
          %v2250 = vand.u32 2147483647, %v991
          %v2251 = vand.u32 2147483647, %v996
          %v2252 = vand.u32 2147483647, %v999
          %v2253 = vadd.f32 %v2237, %v2238
          %v2254 = vadd.f32 %v2253, %v2239
          %v2255 = vadd.f32 %v2254, %v2240
          %v2256 = vadd.f32 %v2255, %v2241
          %v2257 = vadd.f32 %v2256, %v2242
          %v2258 = vadd.f32 %v2257, %v2243
          %v2259 = vadd.f32 %v2258, %v2244
          %v2260 = vadd.f32 %v2259, %v2245
          %v2261 = vadd.f32 %v2260, %v2246
          %v2262 = vadd.f32 %v2261, %v2247
          %v2263 = vadd.f32 %v2262, %v2248
          %v2264 = vadd.f32 %v2263, %v2249
          %v2265 = vadd.f32 %v2264, %v2250
          %v2266 = vadd.f32 %v2265, %v2251
          %v2267 = vadd.f32 %v2266, %v2252
          %2268 = vadd.xlane.f32.xlu0 %v2267
          %v2269 = vpop.xlane.xlu0 %2268
          %v2270 = vrot.slane %v2269, 4
          %v2271 = vadd.f32 %v2269, %v2270
          %v2272 = vrot.slane %v2271, 2
          %v2273 = vadd.f32 %v2271, %v2272
          %v2274 = vrot.slane %v2273, 1
          %v2275 = vadd.f32 %v2273, %v2274
          %s2276 = vtos %v2275
          %s2277 = smul.f32 %s2276, 0.0078125
          %v2278 = vand.u32 2147483647, %v399
          %v2279 = vand.u32 2147483647, %v400
          %v2280 = vand.u32 2147483647, %v401
          %v2281 = vand.u32 2147483647, %v402
          %v2282 = vand.u32 2147483647, %v403
          %v2283 = vand.u32 2147483647, %v404
          %v2284 = vand.u32 2147483647, %v405
          %v2285 = vand.u32 2147483647, %v406
          %v2286 = vand.u32 2147483647, %v407
          %v2287 = vand.u32 2147483647, %v408
          %v2288 = vand.u32 2147483647, %v409
          %v2289 = vand.u32 2147483647, %v410
          %v2290 = vand.u32 2147483647, %v411
          %v2291 = vand.u32 2147483647, %v412
          %v2292 = vand.u32 2147483647, %v413
          %v2293 = vand.u32 2147483647, %v414
          %v2294 = vsub.f32 %v2278, 3.0
          %v2295 = vsub.f32 %v2279, 3.0
          %v2296 = vsub.f32 %v2280, 3.0
          %v2297 = vsub.f32 %v2281, 3.0
          %v2298 = vsub.f32 %v2282, 3.0
          %v2299 = vsub.f32 %v2283, 3.0
          %v2300 = vsub.f32 %v2284, 3.0
          %v2301 = vsub.f32 %v2285, 3.0
          %v2302 = vsub.f32 %v2286, 3.0
          %v2303 = vsub.f32 %v2287, 3.0
          %v2304 = vsub.f32 %v2288, 3.0
          %v2305 = vsub.f32 %v2289, 3.0
          %v2306 = vsub.f32 %v2290, 3.0
          %v2307 = vsub.f32 %v2291, 3.0
          %v2308 = vsub.f32 %v2292, 3.0
          %v2309 = vsub.f32 %v2293, 3.0
          %v2310 = vmax.f32 %v2294, 0.0
          %v2311 = vmax.f32 %v2295, 0.0
          %v2312 = vmax.f32 %v2296, 0.0
          %v2313 = vmax.f32 %v2297, 0.0
          %v2314 = vmax.f32 %v2298, 0.0
          %v2315 = vmax.f32 %v2299, 0.0
          %v2316 = vmax.f32 %v2300, 0.0
          %v2317 = vmax.f32 %v2301, 0.0
          %v2318 = vmax.f32 %v2302, 0.0
          %v2319 = vmax.f32 %v2303, 0.0
          %v2320 = vmax.f32 %v2304, 0.0
          %v2321 = vmax.f32 %v2305, 0.0
          %v2322 = vmax.f32 %v2306, 0.0
          %v2323 = vmax.f32 %v2307, 0.0
          %v2324 = vmax.f32 %v2308, 0.0
          %v2325 = vmax.f32 %v2309, 0.0
          %v2326 = vadd.f32 %v2310, %v2311
          %v2327 = vadd.f32 %v2326, %v2312
          %v2328 = vadd.f32 %v2327, %v2313
          %v2329 = vadd.f32 %v2328, %v2314
          %v2330 = vadd.f32 %v2329, %v2315
          %v2331 = vadd.f32 %v2330, %v2316
          %v2332 = vadd.f32 %v2331, %v2317
          %v2333 = vadd.f32 %v2332, %v2318
          %v2334 = vadd.f32 %v2333, %v2319
          %v2335 = vadd.f32 %v2334, %v2320
          %v2336 = vadd.f32 %v2335, %v2321
          %v2337 = vadd.f32 %v2336, %v2322
          %v2338 = vadd.f32 %v2337, %v2323
          %v2339 = vadd.f32 %v2338, %v2324
          %v2340 = vadd.f32 %v2339, %v2325
          %2341 = vadd.xlane.f32.xlu0 %v2340
          %v2342 = vpop.xlane.xlu0 %2341
          %v2343 = vrot.slane %v2342, 4
          %v2344 = vadd.f32 %v2342, %v2343
          %v2345 = vrot.slane %v2344, 2
          %v2346 = vadd.f32 %v2344, %v2345
          %v2347 = vrot.slane %v2346, 1
          %v2348 = vadd.f32 %v2346, %v2347
          %s2349 = vtos %v2348
          %s2350 = smul.f32 %s2349, 0.00024414063
          %2351 = vrot.lane.b32.xlu0 %v399, 127
          %v2352 = vpop.permute.xlu0 %2351
          %2353 = vrot.lane.b32.xlu0 %v400, 127
          %v2354 = vpop.permute.xlu0 %2353
          %2355 = vrot.lane.b32.xlu0 %v401, 127
          %v2356 = vpop.permute.xlu0 %2355
          %2357 = vrot.lane.b32.xlu0 %v402, 127
          %v2358 = vpop.permute.xlu0 %2357
          %2359 = vrot.lane.b32.xlu0 %v403, 127
          %v2360 = vpop.permute.xlu0 %2359
          %2361 = vrot.lane.b32.xlu0 %v404, 127
          %v2362 = vpop.permute.xlu0 %2361
          %2363 = vrot.lane.b32.xlu0 %v405, 127
          %v2364 = vpop.permute.xlu0 %2363
          %2365 = vrot.lane.b32.xlu0 %v406, 127
          %v2366 = vpop.permute.xlu0 %2365
          %2367 = vrot.lane.b32.xlu0 %v407, 127
          %v2368 = vpop.permute.xlu0 %2367
          %2369 = vrot.lane.b32.xlu0 %v408, 127
          %v2370 = vpop.permute.xlu0 %2369
          %2371 = vrot.lane.b32.xlu0 %v409, 127
          %v2372 = vpop.permute.xlu0 %2371
          %2373 = vrot.lane.b32.xlu0 %v410, 127
          %v2374 = vpop.permute.xlu0 %2373
          %2375 = vrot.lane.b32.xlu0 %v411, 127
          %v2376 = vpop.permute.xlu0 %2375
          %2377 = vrot.lane.b32.xlu0 %v412, 127
          %v2378 = vpop.permute.xlu0 %2377
          %2379 = vrot.lane.b32.xlu0 %v413, 127
          %v2380 = vpop.permute.xlu0 %2379
          %2381 = vrot.lane.b32.xlu0 %v414, 127
          %v2382 = vpop.permute.xlu0 %2381
          %v2383 = vmul.f32 %v399, %v2352
          %v2384 = vmul.f32 %v400, %v2354
          %v2385 = vmul.f32 %v401, %v2356
          %v2386 = vmul.f32 %v402, %v2358
          %v2387 = vmul.f32 %v403, %v2360
          %v2388 = vmul.f32 %v404, %v2362
          %v2389 = vmul.f32 %v405, %v2364
          %v2390 = vmul.f32 %v406, %v2366
          %v2391 = vmul.f32 %v407, %v2368
          %v2392 = vmul.f32 %v408, %v2370
          %v2393 = vmul.f32 %v409, %v2372
          %v2394 = vmul.f32 %v410, %v2374
          %v2395 = vmul.f32 %v411, %v2376
          %v2396 = vmul.f32 %v412, %v2378
          %v2397 = vmul.f32 %v413, %v2380
          %v2398 = vmul.f32 %v414, %v2382
          %v2399 = vadd.f32 %v2383, %v2384
          %v2400 = vadd.f32 %v2399, %v2385
          %v2401 = vadd.f32 %v2400, %v2386
          %v2402 = vadd.f32 %v2401, %v2387
          %v2403 = vadd.f32 %v2402, %v2388
          %v2404 = vadd.f32 %v2403, %v2389
          %v2405 = vadd.f32 %v2404, %v2390
          %v2406 = vadd.f32 %v2405, %v2391
          %v2407 = vadd.f32 %v2406, %v2392
          %v2408 = vadd.f32 %v2407, %v2393
          %v2409 = vadd.f32 %v2408, %v2394
          %v2410 = vadd.f32 %v2409, %v2395
          %v2411 = vadd.f32 %v2410, %v2396
          %v2412 = vadd.f32 %v2411, %v2397
          %v2413 = vadd.f32 %v2412, %v2398
          %v2414 = vrot.slane %v2413, 4
          %v2415 = vadd.f32 %v2413, %v2414
          %v2416 = vrot.slane %v2415, 2
          %v2417 = vadd.f32 %v2415, %v2416
          %v2418 = vrot.slane %v2417, 1
          %v2419 = vadd.f32 %v2417, %v2418
          %v2420 = vmul.f32 %v2419, 0.0078125
          %v2421 = vand.u32 2147483647, %v2420
          %v2422 = vsub.f32 0.5, %v2421
          %v2423 = vmax.f32 %v2422, 0.0
          %v2424 = vld [vmem:[%s9] sm:$0x1]
          %v2425 = vmul.f32 %v2424, %v2423
          %vm2426 = vcmask 1040384
          %v2427 = vsel %vm2426, %v2425, 0.0
          %2428 = vadd.xlane.f32.xlu0 %v2427
          %v2429 = vpop.xlane.xlu0 %2428
          %v2430 = vrot.slane %v2429, 4
          %v2431 = vadd.f32 %v2429, %v2430
          %v2432 = vrot.slane %v2431, 2
          %v2433 = vadd.f32 %v2431, %v2432
          %v2434 = vrot.slane %v2433, 1
          %v2435 = vadd.f32 %v2433, %v2434
          %s2436 = vtos %v2435
          %v2437 = vlaneseq
          %v2438 = vand.u32 %v2437, 127
          %vm2439 = vcmp.eq.s32.totalorder %v2438, 1
          %vm2440 = vcmp.eq.s32.totalorder %v2438, 2
          %vm2441 = vcmp.eq.s32.totalorder %v2438, 3
          %v2442 = vstv %s2436
          %v2443 = vsel %vm2441, %v2442, 0.0
          %v2444 = vstv %s2350
          %v2445 = vsel %vm2440, %v2444, %v2443
          %v2446 = vstv %s2277
          %v2447 = vsel %vm2439, %v2446, %v2445
          %2448 = vst [vmem:[#allocation4] sm:$0x1] %v2447
          %2449 = vst [vmem:[#allocation3] sm:$0x1] 0.0
        $region68: #{kgedn_forward.1} parent=59 // pred_fallthru
          _
        %v2450 = vld [vmem:[#allocation2] sm:$0xff]
        %v2451 = vld [vmem:[#allocation2 + $0x8] sm:$0xff]
        %v2452 = vld [vmem:[#allocation2 + $0x10] sm:$0xff]
        %v2453 = vld [vmem:[#allocation2 + $0x18] sm:$0xff]
        %v2454 = vld [vmem:[#allocation2 + $0x20] sm:$0xff]
        %v2455 = vld [vmem:[#allocation2 + $0x28] sm:$0xff]
        %v2456 = vld [vmem:[#allocation2 + $0x30] sm:$0xff]
        %v2457 = vld [vmem:[#allocation2 + $0x38] sm:$0xff]
        %v2458 = vld [vmem:[#allocation2 + $0x40] sm:$0xff]
        %v2459 = vld [vmem:[#allocation2 + $0x48] sm:$0xff]
        %v2460 = vld [vmem:[#allocation2 + $0x50] sm:$0xff]
        %v2461 = vld [vmem:[#allocation2 + $0x58] sm:$0xff]
        %v2462 = vld [vmem:[#allocation2 + $0x60] sm:$0xff]
        %v2463 = vld [vmem:[#allocation2 + $0x68] sm:$0xff]
        %v2464 = vld [vmem:[#allocation2 + $0x70] sm:$0xff]
        %v2465 = vld [vmem:[#allocation2 + $0x78] sm:$0xff]
        %v2466 = vld [vmem:[#allocation2 + $0x80] sm:$0xff]
        %v2467 = vld [vmem:[#allocation2 + $0x88] sm:$0xff]
        %v2468 = vld [vmem:[#allocation2 + $0x90] sm:$0xff]
        %v2469 = vld [vmem:[#allocation2 + $0x98] sm:$0xff]
        %v2470 = vld [vmem:[#allocation2 + $0xa0] sm:$0xff]
        %v2471 = vld [vmem:[#allocation2 + $0xa8] sm:$0xff]
        %v2472 = vld [vmem:[#allocation2 + $0xb0] sm:$0xff]
        %v2473 = vld [vmem:[#allocation2 + $0xb8] sm:$0xff]
        %v2474 = vld [vmem:[#allocation2 + $0xc0] sm:$0xff]
        %v2475 = vld [vmem:[#allocation2 + $0xc8] sm:$0xff]
        %v2476 = vld [vmem:[#allocation2 + $0xd0] sm:$0xff]
        %v2477 = vld [vmem:[#allocation2 + $0xd8] sm:$0xff]
        %v2478 = vld [vmem:[#allocation2 + $0xe0] sm:$0xff]
        %v2479 = vld [vmem:[#allocation2 + $0xe8] sm:$0xff]
        %v2480 = vld [vmem:[#allocation2 + $0xf0] sm:$0xff]
        %v2481 = vld [vmem:[#allocation2 + $0xf8] sm:$0xff]
        %v2482 = vld [vmem:[%s350] sm:$0xf]
        %v2483 = vld [vmem:[%s350 + $0x4] sm:$0xf]
        %v2484 = vld [vmem:[%s350 + $0x8] sm:$0xf]
        %v2485 = vld [vmem:[%s350 + $0xc] sm:$0xf]
        %v2486 = vld [vmem:[%s350 + $0x10] sm:$0xf]
        %v2487 = vld [vmem:[%s350 + $0x14] sm:$0xf]
        %v2488 = vld [vmem:[%s350 + $0x18] sm:$0xf]
        %v2489 = vld [vmem:[%s350 + $0x1c] sm:$0xf]
        %v2490 = vld [vmem:[%s350 + $0x20] sm:$0xf]
        %v2491 = vld [vmem:[%s350 + $0x24] sm:$0xf]
        %v2492 = vld [vmem:[%s350 + $0x28] sm:$0xf]
        %v2493 = vld [vmem:[%s350 + $0x2c] sm:$0xf]
        %v2494 = vld [vmem:[%s350 + $0x30] sm:$0xf]
        %v2495 = vld [vmem:[%s350 + $0x34] sm:$0xf]
        %v2496 = vld [vmem:[%s350 + $0x38] sm:$0xf]
        %v2497 = vld [vmem:[%s350 + $0x3c] sm:$0xf]
        %v2498 = vld [vmem:[%s350 + $0x40] sm:$0xf]
        %v2499 = vld [vmem:[%s350 + $0x44] sm:$0xf]
        %v2500 = vld [vmem:[%s350 + $0x48] sm:$0xf]
        %v2501 = vld [vmem:[%s350 + $0x4c] sm:$0xf]
        %v2502 = vld [vmem:[%s350 + $0x50] sm:$0xf]
        %v2503 = vld [vmem:[%s350 + $0x54] sm:$0xf]
        %v2504 = vld [vmem:[%s350 + $0x58] sm:$0xf]
        %v2505 = vld [vmem:[%s350 + $0x5c] sm:$0xf]
        %v2506 = vld [vmem:[%s350 + $0x60] sm:$0xf]
        %v2507 = vld [vmem:[%s350 + $0x64] sm:$0xf]
        %v2508 = vld [vmem:[%s350 + $0x68] sm:$0xf]
        %v2509 = vld [vmem:[%s350 + $0x6c] sm:$0xf]
        %v2510 = vld [vmem:[%s350 + $0x70] sm:$0xf]
        %v2511 = vld [vmem:[%s350 + $0x74] sm:$0xf]
        %v2512 = vld [vmem:[%s350 + $0x78] sm:$0xf]
        %v2513 = vld [vmem:[%s350 + $0x7c] sm:$0xf]
        %v2514 = vld [vmem:[%s350 + $0x80] sm:$0xf]
        %v2515 = vld [vmem:[%s350 + $0x84] sm:$0xf]
        %v2516 = vld [vmem:[%s350 + $0x88] sm:$0xf]
        %v2517 = vld [vmem:[%s350 + $0x8c] sm:$0xf]
        %v2518 = vld [vmem:[%s350 + $0x90] sm:$0xf]
        %v2519 = vld [vmem:[%s350 + $0x94] sm:$0xf]
        %v2520 = vld [vmem:[%s350 + $0x98] sm:$0xf]
        %v2521 = vld [vmem:[%s350 + $0x9c] sm:$0xf]
        %v2522 = vld [vmem:[%s350 + $0xa0] sm:$0xf]
        %v2523 = vld [vmem:[%s350 + $0xa4] sm:$0xf]
        %v2524 = vld [vmem:[%s350 + $0xa8] sm:$0xf]
        %v2525 = vld [vmem:[%s350 + $0xac] sm:$0xf]
        %v2526 = vld [vmem:[%s350 + $0xb0] sm:$0xf]
        %v2527 = vld [vmem:[%s350 + $0xb4] sm:$0xf]
        %v2528 = vld [vmem:[%s350 + $0xb8] sm:$0xf]
        %v2529 = vld [vmem:[%s350 + $0xbc] sm:$0xf]
        %v2530 = vld [vmem:[%s350 + $0xc0] sm:$0xf]
        %v2531 = vld [vmem:[%s350 + $0xc4] sm:$0xf]
        %v2532 = vld [vmem:[%s350 + $0xc8] sm:$0xf]
        %v2533 = vld [vmem:[%s350 + $0xcc] sm:$0xf]
        %v2534 = vld [vmem:[%s350 + $0xd0] sm:$0xf]
        %v2535 = vld [vmem:[%s350 + $0xd4] sm:$0xf]
        %v2536 = vld [vmem:[%s350 + $0xd8] sm:$0xf]
        %v2537 = vld [vmem:[%s350 + $0xdc] sm:$0xf]
        %v2538 = vld [vmem:[%s350 + $0xe0] sm:$0xf]
        %v2539 = vld [vmem:[%s350 + $0xe4] sm:$0xf]
        %v2540 = vld [vmem:[%s350 + $0xe8] sm:$0xf]
        %v2541 = vld [vmem:[%s350 + $0xec] sm:$0xf]
        %v2542 = vld [vmem:[%s350 + $0xf0] sm:$0xf]
        %v2543 = vld [vmem:[%s350 + $0xf4] sm:$0xf]
        %v2544 = vld [vmem:[%s350 + $0xf8] sm:$0xf]
        %v2545 = vld [vmem:[%s350 + $0xfc] sm:$0xf]
        %v2546 = vld [vmem:[%s390] sm:$0x1]
        %v2548 = vlaneseq
        %v2549 = vshrl.u32 %v2548, 7
        %v2550 = vsub.s32 0, %v2549
        %v2551 = vrot.slane %v2546, %v2550
        %v2617 = vunpack.c.l.b16 %v2482
        %v2618 = vunpack.c.l.b16 %v2483
        %v2619 = vunpack.c.l.b16 %v2484
        %v2620 = vunpack.c.l.b16 %v2485
        %v2621 = vunpack.c.l.b16 %v2486
        %v2622 = vunpack.c.l.b16 %v2487
        %v2623 = vunpack.c.l.b16 %v2488
        %v2624 = vunpack.c.l.b16 %v2489
        %v2625 = vunpack.c.l.b16 %v2490
        %v2626 = vunpack.c.l.b16 %v2491
        %v2627 = vunpack.c.l.b16 %v2492
        %v2628 = vunpack.c.l.b16 %v2493
        %v2629 = vunpack.c.l.b16 %v2494
        %v2630 = vunpack.c.l.b16 %v2495
        %v2631 = vunpack.c.l.b16 %v2496
        %v2632 = vunpack.c.l.b16 %v2497
        %v2633 = vunpack.c.l.b16 %v2498
        %v2634 = vunpack.c.l.b16 %v2499
        %v2635 = vunpack.c.l.b16 %v2500
        %v2636 = vunpack.c.l.b16 %v2501
        %v2637 = vunpack.c.l.b16 %v2502
        %v2638 = vunpack.c.l.b16 %v2503
        %v2639 = vunpack.c.l.b16 %v2504
        %v2640 = vunpack.c.l.b16 %v2505
        %v2641 = vunpack.c.l.b16 %v2506
        %v2642 = vunpack.c.l.b16 %v2507
        %v2643 = vunpack.c.l.b16 %v2508
        %v2644 = vunpack.c.l.b16 %v2509
        %v2645 = vunpack.c.l.b16 %v2510
        %v2646 = vunpack.c.l.b16 %v2511
        %v2647 = vunpack.c.l.b16 %v2512
        %v2648 = vunpack.c.l.b16 %v2513
        %v2649 = vunpack.c.l.b16 %v2514
        %v2650 = vunpack.c.l.b16 %v2515
        %v2651 = vunpack.c.l.b16 %v2516
        %v2652 = vunpack.c.l.b16 %v2517
        %v2653 = vunpack.c.l.b16 %v2518
        %v2654 = vunpack.c.l.b16 %v2519
        %v2655 = vunpack.c.l.b16 %v2520
        %v2656 = vunpack.c.l.b16 %v2521
        %v2657 = vunpack.c.l.b16 %v2522
        %v2658 = vunpack.c.l.b16 %v2523
        %v2659 = vunpack.c.l.b16 %v2524
        %v2660 = vunpack.c.l.b16 %v2525
        %v2661 = vunpack.c.l.b16 %v2526
        %v2662 = vunpack.c.l.b16 %v2527
        %v2663 = vunpack.c.l.b16 %v2528
        %v2664 = vunpack.c.l.b16 %v2529
        %v2665 = vunpack.c.l.b16 %v2530
        %v2666 = vunpack.c.l.b16 %v2531
        %v2667 = vunpack.c.l.b16 %v2532
        %v2668 = vunpack.c.l.b16 %v2533
        %v2669 = vunpack.c.l.b16 %v2534
        %v2670 = vunpack.c.l.b16 %v2535
        %v2671 = vunpack.c.l.b16 %v2536
        %v2672 = vunpack.c.l.b16 %v2537
        %v2673 = vunpack.c.l.b16 %v2538
        %v2674 = vunpack.c.l.b16 %v2539
        %v2675 = vunpack.c.l.b16 %v2540
        %v2676 = vunpack.c.l.b16 %v2541
        %v2677 = vunpack.c.l.b16 %v2542
        %v2678 = vunpack.c.l.b16 %v2543
        %v2679 = vunpack.c.l.b16 %v2544
        %v2680 = vunpack.c.l.b16 %v2545
        %v2681 = vpack.c.b16 %v2618, %v2617
        %v2682 = vpack.c.b16 %v2620, %v2619
        %v2683 = vpack.c.b16 %v2622, %v2621
        %v2684 = vpack.c.b16 %v2624, %v2623
        %v2685 = vpack.c.b16 %v2626, %v2625
        %v2686 = vpack.c.b16 %v2628, %v2627
        %v2687 = vpack.c.b16 %v2630, %v2629
        %v2688 = vpack.c.b16 %v2632, %v2631
        %v2689 = vpack.c.b16 %v2634, %v2633
        %v2690 = vpack.c.b16 %v2636, %v2635
        %v2691 = vpack.c.b16 %v2638, %v2637
        %v2692 = vpack.c.b16 %v2640, %v2639
        %v2693 = vpack.c.b16 %v2642, %v2641
        %v2694 = vpack.c.b16 %v2644, %v2643
        %v2695 = vpack.c.b16 %v2646, %v2645
        %v2696 = vpack.c.b16 %v2648, %v2647
        %v2697 = vpack.c.b16 %v2650, %v2649
        %v2698 = vpack.c.b16 %v2652, %v2651
        %v2699 = vpack.c.b16 %v2654, %v2653
        %v2700 = vpack.c.b16 %v2656, %v2655
        %v2701 = vpack.c.b16 %v2658, %v2657
        %v2702 = vpack.c.b16 %v2660, %v2659
        %v2703 = vpack.c.b16 %v2662, %v2661
        %v2704 = vpack.c.b16 %v2664, %v2663
        %v2705 = vpack.c.b16 %v2666, %v2665
        %v2706 = vpack.c.b16 %v2668, %v2667
        %v2707 = vpack.c.b16 %v2670, %v2669
        %v2708 = vpack.c.b16 %v2672, %v2671
        %v2709 = vpack.c.b16 %v2674, %v2673
        %v2710 = vpack.c.b16 %v2676, %v2675
        %v2711 = vpack.c.b16 %v2678, %v2677
        %v2712 = vpack.c.b16 %v2680, %v2679
        %2745 = vmatprep.subr.bf16.mxu0 0
        %2746 = vmatpush1.bf16.msra.mxu0 %v2681
        %2747 = vmatprep.subr.bf16.mxu0 0
        %2748 = vmatpush1.bf16.msra.mxu0 %v2682
        %2749 = vmatprep.subr.bf16.mxu0 0
        %2750 = vmatpush1.bf16.msra.mxu0 %v2683
        %2751 = vmatprep.subr.bf16.mxu0 0
        %2752 = vmatpush1.bf16.msra.mxu0 %v2684
        %2753 = vmatprep.subr.bf16.mxu0 0
        %2754 = vmatpush1.bf16.msra.mxu0 %v2685
        %2755 = vmatprep.subr.bf16.mxu0 0
        %2756 = vmatpush1.bf16.msra.mxu0 %v2686
        %2757 = vmatprep.subr.bf16.mxu0 0
        %2758 = vmatpush1.bf16.msra.mxu0 %v2687
        %2759 = vmatprep.subr.bf16.mxu0 0
        %2760 = vmatpush1.bf16.msra.mxu0 %v2688
        %2761 = vmatprep.subr.bf16.mxu0 0
        %2762 = vmatpush1.bf16.msra.mxu0 %v2689
        %2763 = vmatprep.subr.bf16.mxu0 0
        %2764 = vmatpush1.bf16.msra.mxu0 %v2690
        %2765 = vmatprep.subr.bf16.mxu0 0
        %2766 = vmatpush1.bf16.msra.mxu0 %v2691
        %2767 = vmatprep.subr.bf16.mxu0 0
        %2768 = vmatpush1.bf16.msra.mxu0 %v2692
        %2769 = vmatprep.subr.bf16.mxu0 0
        %2770 = vmatpush1.bf16.msra.mxu0 %v2693
        %2771 = vmatprep.subr.bf16.mxu0 0
        %2772 = vmatpush1.bf16.msra.mxu0 %v2694
        %2773 = vmatprep.subr.bf16.mxu0 0
        %2774 = vmatpush1.bf16.msra.mxu0 %v2695
        %2775 = vmatprep.subr.bf16.mxu0 0
        %2776 = vmatpush1.bf16.msra.mxu0 %v2696
        %2777 = vmatprep.mubr.bf16.mxu0 %v2451
        %2778 = vmatmul.mubr.bf16.gmra.mrb[0].mxu0 %v2450
        %v2779 = vpop.f32.mrb[0].mxu0
        %v2780 = vadd.f32 %v2551, %v2779
        %v2781 = vpop.f32.mrb[0].mxu0
        %v2782 = vpop.f32.mrb[0].mxu0
        %v2783 = vadd.f32 %v2551, %v2782
        %v2784 = vpop.f32.mrb[0].mxu0
        %2785 = vmatprep.mubr.bf16.mxu0 %v2455
        %2786 = vmatmul.mubr.bf16.gmra.mrb[0].mxu0 %v2454
        %v2787 = vpop.f32.mrb[0].mxu0
        %v2788 = vadd.f32 %v2551, %v2787
        %v2789 = vpop.f32.mrb[0].mxu0
        %v2790 = vpop.f32.mrb[0].mxu0
        %v2791 = vadd.f32 %v2551, %v2790
        %v2792 = vpop.f32.mrb[0].mxu0
        %2793 = vmatprep.mubr.bf16.mxu0 %v2459
        %2794 = vmatmul.mubr.bf16.gmra.mrb[0].mxu0 %v2458
        %v2795 = vpop.f32.mrb[0].mxu0
        %v2796 = vadd.f32 %v2551, %v2795
        %v2797 = vpop.f32.mrb[0].mxu0
        %v2798 = vpop.f32.mrb[0].mxu0
        %v2799 = vadd.f32 %v2551, %v2798
        %v2800 = vpop.f32.mrb[0].mxu0
        %2801 = vmatprep.mubr.bf16.mxu0 %v2463
        %2802 = vmatmul.mubr.bf16.gmra.mrb[0].mxu0 %v2462
        %v2803 = vpop.f32.mrb[0].mxu0
        %v2804 = vadd.f32 %v2551, %v2803
        %v2805 = vpop.f32.mrb[0].mxu0
        %v2806 = vpop.f32.mrb[0].mxu0
        %v2807 = vadd.f32 %v2551, %v2806
        %v2808 = vpop.f32.mrb[0].mxu0
        %2809 = vmatprep.mubr.bf16.mxu0 %v2467
        %2810 = vmatmul.mubr.bf16.gmra.mrb[0].mxu0 %v2466
        %v2811 = vpop.f32.mrb[0].mxu0
        %v2812 = vadd.f32 %v2551, %v2811
        %v2813 = vpop.f32.mrb[0].mxu0
        %v2814 = vpop.f32.mrb[0].mxu0
        %v2815 = vadd.f32 %v2551, %v2814
        %v2816 = vpop.f32.mrb[0].mxu0
        %2817 = vmatprep.mubr.bf16.mxu0 %v2471
        %2818 = vmatmul.mubr.bf16.gmra.mrb[0].mxu0 %v2470
        %v2819 = vpop.f32.mrb[0].mxu0
        %v2820 = vadd.f32 %v2551, %v2819
        %v2821 = vpop.f32.mrb[0].mxu0
        %v2822 = vpop.f32.mrb[0].mxu0
        %v2823 = vadd.f32 %v2551, %v2822
        %v2824 = vpop.f32.mrb[0].mxu0
        %2825 = vmatprep.mubr.bf16.mxu0 %v2475
        %2826 = vmatmul.mubr.bf16.gmra.mrb[0].mxu0 %v2474
        %v2827 = vpop.f32.mrb[0].mxu0
        %v2828 = vadd.f32 %v2551, %v2827
        %v2829 = vpop.f32.mrb[0].mxu0
        %v2830 = vpop.f32.mrb[0].mxu0
        %v2831 = vadd.f32 %v2551, %v2830
        %v2832 = vpop.f32.mrb[0].mxu0
        %2833 = vmatprep.mubr.bf16.mxu0 %v2479
        %2834 = vmatmul.mubr.bf16.gmra.mrb[0].mxu0 %v2478
        %v2835 = vpop.f32.mrb[0].mxu0
        %v2836 = vadd.f32 %v2551, %v2835
        %v2837 = vpop.f32.mrb[0].mxu0
        %v2838 = vpop.f32.mrb[0].mxu0
        %v2839 = vadd.f32 %v2551, %v2838
        %v2840 = vpop.f32.mrb[0].mxu0
        %2841 = vdwg.mxu0
        %2842 = vmatprep.subr.bf16.mxu0 0
        %2843 = vmatpush1.bf16.msra.mxu0 %v2697
        %2844 = vmatprep.subr.bf16.mxu0 0
        %2845 = vmatpush1.bf16.msra.mxu0 %v2698
        %2846 = vmatprep.subr.bf16.mxu0 0
        %2847 = vmatpush1.bf16.msra.mxu0 %v2699
        %2848 = vmatprep.subr.bf16.mxu0 0
        %2849 = vmatpush1.bf16.msra.mxu0 %v2700
        %2850 = vmatprep.subr.bf16.mxu0 0
        %2851 = vmatpush1.bf16.msra.mxu0 %v2701
        %2852 = vmatprep.subr.bf16.mxu0 0
        %2853 = vmatpush1.bf16.msra.mxu0 %v2702
        %2854 = vmatprep.subr.bf16.mxu0 0
        %2855 = vmatpush1.bf16.msra.mxu0 %v2703
        %2856 = vmatprep.subr.bf16.mxu0 0
        %2857 = vmatpush1.bf16.msra.mxu0 %v2704
        %2858 = vmatprep.subr.bf16.mxu0 0
        %2859 = vmatpush1.bf16.msra.mxu0 %v2705
        %2860 = vmatprep.subr.bf16.mxu0 0
        %2861 = vmatpush1.bf16.msra.mxu0 %v2706
        %2862 = vmatprep.subr.bf16.mxu0 0
        %2863 = vmatpush1.bf16.msra.mxu0 %v2707
        %2864 = vmatprep.subr.bf16.mxu0 0
        %2865 = vmatpush1.bf16.msra.mxu0 %v2708
        %2866 = vmatprep.subr.bf16.mxu0 0
        %2867 = vmatpush1.bf16.msra.mxu0 %v2709
        %2868 = vmatprep.subr.bf16.mxu0 0
        %2869 = vmatpush1.bf16.msra.mxu0 %v2710
        %2870 = vmatprep.subr.bf16.mxu0 0
        %2871 = vmatpush1.bf16.msra.mxu0 %v2711
        %2872 = vmatprep.subr.bf16.mxu0 0
        %2873 = vmatpush1.bf16.msra.mxu0 %v2712
        %2874 = vmatprep.mubr.bf16.mxu0 %v2453
        %2875 = vmatmul.mubr.bf16.gmra.mrb[0].mxu0 %v2452
        %v2876 = vpop.f32.mrb[0].mxu0
        %v2877 = vadd.f32 %v2780, %v2876
        %v2878 = vpop.f32.mrb[0].mxu0
        %v2879 = vpop.f32.mrb[0].mxu0
        %v2880 = vadd.f32 %v2783, %v2879
        %v2881 = vpop.f32.mrb[0].mxu0
        %2882 = vmatprep.mubr.bf16.mxu0 %v2457
        %2883 = vmatmul.mubr.bf16.gmra.mrb[0].mxu0 %v2456
        %v2884 = vpop.f32.mrb[0].mxu0
        %v2885 = vadd.f32 %v2788, %v2884
        %v2886 = vpop.f32.mrb[0].mxu0
        %v2887 = vpop.f32.mrb[0].mxu0
        %v2888 = vadd.f32 %v2791, %v2887
        %v2889 = vpop.f32.mrb[0].mxu0
        %2890 = vmatprep.mubr.bf16.mxu0 %v2461
        %2891 = vmatmul.mubr.bf16.gmra.mrb[0].mxu0 %v2460
        %v2892 = vpop.f32.mrb[0].mxu0
        %v2893 = vadd.f32 %v2796, %v2892
        %v2894 = vpop.f32.mrb[0].mxu0
        %v2895 = vpop.f32.mrb[0].mxu0
        %v2896 = vadd.f32 %v2799, %v2895
        %v2897 = vpop.f32.mrb[0].mxu0
        %2898 = vmatprep.mubr.bf16.mxu0 %v2465
        %2899 = vmatmul.mubr.bf16.gmra.mrb[0].mxu0 %v2464
        %v2900 = vpop.f32.mrb[0].mxu0
        %v2901 = vadd.f32 %v2804, %v2900
        %v2902 = vpop.f32.mrb[0].mxu0
        %v2903 = vpop.f32.mrb[0].mxu0
        %v2904 = vadd.f32 %v2807, %v2903
        %v2905 = vpop.f32.mrb[0].mxu0
        %2906 = vmatprep.mubr.bf16.mxu0 %v2469
        %2907 = vmatmul.mubr.bf16.gmra.mrb[0].mxu0 %v2468
        %v2908 = vpop.f32.mrb[0].mxu0
        %v2909 = vadd.f32 %v2812, %v2908
        %v2910 = vpop.f32.mrb[0].mxu0
        %v2911 = vpop.f32.mrb[0].mxu0
        %v2912 = vadd.f32 %v2815, %v2911
        %v2913 = vpop.f32.mrb[0].mxu0
        %2914 = vmatprep.mubr.bf16.mxu0 %v2473
        %2915 = vmatmul.mubr.bf16.gmra.mrb[0].mxu0 %v2472
        %v2916 = vpop.f32.mrb[0].mxu0
        %v2917 = vadd.f32 %v2820, %v2916
        %v2918 = vpop.f32.mrb[0].mxu0
        %v2919 = vpop.f32.mrb[0].mxu0
        %v2920 = vadd.f32 %v2823, %v2919
        %v2921 = vpop.f32.mrb[0].mxu0
        %2922 = vmatprep.mubr.bf16.mxu0 %v2477
        %2923 = vmatmul.mubr.bf16.gmra.mrb[0].mxu0 %v2476
        %v2924 = vpop.f32.mrb[0].mxu0
        %v2925 = vadd.f32 %v2828, %v2924
        %v2926 = vpop.f32.mrb[0].mxu0
        %v2927 = vpop.f32.mrb[0].mxu0
        %v2928 = vadd.f32 %v2831, %v2927
        %v2929 = vpop.f32.mrb[0].mxu0
        %2930 = vmatprep.mubr.bf16.mxu0 %v2481
        %2931 = vmatmul.mubr.bf16.gmra.mrb[0].mxu0 %v2480
        %v2932 = vpop.f32.mrb[0].mxu0
        %v2933 = vadd.f32 %v2836, %v2932
        %v2934 = vpop.f32.mrb[0].mxu0
        %v2935 = vpop.f32.mrb[0].mxu0
        %v2936 = vadd.f32 %v2839, %v2935
        %v2937 = vpop.f32.mrb[0].mxu0
        %2938 = vdwg.mxu0
        %v2939 = vxor.u32 %v2877, 2147483648
        %v2940 = vxor.u32 %v2880, 2147483648
        %v2941 = vxor.u32 %v2885, 2147483648
        %v2942 = vxor.u32 %v2888, 2147483648
        %v2943 = vxor.u32 %v2893, 2147483648
        %v2944 = vxor.u32 %v2896, 2147483648
        %v2945 = vxor.u32 %v2901, 2147483648
        %v2946 = vxor.u32 %v2904, 2147483648
        %v2947 = vxor.u32 %v2909, 2147483648
        %v2948 = vxor.u32 %v2912, 2147483648
        %v2949 = vxor.u32 %v2917, 2147483648
        %v2950 = vxor.u32 %v2920, 2147483648
        %v2951 = vxor.u32 %v2925, 2147483648
        %v2952 = vxor.u32 %v2928, 2147483648
        %v2953 = vxor.u32 %v2933, 2147483648
        %v2954 = vxor.u32 %v2936, 2147483648
        %v2955 = vmul.f32 %v2939, 1.442695
        %v2956 = vpow.pop %v2955
        %v2957 = vmul.f32 %v2940, 1.442695
        %v2958 = vpow.pop %v2957
        %v2959 = vmul.f32 %v2941, 1.442695
        %v2960 = vpow.pop %v2959
        %v2961 = vmul.f32 %v2942, 1.442695
        %v2962 = vpow.pop %v2961
        %v2963 = vmul.f32 %v2943, 1.442695
        %v2964 = vpow.pop %v2963
        %v2965 = vmul.f32 %v2944, 1.442695
        %v2966 = vpow.pop %v2965
        %v2967 = vmul.f32 %v2945, 1.442695
        %v2968 = vpow.pop %v2967
        %v2969 = vmul.f32 %v2946, 1.442695
        %v2970 = vpow.pop %v2969
        %v2971 = vmul.f32 %v2947, 1.442695
        %v2972 = vpow.pop %v2971
        %v2973 = vmul.f32 %v2948, 1.442695
        %v2974 = vpow.pop %v2973
        %v2975 = vmul.f32 %v2949, 1.442695
        %v2976 = vpow.pop %v2975
        %v2977 = vmul.f32 %v2950, 1.442695
        %v2978 = vpow.pop %v2977
        %v2979 = vmul.f32 %v2951, 1.442695
        %v2980 = vpow.pop %v2979
        %v2981 = vmul.f32 %v2952, 1.442695
        %v2982 = vpow.pop %v2981
        %v2983 = vmul.f32 %v2953, 1.442695
        %v2984 = vpow.pop %v2983
        %v2985 = vmul.f32 %v2954, 1.442695
        %v2986 = vpow.pop %v2985
        %v2987 = vadd.f32 %v2956, 1.0
        %v2988 = vadd.f32 %v2958, 1.0
        %v2989 = vadd.f32 %v2960, 1.0
        %v2990 = vadd.f32 %v2962, 1.0
        %v2991 = vadd.f32 %v2964, 1.0
        %v2992 = vadd.f32 %v2966, 1.0
        %v2993 = vadd.f32 %v2968, 1.0
        %v2994 = vadd.f32 %v2970, 1.0
        %v2995 = vadd.f32 %v2972, 1.0
        %v2996 = vadd.f32 %v2974, 1.0
        %v2997 = vadd.f32 %v2976, 1.0
        %v2998 = vadd.f32 %v2978, 1.0
        %v2999 = vadd.f32 %v2980, 1.0
        %v3000 = vadd.f32 %v2982, 1.0
        %v3001 = vadd.f32 %v2984, 1.0
        %v3002 = vadd.f32 %v2986, 1.0
        %v3003 = vrcp.pop %v2987
        %v3004 = vmul.f32 1.0, %v3003
        %v3005 = vrcp.pop %v2988
        %v3006 = vmul.f32 1.0, %v3005
        %v3007 = vrcp.pop %v2989
        %v3008 = vmul.f32 1.0, %v3007
        %v3009 = vrcp.pop %v2990
        %v3010 = vmul.f32 1.0, %v3009
        %v3011 = vrcp.pop %v2991
        %v3012 = vmul.f32 1.0, %v3011
        %v3013 = vrcp.pop %v2992
        %v3014 = vmul.f32 1.0, %v3013
        %v3015 = vrcp.pop %v2993
        %v3016 = vmul.f32 1.0, %v3015
        %v3017 = vrcp.pop %v2994
        %v3018 = vmul.f32 1.0, %v3017
        %v3019 = vrcp.pop %v2995
        %v3020 = vmul.f32 1.0, %v3019
        %v3021 = vrcp.pop %v2996
        %v3022 = vmul.f32 1.0, %v3021
        %v3023 = vrcp.pop %v2997
        %v3024 = vmul.f32 1.0, %v3023
        %v3025 = vrcp.pop %v2998
        %v3026 = vmul.f32 1.0, %v3025
        %v3027 = vrcp.pop %v2999
        %v3028 = vmul.f32 1.0, %v3027
        %v3029 = vrcp.pop %v3000
        %v3030 = vmul.f32 1.0, %v3029
        %v3031 = vrcp.pop %v3001
        %v3032 = vmul.f32 1.0, %v3031
        %v3033 = vrcp.pop %v3002
        %v3034 = vmul.f32 1.0, %v3033
        %v3035 = vmul.f32 %v2877, %v3004
        %v3036 = vmul.f32 %v2880, %v3006
        %v3037 = vmul.f32 %v2885, %v3008
        %v3038 = vmul.f32 %v2888, %v3010
        %v3039 = vmul.f32 %v2893, %v3012
        %v3040 = vmul.f32 %v2896, %v3014
        %v3041 = vmul.f32 %v2901, %v3016
        %v3042 = vmul.f32 %v2904, %v3018
        %v3043 = vmul.f32 %v2909, %v3020
        %v3044 = vmul.f32 %v2912, %v3022
        %v3045 = vmul.f32 %v2917, %v3024
        %v3046 = vmul.f32 %v2920, %v3026
        %v3047 = vmul.f32 %v2925, %v3028
        %v3048 = vmul.f32 %v2928, %v3030
        %v3049 = vmul.f32 %v2933, %v3032
        %v3050 = vmul.f32 %v2936, %v3034
        %v3051 = vld [vmem:[#allocation3] sm:$0x1]
        %v3052 = vld [vmem:[%s393] sm:$0x1]
        %v3054 = vlaneseq
        %v3055 = vshrl.u32 %v3054, 7
        %v3056 = vsub.s32 0, %v3055
        %v3057 = vrot.slane %v3052, %v3056
        %v3059 = vmul.f32 %v3035, %v3057
        %v3060 = vmul.f32 %v3036, %v3057
        %v3061 = vmul.f32 %v3037, %v3057
        %v3062 = vmul.f32 %v3038, %v3057
        %v3063 = vmul.f32 %v3039, %v3057
        %v3064 = vmul.f32 %v3040, %v3057
        %v3065 = vmul.f32 %v3041, %v3057
        %v3066 = vmul.f32 %v3042, %v3057
        %v3067 = vmul.f32 %v3043, %v3057
        %v3068 = vmul.f32 %v3044, %v3057
        %v3069 = vmul.f32 %v3045, %v3057
        %v3070 = vmul.f32 %v3046, %v3057
        %v3071 = vmul.f32 %v3047, %v3057
        %v3072 = vmul.f32 %v3048, %v3057
        %v3073 = vmul.f32 %v3049, %v3057
        %v3074 = vmul.f32 %v3050, %v3057
        %v3075 = vadd.f32 %v3059, %v3060
        %v3076 = vadd.f32 %v3075, %v3061
        %v3077 = vadd.f32 %v3076, %v3062
        %v3078 = vadd.f32 %v3077, %v3063
        %v3079 = vadd.f32 %v3078, %v3064
        %v3080 = vadd.f32 %v3079, %v3065
        %v3081 = vadd.f32 %v3080, %v3066
        %v3082 = vadd.f32 %v3081, %v3067
        %v3083 = vadd.f32 %v3082, %v3068
        %v3084 = vadd.f32 %v3083, %v3069
        %v3085 = vadd.f32 %v3084, %v3070
        %v3086 = vadd.f32 %v3085, %v3071
        %v3087 = vadd.f32 %v3086, %v3072
        %v3088 = vadd.f32 %v3087, %v3073
        %v3089 = vadd.f32 %v3088, %v3074
        %v3090 = vrot.slane %v3089, 4
        %v3091 = vadd.f32 %v3089, %v3090
        %v3092 = vrot.slane %v3091, 2
        %v3093 = vadd.f32 %v3091, %v3092
        %v3094 = vrot.slane %v3093, 1
        %v3095 = vadd.f32 %v3093, %v3094
        %v3096 = vadd.f32 %v3051, %v3095
        %3097 = vst [vmem:[#allocation3] sm:$0x1] %v3096
        %p3098 = scmp.eq.s32.totalorder %s26, 3
        // Predicated region
        $region69: #{kgedn_forward.1} parent=59 // pred_check
          %p3099 = pneg %p3098
        $region70: #{kgedn_forward.1} parent=59 // pred_check_branch
          %3101 = sbr.rel (%p3099) target = $region72
        $region71: #{kgedn_forward.1} parent=59 // pred_region
          %v3102 = vld [vmem:[#allocation3] sm:$0x1]
          %vm3103 = vcmask 1040384
          %v3104 = vsel %vm3103, %v3102, 0.0
          %3105 = vadd.xlane.f32.xlu0 %v3104
          %v3106 = vpop.xlane.xlu0 %3105
          %v3107 = vrot.slane %v3106, 4
          %v3108 = vadd.f32 %v3106, %v3107
          %v3109 = vrot.slane %v3108, 2
          %v3110 = vadd.f32 %v3108, %v3109
          %v3111 = vrot.slane %v3110, 1
          %v3112 = vadd.f32 %v3110, %v3111
          %s3113 = vtos %v3112
          %s3114 = smul.f32 %s3113, 0.0078125
          %v3115 = vstv %s3114
          %v3116 = vld [vmem:[#allocation5] sm:$0x1]
          %v3117 = vadd.f32 %v3115, %v3116
          %v3118 = vlaneseq
          %v3119 = vand.u32 %v3118, 127
          %vm3120 = vcmp.eq.s32.totalorder %v3119, 0
          %v3121 = vld [vmem:[#allocation4] sm:$0x1]
          %3123 = vset.pattern.permute.xlu0 0
          %3124 = vperm.xlu0 %3123, %v3117
          %v3125 = vpop.permute.xlu0 %3124
          %v3127 = vlaneseq
          %v3128 = vshrl.u32 %v3127, 7
          %v3129 = vsub.s32 0, %v3128
          %v3130 = vrot.slane %v3125, %v3129
          %v3131 = vsel %vm3120, %v3130, %v3121
          %3132 = vst [vmem:[%s10] sm:$0x1] %v3131
        $region72: #{kgedn_forward.1} parent=59 // pred_fallthru
          _
        // Predicated region
        $region73: #{kgedn_forward.1} parent=59 // pred_check
          %p3133 = pneg %p264
        $region74: #{kgedn_forward.1} parent=59 // pred_check_branch
          %3135 = sbr.rel (%p3133) target = $region76
        $region75: #{kgedn_forward.1} parent=59 // pred_region
          _
        $region76: #{kgedn_forward.1} parent=59 // pred_fallthru
          _
        // Predicated region
        $region77: #{kgedn_forward.1} parent=59 // pred_check
          %p3136 = pneg %p264
        $region78: #{kgedn_forward.1} parent=59 // pred_check_branch
          %3138 = sbr.rel (%p3136) target = $region80
        $region79: #{kgedn_forward.1} parent=59 // pred_region
          _
        $region80: #{kgedn_forward.1} parent=59 // pred_fallthru
          _
      $region60: #{kgedn_forward.1} parent=5 // pred_fallthru
        _
      %p3139 = scmp.le.s32.totalorder 2, %s21
      // Predicated region
      $region81: #{kgedn_forward.1} parent=5 // pred_check
        %p3140 = pneg %p3139
      $region82: #{kgedn_forward.1} parent=5 // pred_check_branch
        %3142 = sbr.rel (%p3140) target = $region84
      $region83: #{kgedn_forward.1} parent=5 // pred_region
        %s3143 = ssub.s32 %s21, 2
      $region84: #{kgedn_forward.1} parent=5 // pred_fallthru
        _
    $region6: #{kgedn_forward.1} parent=1 // loop_footer
      %s25 = sadd.s32 1, %s21
    $region7: #{kgedn_forward.1} parent=1 // loop_footer_branch
      %20 = sbr.rel target = $region3
    $region8: #{kgedn_forward.1} parent=1 // loop_exit
      _
    %3144 = vsyncpa [#allocation7], 1
    %s3145 = scalar_lea.sflag [#allocation7], 1
    %3146 = vsyncpa %s3145, 1

</llo_original>
